<compile_context>
chip_gen: v5e
topology: v5e:2x2
jax: 0.10.0
libtpu: 0.0.40
codegen_flags: <defaults>
</compile_context>

<pallas_src>
import math

import jax
import jax.numpy as jnp
from jax import lax
from jax.experimental import pallas as pl
from jax.experimental.pallas import tpu as pltpu  # noqa: F401  (TPU backend)

# ----------------------------- model config ---------------------------------
N_VARS = 4
BS = 2
B = BS * N_VARS          # 8  (bs * nvars)
L = 8                    # patch_num
D_MODEL = 32
N_HEADS = 4
D_K = D_MODEL // N_HEADS # 8
D_V = D_MODEL // N_HEADS # 8
D_FF = 64
N_CLUSTER = 2
BN_EPS = 1e-5


# ----------------------------- kernel helpers --------------------------------
def _gelu_exact(x):
    return 0.5 * x * (1.0 + lax.erf(x * (1.0 / math.sqrt(2.0))))


def _batchnorm(x, gamma, beta):
    """BatchNorm1d over channels (axis 1) of a [B*L, D] slab.

    Single pass: sum + sum-of-squares, biased variance (train-mode batch
    statistics, as in the module's default forward)."""
    n = x.shape[0]
    s = jnp.sum(x, axis=0, keepdims=True)
    ss = jnp.sum(x * x, axis=0, keepdims=True)
    mean = s * (1.0 / n)
    var = ss * (1.0 / n) - mean * mean
    return (x - mean) * lax.rsqrt(var + BN_EPS) * gamma + beta


# ----------------------------- fused Pallas kernel ---------------------------
def _fused_layer_kernel(x_ref, wqkv_ref, bqkv_ref, wo_ref, bo_ref,
                        bn1_g_ref, bn1_b_ref,
                        w1_ref, b1_ref, w2_ref, b2_ref,
                        bn2_g_ref, bn2_b_ref, o_ref):
    Bsz, Ls, Ds = x_ref.shape
    x2 = x_ref[...].reshape(Bsz * Ls, Ds)               # [N, D], N = B*L (free reshape)

    # ---- fused QKV projection: one [N, D] @ [D, 3D] MXU push ----
    qkv = jnp.dot(x2, wqkv_ref[...],
                  preferred_element_type=jnp.float32) + bqkv_ref[...]   # [N, 3D]
    wo = wo_ref[...]                                    # [D, D]

    scale = 1.0 / math.sqrt(D_K)
    attn = jnp.zeros((Bsz * Ls, Ds), jnp.float32)
    for h in range(N_HEADS):                            # static unroll over heads
        lo = h * D_K
        qh = qkv[:, lo:lo + D_K].reshape(Bsz, Ls, D_K)              # [B, L, dk]
        kh = qkv[:, Ds + lo:Ds + lo + D_K].reshape(Bsz, Ls, D_K)
        vh = qkv[:, 2 * Ds + lo:2 * Ds + lo + D_V].reshape(Bsz, Ls, D_V)

        s = jnp.einsum('bld,bmd->blm', qh, kh,
                       preferred_element_type=jnp.float32) * scale   # [B, L, L]
        s = s - jnp.max(s, axis=-1, keepdims=True)
        p = jnp.exp(s)
        p = p * pl.reciprocal(jnp.sum(p, axis=-1, keepdims=True), approx=True)
        oh = jnp.einsum('blm,bmd->bld', p, vh,
                        preferred_element_type=jnp.float32)          # [B, L, dv]

        # Accumulate through the matching Wo rows (sublane slice) -> no lane
        # concat of head outputs is ever materialized.
        attn = attn + jnp.dot(oh.reshape(Bsz * Ls, D_V),
                              wo[h * D_V:(h + 1) * D_V, :],
                              preferred_element_type=jnp.float32)

    # ---- residual + BatchNorm1d (attn) ----
    r1 = x2 + attn + bo_ref[...]
    y1 = _batchnorm(r1, bn1_g_ref[...], bn1_b_ref[...])

    # ---- FFN (Linear -> GELU -> Linear) + residual + BatchNorm1d (ffn) ----
    hid = jnp.dot(y1, w1_ref[...], preferred_element_type=jnp.float32) + b1_ref[...]
    hid = _gelu_exact(hid)
    f = jnp.dot(hid, w2_ref[...], preferred_element_type=jnp.float32) + b2_ref[...]
    y2 = _batchnorm(y1 + f, bn2_g_ref[...], bn2_b_ref[...])

    # one bulk store of the final result
    o_ref[...] = y2.reshape(Bsz, Ls, Ds).astype(o_ref.dtype)


# ----------------------------- wrapper ----------------------------------------
@jax.jit
def time_var_attention_layer(src, clusters, prob, params):
    """src: [B, L, D], clusters: [n_cluster, D], prob: [nvars, n_cluster]."""
    del prob  # unused in the reference forward
    Bsz, Ls, Ds = src.shape

    # Fuse Wq|Wk|Wv (and biases) once in the wrapper -> single QKV matmul.
    wqkv = jnp.concatenate([params["wq"], params["wk"], params["wv"]], axis=1)
    bqkv = jnp.concatenate([params["bq"], params["bk"], params["bv"]], axis=1)

    y = pl.pallas_call(
        _fused_layer_kernel,
        out_shape=jax.ShapeDtypeStruct((Bsz, Ls, Ds), src.dtype),
    )(src, wqkv, bqkv, params["wo"], params["bo"],
      params["bn1_g"], params["bn1_b"],
      params["w1"], params["b1"], params["w2"], params["b2"],
      params["bn2_g"], params["bn2_b"])

    # cluster_emb = clusters.expand(B, n_cluster, D).mean(0)  (== clusters)
    cluster_emb = jnp.mean(
        jnp.broadcast_to(clusters[None], (Bsz,) + clusters.shape), axis=0)
    return y, cluster_emb


# ----------------------------- parameter init --------------------------------
def init_params(key):
    """Deterministic nn.Linear-style init (uniform +-1/sqrt(fan_in))."""
    def linear(key, fan_in, fan_out):
        kw, kb = jax.random.split(key)
        bound = 1.0 / math.sqrt(fan_in)
        w = jax.random.uniform(kw, (fan_in, fan_out), jnp.float32, -bound, bound)
        b = jax.random.uniform(kb, (1, fan_out), jnp.float32, -bound, bound)
        return w, b

    keys = jax.random.split(key, 8)
    wq, bq = linear(keys[0], D_MODEL, N_HEADS * D_K)
    wk, bk = linear(keys[1], D_MODEL, N_HEADS * D_K)
    wv, bv = linear(keys[2], D_MODEL, N_HEADS * D_V)
    wo, bo = linear(keys[3], N_HEADS * D_V, D_MODEL)
    w1, b1 = linear(keys[4], D_MODEL, D_FF)
    w2, b2 = linear(keys[5], D_FF, D_MODEL)
    return dict(
        wq=wq, bq=bq, wk=wk, bk=bk, wv=wv, bv=bv, wo=wo, bo=bo,
        w1=w1, b1=b1, w2=w2, b2=b2,
        bn1_g=jnp.ones((1, D_MODEL), jnp.float32),
        bn1_b=jnp.zeros((1, D_MODEL), jnp.float32),
        bn2_g=jnp.ones((1, D_MODEL), jnp.float32),
        bn2_b=jnp.zeros((1, D_MODEL), jnp.float32),
    )


# ----------------------------- main -------------------------------------------
if __name__ == "__main__":
    key = jax.random.PRNGKey(0)
    k_src, k_cl, k_p, k_par = jax.random.split(key, 4)

    src = jax.random.normal(k_src, (B, L, D_MODEL), jnp.float32)
    clusters = jax.random.normal(k_cl, (N_CLUSTER, D_MODEL), jnp.float32)
    prob = jax.nn.softmax(jax.random.normal(k_p, (N_VARS, N_CLUSTER), jnp.float32), -1)
    params = init_params(k_par)

    out, cluster_emb = time_var_attention_layer(src, clusters, prob, params)
    jax.block_until_ready((out, cluster_emb))

    assert out.shape == (B, L, D_MODEL)
    assert cluster_emb.shape == (N_CLUSTER, D_MODEL)
    assert bool(jnp.all(jnp.isfinite(out)))
    assert bool(jnp.all(jnp.isfinite(cluster_emb)))
    print("KERNEL_OK")
</pallas_src>

<mosaic_0001>
module attributes {stable_mosaic.version = 11 : i64} {
  func.func @_fused_layer_kernel(%arg0: memref<8x8x32xf32, #tpu.memory_space<vmem>>, %arg1: memref<32x96xf32, #tpu.memory_space<vmem>>, %arg2: memref<1x96xf32, #tpu.memory_space<vmem>>, %arg3: memref<32x32xf32, #tpu.memory_space<vmem>>, %arg4: memref<1x32xf32, #tpu.memory_space<vmem>>, %arg5: memref<1x32xf32, #tpu.memory_space<vmem>>, %arg6: memref<1x32xf32, #tpu.memory_space<vmem>>, %arg7: memref<32x64xf32, #tpu.memory_space<vmem>>, %arg8: memref<1x64xf32, #tpu.memory_space<vmem>>, %arg9: memref<64x32xf32, #tpu.memory_space<vmem>>, %arg10: memref<1x32xf32, #tpu.memory_space<vmem>>, %arg11: memref<1x32xf32, #tpu.memory_space<vmem>>, %arg12: memref<1x32xf32, #tpu.memory_space<vmem>>, %arg13: memref<8x8x32xf32, #tpu.memory_space<vmem>>) attributes {dimension_semantics = [], scalar_prefetch = 0 : i64, scratch_operands = 0 : i64, tpu.core_type = #tpu.core_type<tc>} {
    %c0 = arith.constant 0 : index
    %c0_0 = arith.constant 0 : index
    %c0_1 = arith.constant 0 : index
    %0 = vector.load %arg0[%c0, %c0_0, %c0_1] : memref<8x8x32xf32, #tpu.memory_space<vmem>>, vector<8x8x32xf32>
    %1 = vector.shape_cast %0 : vector<8x8x32xf32> to vector<64x32xf32>
    %c0_2 = arith.constant 0 : index
    %c0_3 = arith.constant 0 : index
    %2 = vector.load %arg1[%c0_2, %c0_3] : memref<32x96xf32, #tpu.memory_space<vmem>>, vector<32x96xf32>
    %cst = arith.constant dense<0.000000e+00> : vector<64x96xf32>
    %3 = tpu.matmul %1, %2, %cst {dimension_numbers = #tpu.dot_dimension_numbers<[1], [0], [0], [1], [0, 0, 1, 1], [], []>} : vector<64x32xf32>, vector<32x96xf32>, vector<64x96xf32> -> vector<64x96xf32>
    %c0_4 = arith.constant 0 : index
    %c0_5 = arith.constant 0 : index
    %4 = vector.load %arg2[%c0_4, %c0_5] : memref<1x96xf32, #tpu.memory_space<vmem>>, vector<1x96xf32>
    %5 = vector.broadcast %4 : vector<1x96xf32> to vector<64x96xf32>
    %6 = arith.addf %3, %5 : vector<64x96xf32>
    %c0_6 = arith.constant 0 : index
    %c0_7 = arith.constant 0 : index
    %7 = vector.load %arg3[%c0_6, %c0_7] : memref<32x32xf32, #tpu.memory_space<vmem>>, vector<32x32xf32>
    %cst_8 = arith.constant 0.000000e+00 : f32
    %8 = vector.broadcast %cst_8 : f32 to vector<64x32xf32>
    %9 = vector.extract_strided_slice %6 {offsets = [0, 0], sizes = [64, 8], strides = [1, 1]} : vector<64x96xf32> to vector<64x8xf32>
    %10 = vector.shape_cast %9 : vector<64x8xf32> to vector<8x8x8xf32>
    %11 = vector.extract_strided_slice %6 {offsets = [0, 32], sizes = [64, 8], strides = [1, 1]} : vector<64x96xf32> to vector<64x8xf32>
    %12 = vector.shape_cast %11 : vector<64x8xf32> to vector<8x8x8xf32>
    %13 = vector.extract_strided_slice %6 {offsets = [0, 64], sizes = [64, 8], strides = [1, 1]} : vector<64x96xf32> to vector<64x8xf32>
    %14 = vector.shape_cast %13 : vector<64x8xf32> to vector<8x8x8xf32>
    "tpu.trace_start"() <{level = 10 : i32, message = "bld,bmd->blm"}> : () -> ()
    %cst_9 = arith.constant dense<0.000000e+00> : vector<8x8x8xf32>
    %15 = tpu.matmul %10, %12, %cst_9 {dimension_numbers = #tpu.dot_dimension_numbers<[2], [2], [1], [1], [0, 0, 0, 1, 1, 1], [0], [0]>} : vector<8x8x8xf32>, vector<8x8x8xf32>, vector<8x8x8xf32> -> vector<8x8x8xf32>
    "tpu.trace_stop"() : () -> ()
    %cst_10 = arith.constant 0.353553385 : f32
    %16 = vector.broadcast %cst_10 : f32 to vector<8x8x8xf32>
    %17 = arith.mulf %15, %16 : vector<8x8x8xf32>
    %cst_11 = arith.constant dense<0xFF800000> : vector<8x8xf32>
    %18 = vector.multi_reduction <maximumf>, %17, %cst_11 [2] : vector<8x8x8xf32> to vector<8x8xf32>
    %19 = vector.shape_cast %18 : vector<8x8xf32> to vector<8x8x1xf32>
    %20 = vector.broadcast %19 : vector<8x8x1xf32> to vector<8x8x8xf32>
    %21 = arith.subf %17, %20 : vector<8x8x8xf32>
    %22 = math.exp %21 : vector<8x8x8xf32>
    %cst_12 = arith.constant dense<0.000000e+00> : vector<8x8xf32>
    %23 = vector.multi_reduction <add>, %22, %cst_12 [2] : vector<8x8x8xf32> to vector<8x8xf32>
    %24 = vector.shape_cast %23 : vector<8x8xf32> to vector<8x8x1xf32>
    %25 = tpu.reciprocal %24 {approx = true} : vector<8x8x1xf32> -> vector<8x8x1xf32>
    %26 = vector.broadcast %25 : vector<8x8x1xf32> to vector<8x8x8xf32>
    %27 = arith.mulf %22, %26 : vector<8x8x8xf32>
    "tpu.trace_start"() <{level = 10 : i32, message = "blm,bmd->bld"}> : () -> ()
    %cst_13 = arith.constant dense<0.000000e+00> : vector<8x8x8xf32>
    %28 = tpu.matmul %27, %14, %cst_13 {dimension_numbers = #tpu.dot_dimension_numbers<[2], [1], [1], [2], [0, 0, 0, 1, 1, 2], [0], [0]>} : vector<8x8x8xf32>, vector<8x8x8xf32>, vector<8x8x8xf32> -> vector<8x8x8xf32>
    "tpu.trace_stop"() : () -> ()
    %29 = vector.shape_cast %28 : vector<8x8x8xf32> to vector<64x8xf32>
    %30 = vector.extract_strided_slice %7 {offsets = [0, 0], sizes = [8, 32], strides = [1, 1]} : vector<32x32xf32> to vector<8x32xf32>
    %cst_14 = arith.constant dense<0.000000e+00> : vector<64x32xf32>
    %31 = tpu.matmul %29, %30, %cst_14 {dimension_numbers = #tpu.dot_dimension_numbers<[1], [0], [0], [1], [0, 0, 1, 1], [], []>} : vector<64x8xf32>, vector<8x32xf32>, vector<64x32xf32> -> vector<64x32xf32>
    %32 = arith.addf %8, %31 : vector<64x32xf32>
    %33 = vector.extract_strided_slice %6 {offsets = [0, 8], sizes = [64, 8], strides = [1, 1]} : vector<64x96xf32> to vector<64x8xf32>
    %34 = vector.shape_cast %33 : vector<64x8xf32> to vector<8x8x8xf32>
    %35 = vector.extract_strided_slice %6 {offsets = [0, 40], sizes = [64, 8], strides = [1, 1]} : vector<64x96xf32> to vector<64x8xf32>
    %36 = vector.shape_cast %35 : vector<64x8xf32> to vector<8x8x8xf32>
    %37 = vector.extract_strided_slice %6 {offsets = [0, 72], sizes = [64, 8], strides = [1, 1]} : vector<64x96xf32> to vector<64x8xf32>
    %38 = vector.shape_cast %37 : vector<64x8xf32> to vector<8x8x8xf32>
    "tpu.trace_start"() <{level = 10 : i32, message = "bld,bmd->blm"}> : () -> ()
    %cst_15 = arith.constant dense<0.000000e+00> : vector<8x8x8xf32>
    %39 = tpu.matmul %34, %36, %cst_15 {dimension_numbers = #tpu.dot_dimension_numbers<[2], [2], [1], [1], [0, 0, 0, 1, 1, 1], [0], [0]>} : vector<8x8x8xf32>, vector<8x8x8xf32>, vector<8x8x8xf32> -> vector<8x8x8xf32>
    "tpu.trace_stop"() : () -> ()
    %cst_16 = arith.constant 0.353553385 : f32
    %40 = vector.broadcast %cst_16 : f32 to vector<8x8x8xf32>
    %41 = arith.mulf %39, %40 : vector<8x8x8xf32>
    %cst_17 = arith.constant dense<0xFF800000> : vector<8x8xf32>
    %42 = vector.multi_reduction <maximumf>, %41, %cst_17 [2] : vector<8x8x8xf32> to vector<8x8xf32>
    %43 = vector.shape_cast %42 : vector<8x8xf32> to vector<8x8x1xf32>
    %44 = vector.broadcast %43 : vector<8x8x1xf32> to vector<8x8x8xf32>
    %45 = arith.subf %41, %44 : vector<8x8x8xf32>
    %46 = math.exp %45 : vector<8x8x8xf32>
    %cst_18 = arith.constant dense<0.000000e+00> : vector<8x8xf32>
    %47 = vector.multi_reduction <add>, %46, %cst_18 [2] : vector<8x8x8xf32> to vector<8x8xf32>
    %48 = vector.shape_cast %47 : vector<8x8xf32> to vector<8x8x1xf32>
    %49 = tpu.reciprocal %48 {approx = true} : vector<8x8x1xf32> -> vector<8x8x1xf32>
    %50 = vector.broadcast %49 : vector<8x8x1xf32> to vector<8x8x8xf32>
    %51 = arith.mulf %46, %50 : vector<8x8x8xf32>
    "tpu.trace_start"() <{level = 10 : i32, message = "blm,bmd->bld"}> : () -> ()
    %cst_19 = arith.constant dense<0.000000e+00> : vector<8x8x8xf32>
    %52 = tpu.matmul %51, %38, %cst_19 {dimension_numbers = #tpu.dot_dimension_numbers<[2], [1], [1], [2], [0, 0, 0, 1, 1, 2], [0], [0]>} : vector<8x8x8xf32>, vector<8x8x8xf32>, vector<8x8x8xf32> -> vector<8x8x8xf32>
    "tpu.trace_stop"() : () -> ()
    %53 = vector.shape_cast %52 : vector<8x8x8xf32> to vector<64x8xf32>
    %54 = vector.extract_strided_slice %7 {offsets = [8, 0], sizes = [8, 32], strides = [1, 1]} : vector<32x32xf32> to vector<8x32xf32>
    %cst_20 = arith.constant dense<0.000000e+00> : vector<64x32xf32>
    %55 = tpu.matmul %53, %54, %cst_20 {dimension_numbers = #tpu.dot_dimension_numbers<[1], [0], [0], [1], [0, 0, 1, 1], [], []>} : vector<64x8xf32>, vector<8x32xf32>, vector<64x32xf32> -> vector<64x32xf32>
    %56 = arith.addf %32, %55 : vector<64x32xf32>
    %57 = vector.extract_strided_slice %6 {offsets = [0, 16], sizes = [64, 8], strides = [1, 1]} : vector<64x96xf32> to vector<64x8xf32>
    %58 = vector.shape_cast %57 : vector<64x8xf32> to vector<8x8x8xf32>
    %59 = vector.extract_strided_slice %6 {offsets = [0, 48], sizes = [64, 8], strides = [1, 1]} : vector<64x96xf32> to vector<64x8xf32>
    %60 = vector.shape_cast %59 : vector<64x8xf32> to vector<8x8x8xf32>
    %61 = vector.extract_strided_slice %6 {offsets = [0, 80], sizes = [64, 8], strides = [1, 1]} : vector<64x96xf32> to vector<64x8xf32>
    %62 = vector.shape_cast %61 : vector<64x8xf32> to vector<8x8x8xf32>
    "tpu.trace_start"() <{level = 10 : i32, message = "bld,bmd->blm"}> : () -> ()
    %cst_21 = arith.constant dense<0.000000e+00> : vector<8x8x8xf32>
    %63 = tpu.matmul %58, %60, %cst_21 {dimension_numbers = #tpu.dot_dimension_numbers<[2], [2], [1], [1], [0, 0, 0, 1, 1, 1], [0], [0]>} : vector<8x8x8xf32>, vector<8x8x8xf32>, vector<8x8x8xf32> -> vector<8x8x8xf32>
    "tpu.trace_stop"() : () -> ()
    %cst_22 = arith.constant 0.353553385 : f32
    %64 = vector.broadcast %cst_22 : f32 to vector<8x8x8xf32>
    %65 = arith.mulf %63, %64 : vector<8x8x8xf32>
    %cst_23 = arith.constant dense<0xFF800000> : vector<8x8xf32>
    %66 = vector.multi_reduction <maximumf>, %65, %cst_23 [2] : vector<8x8x8xf32> to vector<8x8xf32>
    %67 = vector.shape_cast %66 : vector<8x8xf32> to vector<8x8x1xf32>
    %68 = vector.broadcast %67 : vector<8x8x1xf32> to vector<8x8x8xf32>
    %69 = arith.subf %65, %68 : vector<8x8x8xf32>
    %70 = math.exp %69 : vector<8x8x8xf32>
    %cst_24 = arith.constant dense<0.000000e+00> : vector<8x8xf32>
    %71 = vector.multi_reduction <add>, %70, %cst_24 [2] : vector<8x8x8xf32> to vector<8x8xf32>
    %72 = vector.shape_cast %71 : vector<8x8xf32> to vector<8x8x1xf32>
    %73 = tpu.reciprocal %72 {approx = true} : vector<8x8x1xf32> -> vector<8x8x1xf32>
    %74 = vector.broadcast %73 : vector<8x8x1xf32> to vector<8x8x8xf32>
    %75 = arith.mulf %70, %74 : vector<8x8x8xf32>
    "tpu.trace_start"() <{level = 10 : i32, message = "blm,bmd->bld"}> : () -> ()
    %cst_25 = arith.constant dense<0.000000e+00> : vector<8x8x8xf32>
    %76 = tpu.matmul %75, %62, %cst_25 {dimension_numbers = #tpu.dot_dimension_numbers<[2], [1], [1], [2], [0, 0, 0, 1, 1, 2], [0], [0]>} : vector<8x8x8xf32>, vector<8x8x8xf32>, vector<8x8x8xf32> -> vector<8x8x8xf32>
    "tpu.trace_stop"() : () -> ()
    %77 = vector.shape_cast %76 : vector<8x8x8xf32> to vector<64x8xf32>
    %78 = vector.extract_strided_slice %7 {offsets = [16, 0], sizes = [8, 32], strides = [1, 1]} : vector<32x32xf32> to vector<8x32xf32>
    %cst_26 = arith.constant dense<0.000000e+00> : vector<64x32xf32>
    %79 = tpu.matmul %77, %78, %cst_26 {dimension_numbers = #tpu.dot_dimension_numbers<[1], [0], [0], [1], [0, 0, 1, 1], [], []>} : vector<64x8xf32>, vector<8x32xf32>, vector<64x32xf32> -> vector<64x32xf32>
    %80 = arith.addf %56, %79 : vector<64x32xf32>
    %81 = vector.extract_strided_slice %6 {offsets = [0, 24], sizes = [64, 8], strides = [1, 1]} : vector<64x96xf32> to vector<64x8xf32>
    %82 = vector.shape_cast %81 : vector<64x8xf32> to vector<8x8x8xf32>
    %83 = vector.extract_strided_slice %6 {offsets = [0, 56], sizes = [64, 8], strides = [1, 1]} : vector<64x96xf32> to vector<64x8xf32>
    %84 = vector.shape_cast %83 : vector<64x8xf32> to vector<8x8x8xf32>
    %85 = vector.extract_strided_slice %6 {offsets = [0, 88], sizes = [64, 8], strides = [1, 1]} : vector<64x96xf32> to vector<64x8xf32>
    %86 = vector.shape_cast %85 : vector<64x8xf32> to vector<8x8x8xf32>
    "tpu.trace_start"() <{level = 10 : i32, message = "bld,bmd->blm"}> : () -> ()
    %cst_27 = arith.constant dense<0.000000e+00> : vector<8x8x8xf32>
    %87 = tpu.matmul %82, %84, %cst_27 {dimension_numbers = #tpu.dot_dimension_numbers<[2], [2], [1], [1], [0, 0, 0, 1, 1, 1], [0], [0]>} : vector<8x8x8xf32>, vector<8x8x8xf32>, vector<8x8x8xf32> -> vector<8x8x8xf32>
    "tpu.trace_stop"() : () -> ()
    %cst_28 = arith.constant 0.353553385 : f32
    %88 = vector.broadcast %cst_28 : f32 to vector<8x8x8xf32>
    %89 = arith.mulf %87, %88 : vector<8x8x8xf32>
    %cst_29 = arith.constant dense<0xFF800000> : vector<8x8xf32>
    %90 = vector.multi_reduction <maximumf>, %89, %cst_29 [2] : vector<8x8x8xf32> to vector<8x8xf32>
    %91 = vector.shape_cast %90 : vector<8x8xf32> to vector<8x8x1xf32>
    %92 = vector.broadcast %91 : vector<8x8x1xf32> to vector<8x8x8xf32>
    %93 = arith.subf %89, %92 : vector<8x8x8xf32>
    %94 = math.exp %93 : vector<8x8x8xf32>
    %cst_30 = arith.constant dense<0.000000e+00> : vector<8x8xf32>
    %95 = vector.multi_reduction <add>, %94, %cst_30 [2] : vector<8x8x8xf32> to vector<8x8xf32>
    %96 = vector.shape_cast %95 : vector<8x8xf32> to vector<8x8x1xf32>
    %97 = tpu.reciprocal %96 {approx = true} : vector<8x8x1xf32> -> vector<8x8x1xf32>
    %98 = vector.broadcast %97 : vector<8x8x1xf32> to vector<8x8x8xf32>
    %99 = arith.mulf %94, %98 : vector<8x8x8xf32>
    "tpu.trace_start"() <{level = 10 : i32, message = "blm,bmd->bld"}> : () -> ()
    %cst_31 = arith.constant dense<0.000000e+00> : vector<8x8x8xf32>
    %100 = tpu.matmul %99, %86, %cst_31 {dimension_numbers = #tpu.dot_dimension_numbers<[2], [1], [1], [2], [0, 0, 0, 1, 1, 2], [0], [0]>} : vector<8x8x8xf32>, vector<8x8x8xf32>, vector<8x8x8xf32> -> vector<8x8x8xf32>
    "tpu.trace_stop"() : () -> ()
    %101 = vector.shape_cast %100 : vector<8x8x8xf32> to vector<64x8xf32>
    %102 = vector.extract_strided_slice %7 {offsets = [24, 0], sizes = [8, 32], strides = [1, 1]} : vector<32x32xf32> to vector<8x32xf32>
    %cst_32 = arith.constant dense<0.000000e+00> : vector<64x32xf32>
    %103 = tpu.matmul %101, %102, %cst_32 {dimension_numbers = #tpu.dot_dimension_numbers<[1], [0], [0], [1], [0, 0, 1, 1], [], []>} : vector<64x8xf32>, vector<8x32xf32>, vector<64x32xf32> -> vector<64x32xf32>
    %104 = arith.addf %80, %103 : vector<64x32xf32>
    %105 = arith.addf %1, %104 : vector<64x32xf32>
    %c0_33 = arith.constant 0 : index
    %c0_34 = arith.constant 0 : index
    %106 = vector.load %arg4[%c0_33, %c0_34] : memref<1x32xf32, #tpu.memory_space<vmem>>, vector<1x32xf32>
    %107 = vector.broadcast %106 : vector<1x32xf32> to vector<64x32xf32>
    %108 = arith.addf %105, %107 : vector<64x32xf32>
    %c0_35 = arith.constant 0 : index
    %c0_36 = arith.constant 0 : index
    %109 = vector.load %arg5[%c0_35, %c0_36] : memref<1x32xf32, #tpu.memory_space<vmem>>, vector<1x32xf32>
    %c0_37 = arith.constant 0 : index
    %c0_38 = arith.constant 0 : index
    %110 = vector.load %arg6[%c0_37, %c0_38] : memref<1x32xf32, #tpu.memory_space<vmem>>, vector<1x32xf32>
    %cst_39 = arith.constant dense<0.000000e+00> : vector<32xf32>
    %111 = vector.multi_reduction <add>, %108, %cst_39 [0] : vector<64x32xf32> to vector<32xf32>
    %112 = vector.shape_cast %111 : vector<32xf32> to vector<1x32xf32>
    %113 = arith.mulf %108, %108 : vector<64x32xf32>
    %cst_40 = arith.constant dense<0.000000e+00> : vector<32xf32>
    %114 = vector.multi_reduction <add>, %113, %cst_40 [0] : vector<64x32xf32> to vector<32xf32>
    %115 = vector.shape_cast %114 : vector<32xf32> to vector<1x32xf32>
    %cst_41 = arith.constant 1.562500e-02 : f32
    %116 = vector.broadcast %cst_41 : f32 to vector<1x32xf32>
    %117 = arith.mulf %112, %116 : vector<1x32xf32>
    %cst_42 = arith.constant 1.562500e-02 : f32
    %118 = vector.broadcast %cst_42 : f32 to vector<1x32xf32>
    %119 = arith.mulf %115, %118 : vector<1x32xf32>
    %120 = arith.mulf %117, %117 : vector<1x32xf32>
    %121 = arith.subf %119, %120 : vector<1x32xf32>
    %122 = vector.broadcast %117 : vector<1x32xf32> to vector<64x32xf32>
    %123 = arith.subf %108, %122 : vector<64x32xf32>
    %cst_43 = arith.constant 9.99999974E-6 : f32
    %124 = vector.broadcast %cst_43 : f32 to vector<1x32xf32>
    %125 = arith.addf %121, %124 : vector<1x32xf32>
    %126 = math.rsqrt %125 : vector<1x32xf32>
    %127 = vector.broadcast %126 : vector<1x32xf32> to vector<64x32xf32>
    %128 = arith.mulf %123, %127 : vector<64x32xf32>
    %129 = vector.broadcast %109 : vector<1x32xf32> to vector<64x32xf32>
    %130 = arith.mulf %128, %129 : vector<64x32xf32>
    %131 = vector.broadcast %110 : vector<1x32xf32> to vector<64x32xf32>
    %132 = arith.addf %130, %131 : vector<64x32xf32>
    %c0_44 = arith.constant 0 : index
    %c0_45 = arith.constant 0 : index
    %133 = vector.load %arg7[%c0_44, %c0_45] : memref<32x64xf32, #tpu.memory_space<vmem>>, vector<32x64xf32>
    %cst_46 = arith.constant dense<0.000000e+00> : vector<64x64xf32>
    %134 = tpu.matmul %132, %133, %cst_46 {dimension_numbers = #tpu.dot_dimension_numbers<[1], [0], [0], [1], [0, 0, 1, 1], [], []>} : vector<64x32xf32>, vector<32x64xf32>, vector<64x64xf32> -> vector<64x64xf32>
    %c0_47 = arith.constant 0 : index
    %c0_48 = arith.constant 0 : index
    %135 = vector.load %arg8[%c0_47, %c0_48] : memref<1x64xf32, #tpu.memory_space<vmem>>, vector<1x64xf32>
    %136 = vector.broadcast %135 : vector<1x64xf32> to vector<64x64xf32>
    %137 = arith.addf %134, %136 : vector<64x64xf32>
    %cst_49 = arith.constant 5.000000e-01 : f32
    %138 = vector.broadcast %cst_49 : f32 to vector<64x64xf32>
    %139 = arith.mulf %138, %137 : vector<64x64xf32>
    %cst_50 = arith.constant 0.707106769 : f32
    %140 = vector.broadcast %cst_50 : f32 to vector<64x64xf32>
    %141 = arith.mulf %137, %140 : vector<64x64xf32>
    %142 = math.erf %141 : vector<64x64xf32>
    %cst_51 = arith.constant 1.000000e+00 : f32
    %143 = vector.broadcast %cst_51 : f32 to vector<64x64xf32>
    %144 = arith.addf %143, %142 : vector<64x64xf32>
    %145 = arith.mulf %139, %144 : vector<64x64xf32>
    %c0_52 = arith.constant 0 : index
    %c0_53 = arith.constant 0 : index
    %146 = vector.load %arg9[%c0_52, %c0_53] : memref<64x32xf32, #tpu.memory_space<vmem>>, vector<64x32xf32>
    %cst_54 = arith.constant dense<0.000000e+00> : vector<64x32xf32>
    %147 = tpu.matmul %145, %146, %cst_54 {dimension_numbers = #tpu.dot_dimension_numbers<[1], [0], [0], [1], [0, 0, 1, 1], [], []>} : vector<64x64xf32>, vector<64x32xf32>, vector<64x32xf32> -> vector<64x32xf32>
    %c0_55 = arith.constant 0 : index
    %c0_56 = arith.constant 0 : index
    %148 = vector.load %arg10[%c0_55, %c0_56] : memref<1x32xf32, #tpu.memory_space<vmem>>, vector<1x32xf32>
    %149 = vector.broadcast %148 : vector<1x32xf32> to vector<64x32xf32>
    %150 = arith.addf %147, %149 : vector<64x32xf32>
    %151 = arith.addf %132, %150 : vector<64x32xf32>
    %c0_57 = arith.constant 0 : index
    %c0_58 = arith.constant 0 : index
    %152 = vector.load %arg11[%c0_57, %c0_58] : memref<1x32xf32, #tpu.memory_space<vmem>>, vector<1x32xf32>
    %c0_59 = arith.constant 0 : index
    %c0_60 = arith.constant 0 : index
    %153 = vector.load %arg12[%c0_59, %c0_60] : memref<1x32xf32, #tpu.memory_space<vmem>>, vector<1x32xf32>
    %cst_61 = arith.constant dense<0.000000e+00> : vector<32xf32>
    %154 = vector.multi_reduction <add>, %151, %cst_61 [0] : vector<64x32xf32> to vector<32xf32>
    %155 = vector.shape_cast %154 : vector<32xf32> to vector<1x32xf32>
    %156 = arith.mulf %151, %151 : vector<64x32xf32>
    %cst_62 = arith.constant dense<0.000000e+00> : vector<32xf32>
    %157 = vector.multi_reduction <add>, %156, %cst_62 [0] : vector<64x32xf32> to vector<32xf32>
    %158 = vector.shape_cast %157 : vector<32xf32> to vector<1x32xf32>
    %cst_63 = arith.constant 1.562500e-02 : f32
    %159 = vector.broadcast %cst_63 : f32 to vector<1x32xf32>
    %160 = arith.mulf %155, %159 : vector<1x32xf32>
    %cst_64 = arith.constant 1.562500e-02 : f32
    %161 = vector.broadcast %cst_64 : f32 to vector<1x32xf32>
    %162 = arith.mulf %158, %161 : vector<1x32xf32>
    %163 = arith.mulf %160, %160 : vector<1x32xf32>
    %164 = arith.subf %162, %163 : vector<1x32xf32>
    %165 = vector.broadcast %160 : vector<1x32xf32> to vector<64x32xf32>
    %166 = arith.subf %151, %165 : vector<64x32xf32>
    %cst_65 = arith.constant 9.99999974E-6 : f32
    %167 = vector.broadcast %cst_65 : f32 to vector<1x32xf32>
    %168 = arith.addf %164, %167 : vector<1x32xf32>
    %169 = math.rsqrt %168 : vector<1x32xf32>
    %170 = vector.broadcast %169 : vector<1x32xf32> to vector<64x32xf32>
    %171 = arith.mulf %166, %170 : vector<64x32xf32>
    %172 = vector.broadcast %152 : vector<1x32xf32> to vector<64x32xf32>
    %173 = arith.mulf %171, %172 : vector<64x32xf32>
    %174 = vector.broadcast %153 : vector<1x32xf32> to vector<64x32xf32>
    %175 = arith.addf %173, %174 : vector<64x32xf32>
    %176 = vector.shape_cast %175 : vector<64x32xf32> to vector<8x8x32xf32>
    %c0_66 = arith.constant 0 : index
    %c0_67 = arith.constant 0 : index
    %c0_68 = arith.constant 0 : index
    %177 = vector.load %arg13[%c0_66, %c0_67, %c0_68] : memref<8x8x32xf32, #tpu.memory_space<vmem>>, vector<8x8x32xf32>
    tpu.vector_store %arg13[%c0_66, %c0_67, %c0_68], %176 {strides = array<i32>} : memref<8x8x32xf32, #tpu.memory_space<vmem>>, vector<8x8x32xf32>,
    return
  }
}

</mosaic_0001>

<llo_original>
// kernel: time_var_attention_layer.1
$region0: #{time_var_attention_layer.1}
  #allocation0 [shape = 'u32[]', space=smem, size = 0x4, offset = 0x4, fixed_abs, tag = 'smem constant byte address 0x4 - core index']
  #allocation1 [shape = 'u32[72,128]{1,0:T(1,128)}', space=vmem, size = 0x9000, scoped, tag = 'internal scratch']
  %s0 = inlined_call_operand.vmem [shape: f32[8,8,32], index: 0, kind: input, shape index: {}]
  %s1 = inlined_call_operand.vmem [shape: f32[32,96], index: 1, kind: input, shape index: {}]
  %s2 = inlined_call_operand.vmem [shape: f32[1,96], index: 2, kind: input, shape index: {}]
  %s3 = inlined_call_operand.vmem [shape: f32[32,32], index: 3, kind: input, shape index: {}]
  %s4 = inlined_call_operand.vmem [shape: f32[1,32], index: 4, kind: input, shape index: {}]
  %s5 = inlined_call_operand.vmem [shape: f32[1,32], index: 5, kind: input, shape index: {}]
  %s6 = inlined_call_operand.vmem [shape: f32[1,32], index: 6, kind: input, shape index: {}]
  %s7 = inlined_call_operand.vmem [shape: f32[32,64], index: 7, kind: input, shape index: {}]
  %s8 = inlined_call_operand.vmem [shape: f32[1,64], index: 8, kind: input, shape index: {}]
  %s9 = inlined_call_operand.vmem [shape: f32[64,32], index: 9, kind: input, shape index: {}]
  %s10 = inlined_call_operand.vmem [shape: f32[1,32], index: 10, kind: input, shape index: {}]
  %s11 = inlined_call_operand.hbm [shape: f32[1,32], index: 11, kind: input, shape index: {}]
  %s12 = inlined_call_operand.vmem [shape: f32[1,32], index: 12, kind: input, shape index: {}]
  %s13 = inlined_call_operand.hbm [shape: f32[8,8,32], index: 13, kind: output, shape index: {}]
  %s14 = sld [smem:[#allocation0]]
  $region66: #{time_var_attention_layer.1} parent=0
    _
  %s16 = ssub.s32 1, %s14
  %s17 = scalar_select 0, %s16, %s14
  $region1: #{time_var_attention_layer.1} parent=0
    #allocation2 [shape = 'u8[512]{0}', space=vmem, size = 0x400, scoped, tag = 'input window, operand 11, single buffered']
    #allocation3 [shape = 's32[1]{0}', space=sflag, size = 0x4, scoped, tag = 'scoped memory for time_var_attention_layer.1']
    #allocation4 [shape = 's32[1]{0}', space=sflag, size = 0x4, scoped, tag = 'scoped memory for time_var_attention_layer.1']
    #allocation5 [shape = 'u8[32768]{0}', space=vmem, size = 0x8000, scoped, tag = 'output window, operand 0, single buffered']
    %18 = vsyncpa [#allocation3], 0
    %19 = vsyncpa [#allocation4], 0
    // Predicated region
    $region2: #{time_var_attention_layer.1} parent=1 // pred_check
      _
    $region3: #{time_var_attention_layer.1} parent=1 // pred_check_branch
      %21 = sbr.rel (0) target = $region5
    $region4: #{time_var_attention_layer.1} parent=1 // pred_region
      _
    $region5: #{time_var_attention_layer.1} parent=1 // pred_fallthru
      _
    // Predicated region
    $region6: #{time_var_attention_layer.1} parent=1 // pred_check
      _
    $region7: #{time_var_attention_layer.1} parent=1 // pred_check_branch
      %23 = sbr.rel (0) target = $region9
    $region8: #{time_var_attention_layer.1} parent=1 // pred_region
      _
    $region9: #{time_var_attention_layer.1} parent=1 // pred_fallthru
      _
    // Predicated region
    $region10: #{time_var_attention_layer.1} parent=1 // pred_check
      _
    $region11: #{time_var_attention_layer.1} parent=1 // pred_check_branch
      %25 = sbr.rel (0) target = $region13
    $region12: #{time_var_attention_layer.1} parent=1 // pred_region
      _
    $region13: #{time_var_attention_layer.1} parent=1 // pred_fallthru
      _
    // Predicated region
    $region14: #{time_var_attention_layer.1} parent=1 // pred_check
      _
    $region15: #{time_var_attention_layer.1} parent=1 // pred_check_branch
      %27 = sbr.rel (0) target = $region17
    $region16: #{time_var_attention_layer.1} parent=1 // pred_region
      _
    $region17: #{time_var_attention_layer.1} parent=1 // pred_fallthru
      _
    // Predicated region
    $region18: #{time_var_attention_layer.1} parent=1 // pred_check
      _
    $region19: #{time_var_attention_layer.1} parent=1 // pred_check_branch
      %29 = sbr.rel (0) target = $region21
    $region20: #{time_var_attention_layer.1} parent=1 // pred_region
      _
    $region21: #{time_var_attention_layer.1} parent=1 // pred_fallthru
      _
    // Predicated region
    $region22: #{time_var_attention_layer.1} parent=1 // pred_check
      _
    $region23: #{time_var_attention_layer.1} parent=1 // pred_check_branch
      %31 = sbr.rel (0) target = $region25
    $region24: #{time_var_attention_layer.1} parent=1 // pred_region
      _
    $region25: #{time_var_attention_layer.1} parent=1 // pred_fallthru
      _
    // Predicated region
    $region26: #{time_var_attention_layer.1} parent=1 // pred_check
      _
    $region27: #{time_var_attention_layer.1} parent=1 // pred_check_branch
      %33 = sbr.rel (0) target = $region29
    $region28: #{time_var_attention_layer.1} parent=1 // pred_region
      _
    $region29: #{time_var_attention_layer.1} parent=1 // pred_fallthru
      _
    // Predicated region
    $region30: #{time_var_attention_layer.1} parent=1 // pred_check
      _
    $region31: #{time_var_attention_layer.1} parent=1 // pred_check_branch
      %35 = sbr.rel (0) target = $region33
    $region32: #{time_var_attention_layer.1} parent=1 // pred_region
      _
    $region33: #{time_var_attention_layer.1} parent=1 // pred_fallthru
      _
    // Predicated region
    $region34: #{time_var_attention_layer.1} parent=1 // pred_check
      _
    $region35: #{time_var_attention_layer.1} parent=1 // pred_check_branch
      %37 = sbr.rel (0) target = $region37
    $region36: #{time_var_attention_layer.1} parent=1 // pred_region
      _
    $region37: #{time_var_attention_layer.1} parent=1 // pred_fallthru
      _
    // Predicated region
    $region38: #{time_var_attention_layer.1} parent=1 // pred_check
      _
    $region39: #{time_var_attention_layer.1} parent=1 // pred_check_branch
      %39 = sbr.rel (0) target = $region41
    $region40: #{time_var_attention_layer.1} parent=1 // pred_region
      _
    $region41: #{time_var_attention_layer.1} parent=1 // pred_fallthru
      _
    // Predicated region
    $region42: #{time_var_attention_layer.1} parent=1 // pred_check
      _
    $region43: #{time_var_attention_layer.1} parent=1 // pred_check_branch
      %41 = sbr.rel (0) target = $region45
    $region44: #{time_var_attention_layer.1} parent=1 // pred_region
      _
    $region45: #{time_var_attention_layer.1} parent=1 // pred_fallthru
      _
    // Predicated region
    $region46: #{time_var_attention_layer.1} parent=1 // pred_check
      _
    $region47: #{time_var_attention_layer.1} parent=1 // pred_check_branch
      %43 = sbr.rel (0) target = $region49
    $region48: #{time_var_attention_layer.1} parent=1 // pred_region
      %45 = vsyncadd [#allocation3], 0
      %s47 = sshll.u32 %s11, 4
      %s48 = int_to_ptr.hbm [resolvable:$true] %s47
      %s49 = sshll.u32 [#allocation2], 4
      %s50 = int_to_ptr.vmem [resolvable:$true] %s49
      %52 = dma.hbm_to_vmem [thread:$0]  %s48, 16, %s50, [#allocation3]
    $region49: #{time_var_attention_layer.1} parent=1 // pred_fallthru
      _
    // Predicated region
    $region50: #{time_var_attention_layer.1} parent=1 // pred_check
      _
    $region51: #{time_var_attention_layer.1} parent=1 // pred_check_branch
      %54 = sbr.rel (0) target = $region53
    $region52: #{time_var_attention_layer.1} parent=1 // pred_region
      _
    $region53: #{time_var_attention_layer.1} parent=1 // pred_fallthru
      _
    // Predicated region
    $region54: #{time_var_attention_layer.1} parent=1 // pred_check
      _
    $region55: #{time_var_attention_layer.1} parent=1 // pred_check_branch
      %56 = sbr.rel (0) target = $region57
    $region56: #{time_var_attention_layer.1} parent=1 // pred_region
      %58 = dma.done [#allocation3], 16
    $region57: #{time_var_attention_layer.1} parent=1 // pred_fallthru
      _
    %v59 = vld [vmem:[%s0] sm:$0xff]
    %v60 = vld [vmem:[%s0 + $0x8] sm:$0xff]
    %v61 = vld [vmem:[%s0 + $0x10] sm:$0xff]
    %v62 = vld [vmem:[%s0 + $0x18] sm:$0xff]
    %v63 = vld [vmem:[%s0 + $0x20] sm:$0xff]
    %v64 = vld [vmem:[%s0 + $0x28] sm:$0xff]
    %v65 = vld [vmem:[%s0 + $0x30] sm:$0xff]
    %v66 = vld [vmem:[%s0 + $0x38] sm:$0xff]
    %v67 = vld [vmem:[%s1] sm:$0xff]
    %v68 = vld [vmem:[%s1 + $0x8] sm:$0xff]
    %v69 = vld [vmem:[%s1 + $0x10] sm:$0xff]
    %v70 = vld [vmem:[%s1 + $0x18] sm:$0xff]
    %v71 = vld [vmem:[%s2] sm:$0x1]
    %v73 = vperm.slane %v71, 0
    %vm75 = vcmask 261120
    %v77 = vsel %vm75, %v59, 0
    %v80 = vsel %vm75, %v60, 0
    %v83 = vsel %vm75, %v61, 0
    %v86 = vsel %vm75, %v62, 0
    %v89 = vsel %vm75, %v63, 0
    %v92 = vsel %vm75, %v64, 0
    %v95 = vsel %vm75, %v65, 0
    %v98 = vsel %vm75, %v66, 0
    %100 = vmatpush.msra.mxu0 0.0
    %101 = vmatpush.msra.mxu0 0.0
    %102 = vmatpush.msra.mxu0 0.0
    %103 = vmatpush.msra.mxu0 0.0
    %104 = vmatpush.msra.mxu0 0.0
    %105 = vmatpush.msra.mxu0 0.0
    %106 = vmatpush.msra.mxu0 0.0
    %107 = vmatpush.msra.mxu0 0.0
    %108 = vmatpush.msra.mxu0 0.0
    %109 = vmatpush.msra.mxu0 0.0
    %110 = vmatpush.msra.mxu0 0.0
    %111 = vmatpush.msra.mxu0 0.0
    %112 = vmatpush.msra.mxu0 %v70
    %113 = vmatpush.msra.mxu0 %v69
    %114 = vmatpush.msra.mxu0 %v68
    %115 = vmatpush.msra.mxu0 %v67
    %116 = vmatmul.f32.gmra.mxu0 %v77
    %v117 = vpop.f32.mrf.mxu0
    %v118 = vadd.f32 %v73, %v117
    %119 = vmatmul.f32.gmra.mxu0 %v80
    %v120 = vpop.f32.mrf.mxu0
    %v121 = vadd.f32 %v73, %v120
    %122 = vmatmul.f32.gmra.mxu0 %v83
    %v123 = vpop.f32.mrf.mxu0
    %v124 = vadd.f32 %v73, %v123
    %125 = vmatmul.f32.gmra.mxu0 %v86
    %v126 = vpop.f32.mrf.mxu0
    %v127 = vadd.f32 %v73, %v126
    %128 = vmatmul.f32.gmra.mxu0 %v89
    %v129 = vpop.f32.mrf.mxu0
    %v130 = vadd.f32 %v73, %v129
    %131 = vmatmul.f32.gmra.mxu0 %v92
    %v132 = vpop.f32.mrf.mxu0
    %v133 = vadd.f32 %v73, %v132
    %134 = vmatmul.f32.gmra.mxu0 %v95
    %v135 = vpop.f32.mrf.mxu0
    %v136 = vadd.f32 %v73, %v135
    %137 = vmatmul.f32.gmra.mxu0 %v98
    %v138 = vpop.f32.mrf.mxu0
    %v139 = vadd.f32 %v73, %v138
    %140 = vdwg.mxu0
    %v141 = vld [vmem:[%s3] sm:$0xff]
    %v142 = vld [vmem:[%s3 + $0x8] sm:$0xff]
    %v143 = vld [vmem:[%s3 + $0x10] sm:$0xff]
    %v144 = vld [vmem:[%s3 + $0x18] sm:$0xff]
    %146 = vrot.lane.b32.xlu0 %v118, 96
    %v147 = vpop.permute.xlu0 %146
    %vm148 = vcmask 64512
    %v149 = vsel %vm148, %v118, 0
    %v151 = vsel %vm148, %v147, 0
    %153 = vmatpush.xpose.msra.mxu0 0.0
    %154 = vmatpush.xpose.msra.mxu0 0.0
    %155 = vmatpush.xpose.msra.mxu0 0.0
    %156 = vmatpush.xpose.msra.mxu0 0.0
    %157 = vmatpush.xpose.msra.mxu0 0.0
    %158 = vmatpush.xpose.msra.mxu0 0.0
    %159 = vmatpush.xpose.msra.mxu0 0.0
    %160 = vmatpush.xpose.msra.mxu0 0.0
    %161 = vmatpush.xpose.msra.mxu0 0.0
    %162 = vmatpush.xpose.msra.mxu0 0.0
    %163 = vmatpush.xpose.msra.mxu0 0.0
    %164 = vmatpush.xpose.msra.mxu0 0.0
    %165 = vmatpush.xpose.msra.mxu0 0.0
    %166 = vmatpush.xpose.msra.mxu0 0.0
    %167 = vmatpush.xpose.msra.mxu0 0.0
    %168 = vmatpush.xpose.msra.mxu0 %v151
    %169 = vmatmul.f32.gmra.mxu0 %v149
    %v170 = vpop.f32.mrf.mxu0
    %v171 = vadd.f32 0.0, %v170
    %172 = vdwg.mxu0
    %174 = vrot.lane.b32.xlu0 %v121, 96
    %v175 = vpop.permute.xlu0 %174
    %v176 = vsel %vm148, %v121, 0
    %v178 = vsel %vm148, %v175, 0
    %180 = vmatpush.xpose.msra.mxu0 0.0
    %181 = vmatpush.xpose.msra.mxu0 0.0
    %182 = vmatpush.xpose.msra.mxu0 0.0
    %183 = vmatpush.xpose.msra.mxu0 0.0
    %184 = vmatpush.xpose.msra.mxu0 0.0
    %185 = vmatpush.xpose.msra.mxu0 0.0
    %186 = vmatpush.xpose.msra.mxu0 0.0
    %187 = vmatpush.xpose.msra.mxu0 0.0
    %188 = vmatpush.xpose.msra.mxu0 0.0
    %189 = vmatpush.xpose.msra.mxu0 0.0
    %190 = vmatpush.xpose.msra.mxu0 0.0
    %191 = vmatpush.xpose.msra.mxu0 0.0
    %192 = vmatpush.xpose.msra.mxu0 0.0
    %193 = vmatpush.xpose.msra.mxu0 0.0
    %194 = vmatpush.xpose.msra.mxu0 0.0
    %195 = vmatpush.xpose.msra.mxu0 %v178
    %196 = vmatmul.f32.gmra.mxu0 %v176
    %v197 = vpop.f32.mrf.mxu0
    %v198 = vadd.f32 0.0, %v197
    %199 = vdwg.mxu0
    %201 = vrot.lane.b32.xlu0 %v124, 96
    %v202 = vpop.permute.xlu0 %201
    %v203 = vsel %vm148, %v124, 0
    %v205 = vsel %vm148, %v202, 0
    %207 = vmatpush.xpose.msra.mxu0 0.0
    %208 = vmatpush.xpose.msra.mxu0 0.0
    %209 = vmatpush.xpose.msra.mxu0 0.0
    %210 = vmatpush.xpose.msra.mxu0 0.0
    %211 = vmatpush.xpose.msra.mxu0 0.0
    %212 = vmatpush.xpose.msra.mxu0 0.0
    %213 = vmatpush.xpose.msra.mxu0 0.0
    %214 = vmatpush.xpose.msra.mxu0 0.0
    %215 = vmatpush.xpose.msra.mxu0 0.0
    %216 = vmatpush.xpose.msra.mxu0 0.0
    %217 = vmatpush.xpose.msra.mxu0 0.0
    %218 = vmatpush.xpose.msra.mxu0 0.0
    %219 = vmatpush.xpose.msra.mxu0 0.0
    %220 = vmatpush.xpose.msra.mxu0 0.0
    %221 = vmatpush.xpose.msra.mxu0 0.0
    %222 = vmatpush.xpose.msra.mxu0 %v205
    %223 = vmatmul.f32.gmra.mxu0 %v203
    %v224 = vpop.f32.mrf.mxu0
    %v225 = vadd.f32 0.0, %v224
    %226 = vdwg.mxu0
    %228 = vrot.lane.b32.xlu0 %v127, 96
    %v229 = vpop.permute.xlu0 %228
    %v230 = vsel %vm148, %v127, 0
    %v232 = vsel %vm148, %v229, 0
    %234 = vmatpush.xpose.msra.mxu0 0.0
    %235 = vmatpush.xpose.msra.mxu0 0.0
    %236 = vmatpush.xpose.msra.mxu0 0.0
    %237 = vmatpush.xpose.msra.mxu0 0.0
    %238 = vmatpush.xpose.msra.mxu0 0.0
    %239 = vmatpush.xpose.msra.mxu0 0.0
    %240 = vmatpush.xpose.msra.mxu0 0.0
    %241 = vmatpush.xpose.msra.mxu0 0.0
    %242 = vmatpush.xpose.msra.mxu0 0.0
    %243 = vmatpush.xpose.msra.mxu0 0.0
    %244 = vmatpush.xpose.msra.mxu0 0.0
    %245 = vmatpush.xpose.msra.mxu0 0.0
    %246 = vmatpush.xpose.msra.mxu0 0.0
    %247 = vmatpush.xpose.msra.mxu0 0.0
    %248 = vmatpush.xpose.msra.mxu0 0.0
    %249 = vmatpush.xpose.msra.mxu0 %v232
    %250 = vmatmul.f32.gmra.mxu0 %v230
    %v251 = vpop.f32.mrf.mxu0
    %v252 = vadd.f32 0.0, %v251
    %253 = vdwg.mxu0
    %255 = vrot.lane.b32.xlu0 %v130, 96
    %v256 = vpop.permute.xlu0 %255
    %v257 = vsel %vm148, %v130, 0
    %v259 = vsel %vm148, %v256, 0
    %261 = vmatpush.xpose.msra.mxu0 0.0
    %262 = vmatpush.xpose.msra.mxu0 0.0
    %263 = vmatpush.xpose.msra.mxu0 0.0
    %264 = vmatpush.xpose.msra.mxu0 0.0
    %265 = vmatpush.xpose.msra.mxu0 0.0
    %266 = vmatpush.xpose.msra.mxu0 0.0
    %267 = vmatpush.xpose.msra.mxu0 0.0
    %268 = vmatpush.xpose.msra.mxu0 0.0
    %269 = vmatpush.xpose.msra.mxu0 0.0
    %270 = vmatpush.xpose.msra.mxu0 0.0
    %271 = vmatpush.xpose.msra.mxu0 0.0
    %272 = vmatpush.xpose.msra.mxu0 0.0
    %273 = vmatpush.xpose.msra.mxu0 0.0
    %274 = vmatpush.xpose.msra.mxu0 0.0
    %275 = vmatpush.xpose.msra.mxu0 0.0
    %276 = vmatpush.xpose.msra.mxu0 %v259
    %277 = vmatmul.f32.gmra.mxu0 %v257
    %v278 = vpop.f32.mrf.mxu0
    %v279 = vadd.f32 0.0, %v278
    %280 = vdwg.mxu0
    %282 = vrot.lane.b32.xlu0 %v133, 96
    %v283 = vpop.permute.xlu0 %282
    %v284 = vsel %vm148, %v133, 0
    %v286 = vsel %vm148, %v283, 0
    %288 = vmatpush.xpose.msra.mxu0 0.0
    %289 = vmatpush.xpose.msra.mxu0 0.0
    %290 = vmatpush.xpose.msra.mxu0 0.0
    %291 = vmatpush.xpose.msra.mxu0 0.0
    %292 = vmatpush.xpose.msra.mxu0 0.0
    %293 = vmatpush.xpose.msra.mxu0 0.0
    %294 = vmatpush.xpose.msra.mxu0 0.0
    %295 = vmatpush.xpose.msra.mxu0 0.0
    %296 = vmatpush.xpose.msra.mxu0 0.0
    %297 = vmatpush.xpose.msra.mxu0 0.0
    %298 = vmatpush.xpose.msra.mxu0 0.0
    %299 = vmatpush.xpose.msra.mxu0 0.0
    %300 = vmatpush.xpose.msra.mxu0 0.0
    %301 = vmatpush.xpose.msra.mxu0 0.0
    %302 = vmatpush.xpose.msra.mxu0 0.0
    %303 = vmatpush.xpose.msra.mxu0 %v286
    %304 = vmatmul.f32.gmra.mxu0 %v284
    %v305 = vpop.f32.mrf.mxu0
    %v306 = vadd.f32 0.0, %v305
    %307 = vdwg.mxu0
    %309 = vrot.lane.b32.xlu0 %v136, 96
    %v310 = vpop.permute.xlu0 %309
    %v311 = vsel %vm148, %v136, 0
    %v313 = vsel %vm148, %v310, 0
    %315 = vmatpush.xpose.msra.mxu0 0.0
    %316 = vmatpush.xpose.msra.mxu0 0.0
    %317 = vmatpush.xpose.msra.mxu0 0.0
    %318 = vmatpush.xpose.msra.mxu0 0.0
    %319 = vmatpush.xpose.msra.mxu0 0.0
    %320 = vmatpush.xpose.msra.mxu0 0.0
    %321 = vmatpush.xpose.msra.mxu0 0.0
    %322 = vmatpush.xpose.msra.mxu0 0.0
    %323 = vmatpush.xpose.msra.mxu0 0.0
    %324 = vmatpush.xpose.msra.mxu0 0.0
    %325 = vmatpush.xpose.msra.mxu0 0.0
    %326 = vmatpush.xpose.msra.mxu0 0.0
    %327 = vmatpush.xpose.msra.mxu0 0.0
    %328 = vmatpush.xpose.msra.mxu0 0.0
    %329 = vmatpush.xpose.msra.mxu0 0.0
    %330 = vmatpush.xpose.msra.mxu0 %v313
    %331 = vmatmul.f32.gmra.mxu0 %v311
    %v332 = vpop.f32.mrf.mxu0
    %v333 = vadd.f32 0.0, %v332
    %334 = vdwg.mxu0
    %336 = vrot.lane.b32.xlu0 %v139, 96
    %v337 = vpop.permute.xlu0 %336
    %v338 = vsel %vm148, %v139, 0
    %v340 = vsel %vm148, %v337, 0
    %342 = vmatpush.xpose.msra.mxu0 0.0
    %343 = vmatpush.xpose.msra.mxu0 0.0
    %344 = vmatpush.xpose.msra.mxu0 0.0
    %345 = vmatpush.xpose.msra.mxu0 0.0
    %346 = vmatpush.xpose.msra.mxu0 0.0
    %347 = vmatpush.xpose.msra.mxu0 0.0
    %348 = vmatpush.xpose.msra.mxu0 0.0
    %349 = vmatpush.xpose.msra.mxu0 0.0
    %350 = vmatpush.xpose.msra.mxu0 0.0
    %351 = vmatpush.xpose.msra.mxu0 0.0
    %352 = vmatpush.xpose.msra.mxu0 0.0
    %353 = vmatpush.xpose.msra.mxu0 0.0
    %354 = vmatpush.xpose.msra.mxu0 0.0
    %355 = vmatpush.xpose.msra.mxu0 0.0
    %356 = vmatpush.xpose.msra.mxu0 0.0
    %357 = vmatpush.xpose.msra.mxu0 %v340
    %358 = vmatmul.f32.gmra.mxu0 %v338
    %v359 = vpop.f32.mrf.mxu0
    %v360 = vadd.f32 0.0, %v359
    %361 = vdwg.mxu0
    %v362 = vmul.f32 %v171, 0.35355338
    %v363 = vmul.f32 %v198, 0.35355338
    %v364 = vmul.f32 %v225, 0.35355338
    %v365 = vmul.f32 %v252, 0.35355338
    %v366 = vmul.f32 %v279, 0.35355338
    %v367 = vmul.f32 %v306, 0.35355338
    %v368 = vmul.f32 %v333, 0.35355338
    %v369 = vmul.f32 %v360, 0.35355338
    %v370 = vsel %vm148, %v362, -inf
    %371 = vmax.xlane.f32.xlu0 %v370
    %v372 = vpop.xlane.xlu0 %371
    %v373 = vsel %vm148, %v363, -inf
    %374 = vmax.xlane.f32.xlu0 %v373
    %v375 = vpop.xlane.xlu0 %374
    %v376 = vsel %vm148, %v364, -inf
    %377 = vmax.xlane.f32.xlu0 %v376
    %v378 = vpop.xlane.xlu0 %377
    %v379 = vsel %vm148, %v365, -inf
    %380 = vmax.xlane.f32.xlu0 %v379
    %v381 = vpop.xlane.xlu0 %380
    %v382 = vsel %vm148, %v366, -inf
    %383 = vmax.xlane.f32.xlu0 %v382
    %v384 = vpop.xlane.xlu0 %383
    %v385 = vsel %vm148, %v367, -inf
    %386 = vmax.xlane.f32.xlu0 %v385
    %v387 = vpop.xlane.xlu0 %386
    %v388 = vsel %vm148, %v368, -inf
    %389 = vmax.xlane.f32.xlu0 %v388
    %v390 = vpop.xlane.xlu0 %389
    %v391 = vsel %vm148, %v369, -inf
    %392 = vmax.xlane.f32.xlu0 %v391
    %v393 = vpop.xlane.xlu0 %392
    %v394 = vsub.f32 %v362, %v372
    %v395 = vsub.f32 %v363, %v375
    %v396 = vsub.f32 %v364, %v378
    %v397 = vsub.f32 %v365, %v381
    %v398 = vsub.f32 %v366, %v384
    %v399 = vsub.f32 %v367, %v387
    %v400 = vsub.f32 %v368, %v390
    %v401 = vsub.f32 %v369, %v393
    %v402 = vmul.f32 %v394, 1.442695
    %v403 = vpow.pop %v402
    %v404 = vmul.f32 %v395, 1.442695
    %v405 = vpow.pop %v404
    %v406 = vmul.f32 %v396, 1.442695
    %v407 = vpow.pop %v406
    %v408 = vmul.f32 %v397, 1.442695
    %v409 = vpow.pop %v408
    %v410 = vmul.f32 %v398, 1.442695
    %v411 = vpow.pop %v410
    %v412 = vmul.f32 %v399, 1.442695
    %v413 = vpow.pop %v412
    %v414 = vmul.f32 %v400, 1.442695
    %v415 = vpow.pop %v414
    %v416 = vmul.f32 %v401, 1.442695
    %v417 = vpow.pop %v416
    %v418 = vsel %vm148, %v403, 0.0
    %419 = vadd.xlane.f32.xlu0 %v418
    %v420 = vpop.xlane.xlu0 %419
    %v421 = vsel %vm148, %v405, 0.0
    %422 = vadd.xlane.f32.xlu0 %v421
    %v423 = vpop.xlane.xlu0 %422
    %v424 = vsel %vm148, %v407, 0.0
    %425 = vadd.xlane.f32.xlu0 %v424
    %v426 = vpop.xlane.xlu0 %425
    %v427 = vsel %vm148, %v409, 0.0
    %428 = vadd.xlane.f32.xlu0 %v427
    %v429 = vpop.xlane.xlu0 %428
    %v430 = vsel %vm148, %v411, 0.0
    %431 = vadd.xlane.f32.xlu0 %v430
    %v432 = vpop.xlane.xlu0 %431
    %v433 = vsel %vm148, %v413, 0.0
    %434 = vadd.xlane.f32.xlu0 %v433
    %v435 = vpop.xlane.xlu0 %434
    %v436 = vsel %vm148, %v415, 0.0
    %437 = vadd.xlane.f32.xlu0 %v436
    %v438 = vpop.xlane.xlu0 %437
    %v439 = vsel %vm148, %v417, 0.0
    %440 = vadd.xlane.f32.xlu0 %v439
    %v441 = vpop.xlane.xlu0 %440
    %v442 = vrcp.pop %v420
    %v443 = vrcp.pop %v423
    %v444 = vrcp.pop %v426
    %v445 = vrcp.pop %v429
    %v446 = vrcp.pop %v432
    %v447 = vrcp.pop %v435
    %v448 = vrcp.pop %v438
    %v449 = vrcp.pop %v441
    %v450 = vmul.f32 %v403, %v442
    %v451 = vmul.f32 %v405, %v443
    %v452 = vmul.f32 %v407, %v444
    %v453 = vmul.f32 %v409, %v445
    %v454 = vmul.f32 %v411, %v446
    %v455 = vmul.f32 %v413, %v447
    %v456 = vmul.f32 %v415, %v448
    %v457 = vmul.f32 %v417, %v449
    %458 = vrot.lane.b32.xlu0 %v118, 64
    %v459 = vpop.permute.xlu0 %458
    %v462 = vsel %vm148, %v450, 0
    %464 = vmatpush.msra.mxu0 0.0
    %465 = vmatpush.msra.mxu0 0.0
    %466 = vmatpush.msra.mxu0 0.0
    %467 = vmatpush.msra.mxu0 0.0
    %468 = vmatpush.msra.mxu0 0.0
    %469 = vmatpush.msra.mxu0 0.0
    %470 = vmatpush.msra.mxu0 0.0
    %471 = vmatpush.msra.mxu0 0.0
    %472 = vmatpush.msra.mxu0 0.0
    %473 = vmatpush.msra.mxu0 0.0
    %474 = vmatpush.msra.mxu0 0.0
    %475 = vmatpush.msra.mxu0 0.0
    %476 = vmatpush.msra.mxu0 0.0
    %477 = vmatpush.msra.mxu0 0.0
    %478 = vmatpush.msra.mxu0 0.0
    %479 = vmatpush.msra.mxu0 %v459
    %480 = vmatmul.f32.gmra.mxu0 %v462
    %v481 = vpop.f32.mrf.mxu0
    %v482 = vadd.f32 0.0, %v481
    %483 = vdwg.mxu0
    %484 = vrot.lane.b32.xlu0 %v121, 64
    %v485 = vpop.permute.xlu0 %484
    %v488 = vsel %vm148, %v451, 0
    %490 = vmatpush.msra.mxu0 0.0
    %491 = vmatpush.msra.mxu0 0.0
    %492 = vmatpush.msra.mxu0 0.0
    %493 = vmatpush.msra.mxu0 0.0
    %494 = vmatpush.msra.mxu0 0.0
    %495 = vmatpush.msra.mxu0 0.0
    %496 = vmatpush.msra.mxu0 0.0
    %497 = vmatpush.msra.mxu0 0.0
    %498 = vmatpush.msra.mxu0 0.0
    %499 = vmatpush.msra.mxu0 0.0
    %500 = vmatpush.msra.mxu0 0.0
    %501 = vmatpush.msra.mxu0 0.0
    %502 = vmatpush.msra.mxu0 0.0
    %503 = vmatpush.msra.mxu0 0.0
    %504 = vmatpush.msra.mxu0 0.0
    %505 = vmatpush.msra.mxu0 %v485
    %506 = vmatmul.f32.gmra.mxu0 %v488
    %v507 = vpop.f32.mrf.mxu0
    %v508 = vadd.f32 0.0, %v507
    %509 = vdwg.mxu0
    %510 = vrot.lane.b32.xlu0 %v124, 64
    %v511 = vpop.permute.xlu0 %510
    %v514 = vsel %vm148, %v452, 0
    %516 = vmatpush.msra.mxu0 0.0
    %517 = vmatpush.msra.mxu0 0.0
    %518 = vmatpush.msra.mxu0 0.0
    %519 = vmatpush.msra.mxu0 0.0
    %520 = vmatpush.msra.mxu0 0.0
    %521 = vmatpush.msra.mxu0 0.0
    %522 = vmatpush.msra.mxu0 0.0
    %523 = vmatpush.msra.mxu0 0.0
    %524 = vmatpush.msra.mxu0 0.0
    %525 = vmatpush.msra.mxu0 0.0
    %526 = vmatpush.msra.mxu0 0.0
    %527 = vmatpush.msra.mxu0 0.0
    %528 = vmatpush.msra.mxu0 0.0
    %529 = vmatpush.msra.mxu0 0.0
    %530 = vmatpush.msra.mxu0 0.0
    %531 = vmatpush.msra.mxu0 %v511
    %532 = vmatmul.f32.gmra.mxu0 %v514
    %v533 = vpop.f32.mrf.mxu0
    %v534 = vadd.f32 0.0, %v533
    %535 = vdwg.mxu0
    %536 = vrot.lane.b32.xlu0 %v127, 64
    %v537 = vpop.permute.xlu0 %536
    %v540 = vsel %vm148, %v453, 0
    %542 = vmatpush.msra.mxu0 0.0
    %543 = vmatpush.msra.mxu0 0.0
    %544 = vmatpush.msra.mxu0 0.0
    %545 = vmatpush.msra.mxu0 0.0
    %546 = vmatpush.msra.mxu0 0.0
    %547 = vmatpush.msra.mxu0 0.0
    %548 = vmatpush.msra.mxu0 0.0
    %549 = vmatpush.msra.mxu0 0.0
    %550 = vmatpush.msra.mxu0 0.0
    %551 = vmatpush.msra.mxu0 0.0
    %552 = vmatpush.msra.mxu0 0.0
    %553 = vmatpush.msra.mxu0 0.0
    %554 = vmatpush.msra.mxu0 0.0
    %555 = vmatpush.msra.mxu0 0.0
    %556 = vmatpush.msra.mxu0 0.0
    %557 = vmatpush.msra.mxu0 %v537
    %558 = vmatmul.f32.gmra.mxu0 %v540
    %v559 = vpop.f32.mrf.mxu0
    %v560 = vadd.f32 0.0, %v559
    %561 = vdwg.mxu0
    %562 = vrot.lane.b32.xlu0 %v130, 64
    %v563 = vpop.permute.xlu0 %562
    %v566 = vsel %vm148, %v454, 0
    %568 = vmatpush.msra.mxu0 0.0
    %569 = vmatpush.msra.mxu0 0.0
    %570 = vmatpush.msra.mxu0 0.0
    %571 = vmatpush.msra.mxu0 0.0
    %572 = vmatpush.msra.mxu0 0.0
    %573 = vmatpush.msra.mxu0 0.0
    %574 = vmatpush.msra.mxu0 0.0
    %575 = vmatpush.msra.mxu0 0.0
    %576 = vmatpush.msra.mxu0 0.0
    %577 = vmatpush.msra.mxu0 0.0
    %578 = vmatpush.msra.mxu0 0.0
    %579 = vmatpush.msra.mxu0 0.0
    %580 = vmatpush.msra.mxu0 0.0
    %581 = vmatpush.msra.mxu0 0.0
    %582 = vmatpush.msra.mxu0 0.0
    %583 = vmatpush.msra.mxu0 %v563
    %584 = vmatmul.f32.gmra.mxu0 %v566
    %v585 = vpop.f32.mrf.mxu0
    %v586 = vadd.f32 0.0, %v585
    %587 = vdwg.mxu0
    %588 = vrot.lane.b32.xlu0 %v133, 64
    %v589 = vpop.permute.xlu0 %588
    %v592 = vsel %vm148, %v455, 0
    %594 = vmatpush.msra.mxu0 0.0
    %595 = vmatpush.msra.mxu0 0.0
    %596 = vmatpush.msra.mxu0 0.0
    %597 = vmatpush.msra.mxu0 0.0
    %598 = vmatpush.msra.mxu0 0.0
    %599 = vmatpush.msra.mxu0 0.0
    %600 = vmatpush.msra.mxu0 0.0
    %601 = vmatpush.msra.mxu0 0.0
    %602 = vmatpush.msra.mxu0 0.0
    %603 = vmatpush.msra.mxu0 0.0
    %604 = vmatpush.msra.mxu0 0.0
    %605 = vmatpush.msra.mxu0 0.0
    %606 = vmatpush.msra.mxu0 0.0
    %607 = vmatpush.msra.mxu0 0.0
    %608 = vmatpush.msra.mxu0 0.0
    %609 = vmatpush.msra.mxu0 %v589
    %610 = vmatmul.f32.gmra.mxu0 %v592
    %v611 = vpop.f32.mrf.mxu0
    %v612 = vadd.f32 0.0, %v611
    %613 = vdwg.mxu0
    %614 = vrot.lane.b32.xlu0 %v136, 64
    %v615 = vpop.permute.xlu0 %614
    %v618 = vsel %vm148, %v456, 0
    %620 = vmatpush.msra.mxu0 0.0
    %621 = vmatpush.msra.mxu0 0.0
    %622 = vmatpush.msra.mxu0 0.0
    %623 = vmatpush.msra.mxu0 0.0
    %624 = vmatpush.msra.mxu0 0.0
    %625 = vmatpush.msra.mxu0 0.0
    %626 = vmatpush.msra.mxu0 0.0
    %627 = vmatpush.msra.mxu0 0.0
    %628 = vmatpush.msra.mxu0 0.0
    %629 = vmatpush.msra.mxu0 0.0
    %630 = vmatpush.msra.mxu0 0.0
    %631 = vmatpush.msra.mxu0 0.0
    %632 = vmatpush.msra.mxu0 0.0
    %633 = vmatpush.msra.mxu0 0.0
    %634 = vmatpush.msra.mxu0 0.0
    %635 = vmatpush.msra.mxu0 %v615
    %636 = vmatmul.f32.gmra.mxu0 %v618
    %v637 = vpop.f32.mrf.mxu0
    %v638 = vadd.f32 0.0, %v637
    %639 = vdwg.mxu0
    %640 = vrot.lane.b32.xlu0 %v139, 64
    %v641 = vpop.permute.xlu0 %640
    %v644 = vsel %vm148, %v457, 0
    %646 = vmatpush.msra.mxu0 0.0
    %647 = vmatpush.msra.mxu0 0.0
    %648 = vmatpush.msra.mxu0 0.0
    %649 = vmatpush.msra.mxu0 0.0
    %650 = vmatpush.msra.mxu0 0.0
    %651 = vmatpush.msra.mxu0 0.0
    %652 = vmatpush.msra.mxu0 0.0
    %653 = vmatpush.msra.mxu0 0.0
    %654 = vmatpush.msra.mxu0 0.0
    %655 = vmatpush.msra.mxu0 0.0
    %656 = vmatpush.msra.mxu0 0.0
    %657 = vmatpush.msra.mxu0 0.0
    %658 = vmatpush.msra.mxu0 0.0
    %659 = vmatpush.msra.mxu0 0.0
    %660 = vmatpush.msra.mxu0 0.0
    %661 = vmatpush.msra.mxu0 %v641
    %662 = vmatmul.f32.gmra.mxu0 %v644
    %v663 = vpop.f32.mrf.mxu0
    %v664 = vadd.f32 0.0, %v663
    %665 = vdwg.mxu0
    %666 = vrot.lane.b32.xlu0 %v118, 120
    %v667 = vpop.permute.xlu0 %666
    %668 = vrot.lane.b32.xlu0 %v118, 88
    %v669 = vpop.permute.xlu0 %668
    %v670 = vsel %vm148, %v667, 0
    %v672 = vsel %vm148, %v669, 0
    %674 = vmatpush.xpose.msra.mxu0 0.0
    %675 = vmatpush.xpose.msra.mxu0 0.0
    %676 = vmatpush.xpose.msra.mxu0 0.0
    %677 = vmatpush.xpose.msra.mxu0 0.0
    %678 = vmatpush.xpose.msra.mxu0 0.0
    %679 = vmatpush.xpose.msra.mxu0 0.0
    %680 = vmatpush.xpose.msra.mxu0 0.0
    %681 = vmatpush.xpose.msra.mxu0 0.0
    %682 = vmatpush.xpose.msra.mxu0 0.0
    %683 = vmatpush.xpose.msra.mxu0 0.0
    %684 = vmatpush.xpose.msra.mxu0 0.0
    %685 = vmatpush.xpose.msra.mxu0 0.0
    %686 = vmatpush.xpose.msra.mxu0 0.0
    %687 = vmatpush.xpose.msra.mxu0 0.0
    %688 = vmatpush.xpose.msra.mxu0 0.0
    %689 = vmatpush.xpose.msra.mxu0 %v672
    %690 = vmatmul.f32.gmra.mxu0 %v670
    %v691 = vpop.f32.mrf.mxu0
    %v692 = vadd.f32 0.0, %v691
    %693 = vdwg.mxu0
    %694 = vrot.lane.b32.xlu0 %v121, 120
    %v695 = vpop.permute.xlu0 %694
    %696 = vrot.lane.b32.xlu0 %v121, 88
    %v697 = vpop.permute.xlu0 %696
    %v698 = vsel %vm148, %v695, 0
    %v700 = vsel %vm148, %v697, 0
    %702 = vmatpush.xpose.msra.mxu0 0.0
    %703 = vmatpush.xpose.msra.mxu0 0.0
    %704 = vmatpush.xpose.msra.mxu0 0.0
    %705 = vmatpush.xpose.msra.mxu0 0.0
    %706 = vmatpush.xpose.msra.mxu0 0.0
    %707 = vmatpush.xpose.msra.mxu0 0.0
    %708 = vmatpush.xpose.msra.mxu0 0.0
    %709 = vmatpush.xpose.msra.mxu0 0.0
    %710 = vmatpush.xpose.msra.mxu0 0.0
    %711 = vmatpush.xpose.msra.mxu0 0.0
    %712 = vmatpush.xpose.msra.mxu0 0.0
    %713 = vmatpush.xpose.msra.mxu0 0.0
    %714 = vmatpush.xpose.msra.mxu0 0.0
    %715 = vmatpush.xpose.msra.mxu0 0.0
    %716 = vmatpush.xpose.msra.mxu0 0.0
    %717 = vmatpush.xpose.msra.mxu0 %v700
    %718 = vmatmul.f32.gmra.mxu0 %v698
    %v719 = vpop.f32.mrf.mxu0
    %v720 = vadd.f32 0.0, %v719
    %721 = vdwg.mxu0
    %722 = vrot.lane.b32.xlu0 %v124, 120
    %v723 = vpop.permute.xlu0 %722
    %724 = vrot.lane.b32.xlu0 %v124, 88
    %v725 = vpop.permute.xlu0 %724
    %v726 = vsel %vm148, %v723, 0
    %v728 = vsel %vm148, %v725, 0
    %730 = vmatpush.xpose.msra.mxu0 0.0
    %731 = vmatpush.xpose.msra.mxu0 0.0
    %732 = vmatpush.xpose.msra.mxu0 0.0
    %733 = vmatpush.xpose.msra.mxu0 0.0
    %734 = vmatpush.xpose.msra.mxu0 0.0
    %735 = vmatpush.xpose.msra.mxu0 0.0
    %736 = vmatpush.xpose.msra.mxu0 0.0
    %737 = vmatpush.xpose.msra.mxu0 0.0
    %738 = vmatpush.xpose.msra.mxu0 0.0
    %739 = vmatpush.xpose.msra.mxu0 0.0
    %740 = vmatpush.xpose.msra.mxu0 0.0
    %741 = vmatpush.xpose.msra.mxu0 0.0
    %742 = vmatpush.xpose.msra.mxu0 0.0
    %743 = vmatpush.xpose.msra.mxu0 0.0
    %744 = vmatpush.xpose.msra.mxu0 0.0
    %745 = vmatpush.xpose.msra.mxu0 %v728
    %746 = vmatmul.f32.gmra.mxu0 %v726
    %v747 = vpop.f32.mrf.mxu0
    %v748 = vadd.f32 0.0, %v747
    %749 = vdwg.mxu0
    %750 = vrot.lane.b32.xlu0 %v127, 120
    %v751 = vpop.permute.xlu0 %750
    %752 = vrot.lane.b32.xlu0 %v127, 88
    %v753 = vpop.permute.xlu0 %752
    %v754 = vsel %vm148, %v751, 0
    %v756 = vsel %vm148, %v753, 0
    %758 = vmatpush.xpose.msra.mxu0 0.0
    %759 = vmatpush.xpose.msra.mxu0 0.0
    %760 = vmatpush.xpose.msra.mxu0 0.0
    %761 = vmatpush.xpose.msra.mxu0 0.0
    %762 = vmatpush.xpose.msra.mxu0 0.0
    %763 = vmatpush.xpose.msra.mxu0 0.0
    %764 = vmatpush.xpose.msra.mxu0 0.0
    %765 = vmatpush.xpose.msra.mxu0 0.0
    %766 = vmatpush.xpose.msra.mxu0 0.0
    %767 = vmatpush.xpose.msra.mxu0 0.0
    %768 = vmatpush.xpose.msra.mxu0 0.0
    %769 = vmatpush.xpose.msra.mxu0 0.0
    %770 = vmatpush.xpose.msra.mxu0 0.0
    %771 = vmatpush.xpose.msra.mxu0 0.0
    %772 = vmatpush.xpose.msra.mxu0 0.0
    %773 = vmatpush.xpose.msra.mxu0 %v756
    %774 = vmatmul.f32.gmra.mxu0 %v754
    %v775 = vpop.f32.mrf.mxu0
    %v776 = vadd.f32 0.0, %v775
    %777 = vdwg.mxu0
    %778 = vrot.lane.b32.xlu0 %v130, 120
    %v779 = vpop.permute.xlu0 %778
    %780 = vrot.lane.b32.xlu0 %v130, 88
    %v781 = vpop.permute.xlu0 %780
    %v782 = vsel %vm148, %v779, 0
    %v784 = vsel %vm148, %v781, 0
    %786 = vmatpush.xpose.msra.mxu0 0.0
    %787 = vmatpush.xpose.msra.mxu0 0.0
    %788 = vmatpush.xpose.msra.mxu0 0.0
    %789 = vmatpush.xpose.msra.mxu0 0.0
    %790 = vmatpush.xpose.msra.mxu0 0.0
    %791 = vmatpush.xpose.msra.mxu0 0.0
    %792 = vmatpush.xpose.msra.mxu0 0.0
    %793 = vmatpush.xpose.msra.mxu0 0.0
    %794 = vmatpush.xpose.msra.mxu0 0.0
    %795 = vmatpush.xpose.msra.mxu0 0.0
    %796 = vmatpush.xpose.msra.mxu0 0.0
    %797 = vmatpush.xpose.msra.mxu0 0.0
    %798 = vmatpush.xpose.msra.mxu0 0.0
    %799 = vmatpush.xpose.msra.mxu0 0.0
    %800 = vmatpush.xpose.msra.mxu0 0.0
    %801 = vmatpush.xpose.msra.mxu0 %v784
    %802 = vmatmul.f32.gmra.mxu0 %v782
    %v803 = vpop.f32.mrf.mxu0
    %v804 = vadd.f32 0.0, %v803
    %805 = vdwg.mxu0
    %806 = vrot.lane.b32.xlu0 %v133, 120
    %v807 = vpop.permute.xlu0 %806
    %808 = vrot.lane.b32.xlu0 %v133, 88
    %v809 = vpop.permute.xlu0 %808
    %v810 = vsel %vm148, %v807, 0
    %v812 = vsel %vm148, %v809, 0
    %814 = vmatpush.xpose.msra.mxu0 0.0
    %815 = vmatpush.xpose.msra.mxu0 0.0
    %816 = vmatpush.xpose.msra.mxu0 0.0
    %817 = vmatpush.xpose.msra.mxu0 0.0
    %818 = vmatpush.xpose.msra.mxu0 0.0
    %819 = vmatpush.xpose.msra.mxu0 0.0
    %820 = vmatpush.xpose.msra.mxu0 0.0
    %821 = vmatpush.xpose.msra.mxu0 0.0
    %822 = vmatpush.xpose.msra.mxu0 0.0
    %823 = vmatpush.xpose.msra.mxu0 0.0
    %824 = vmatpush.xpose.msra.mxu0 0.0
    %825 = vmatpush.xpose.msra.mxu0 0.0
    %826 = vmatpush.xpose.msra.mxu0 0.0
    %827 = vmatpush.xpose.msra.mxu0 0.0
    %828 = vmatpush.xpose.msra.mxu0 0.0
    %829 = vmatpush.xpose.msra.mxu0 %v812
    %830 = vmatmul.f32.gmra.mxu0 %v810
    %v831 = vpop.f32.mrf.mxu0
    %v832 = vadd.f32 0.0, %v831
    %833 = vdwg.mxu0
    %834 = vrot.lane.b32.xlu0 %v136, 120
    %v835 = vpop.permute.xlu0 %834
    %836 = vrot.lane.b32.xlu0 %v136, 88
    %v837 = vpop.permute.xlu0 %836
    %v838 = vsel %vm148, %v835, 0
    %v840 = vsel %vm148, %v837, 0
    %842 = vmatpush.xpose.msra.mxu0 0.0
    %843 = vmatpush.xpose.msra.mxu0 0.0
    %844 = vmatpush.xpose.msra.mxu0 0.0
    %845 = vmatpush.xpose.msra.mxu0 0.0
    %846 = vmatpush.xpose.msra.mxu0 0.0
    %847 = vmatpush.xpose.msra.mxu0 0.0
    %848 = vmatpush.xpose.msra.mxu0 0.0
    %849 = vmatpush.xpose.msra.mxu0 0.0
    %850 = vmatpush.xpose.msra.mxu0 0.0
    %851 = vmatpush.xpose.msra.mxu0 0.0
    %852 = vmatpush.xpose.msra.mxu0 0.0
    %853 = vmatpush.xpose.msra.mxu0 0.0
    %854 = vmatpush.xpose.msra.mxu0 0.0
    %855 = vmatpush.xpose.msra.mxu0 0.0
    %856 = vmatpush.xpose.msra.mxu0 0.0
    %857 = vmatpush.xpose.msra.mxu0 %v840
    %858 = vmatmul.f32.gmra.mxu0 %v838
    %v859 = vpop.f32.mrf.mxu0
    %v860 = vadd.f32 0.0, %v859
    %861 = vdwg.mxu0
    %862 = vrot.lane.b32.xlu0 %v139, 120
    %v863 = vpop.permute.xlu0 %862
    %864 = vrot.lane.b32.xlu0 %v139, 88
    %v865 = vpop.permute.xlu0 %864
    %v866 = vsel %vm148, %v863, 0
    %v868 = vsel %vm148, %v865, 0
    %870 = vmatpush.xpose.msra.mxu0 0.0
    %871 = vmatpush.xpose.msra.mxu0 0.0
    %872 = vmatpush.xpose.msra.mxu0 0.0
    %873 = vmatpush.xpose.msra.mxu0 0.0
    %874 = vmatpush.xpose.msra.mxu0 0.0
    %875 = vmatpush.xpose.msra.mxu0 0.0
    %876 = vmatpush.xpose.msra.mxu0 0.0
    %877 = vmatpush.xpose.msra.mxu0 0.0
    %878 = vmatpush.xpose.msra.mxu0 0.0
    %879 = vmatpush.xpose.msra.mxu0 0.0
    %880 = vmatpush.xpose.msra.mxu0 0.0
    %881 = vmatpush.xpose.msra.mxu0 0.0
    %882 = vmatpush.xpose.msra.mxu0 0.0
    %883 = vmatpush.xpose.msra.mxu0 0.0
    %884 = vmatpush.xpose.msra.mxu0 0.0
    %885 = vmatpush.xpose.msra.mxu0 %v868
    %886 = vmatmul.f32.gmra.mxu0 %v866
    %v887 = vpop.f32.mrf.mxu0
    %v888 = vadd.f32 0.0, %v887
    %889 = vdwg.mxu0
    %v890 = vmul.f32 %v692, 0.35355338
    %v891 = vmul.f32 %v720, 0.35355338
    %v892 = vmul.f32 %v748, 0.35355338
    %v893 = vmul.f32 %v776, 0.35355338
    %v894 = vmul.f32 %v804, 0.35355338
    %v895 = vmul.f32 %v832, 0.35355338
    %v896 = vmul.f32 %v860, 0.35355338
    %v897 = vmul.f32 %v888, 0.35355338
    %v898 = vsel %vm148, %v890, -inf
    %899 = vmax.xlane.f32.xlu0 %v898
    %v900 = vpop.xlane.xlu0 %899
    %v901 = vsel %vm148, %v891, -inf
    %902 = vmax.xlane.f32.xlu0 %v901
    %v903 = vpop.xlane.xlu0 %902
    %v904 = vsel %vm148, %v892, -inf
    %905 = vmax.xlane.f32.xlu0 %v904
    %v906 = vpop.xlane.xlu0 %905
    %v907 = vsel %vm148, %v893, -inf
    %908 = vmax.xlane.f32.xlu0 %v907
    %v909 = vpop.xlane.xlu0 %908
    %v910 = vsel %vm148, %v894, -inf
    %911 = vmax.xlane.f32.xlu0 %v910
    %v912 = vpop.xlane.xlu0 %911
    %v913 = vsel %vm148, %v895, -inf
    %914 = vmax.xlane.f32.xlu0 %v913
    %v915 = vpop.xlane.xlu0 %914
    %v916 = vsel %vm148, %v896, -inf
    %917 = vmax.xlane.f32.xlu0 %v916
    %v918 = vpop.xlane.xlu0 %917
    %v919 = vsel %vm148, %v897, -inf
    %920 = vmax.xlane.f32.xlu0 %v919
    %v921 = vpop.xlane.xlu0 %920
    %v922 = vsub.f32 %v890, %v900
    %v923 = vsub.f32 %v891, %v903
    %v924 = vsub.f32 %v892, %v906
    %v925 = vsub.f32 %v893, %v909
    %v926 = vsub.f32 %v894, %v912
    %v927 = vsub.f32 %v895, %v915
    %v928 = vsub.f32 %v896, %v918
    %v929 = vsub.f32 %v897, %v921
    %v930 = vmul.f32 %v922, 1.442695
    %v931 = vpow.pop %v930
    %v932 = vmul.f32 %v923, 1.442695
    %v933 = vpow.pop %v932
    %v934 = vmul.f32 %v924, 1.442695
    %v935 = vpow.pop %v934
    %v936 = vmul.f32 %v925, 1.442695
    %v937 = vpow.pop %v936
    %v938 = vmul.f32 %v926, 1.442695
    %v939 = vpow.pop %v938
    %v940 = vmul.f32 %v927, 1.442695
    %v941 = vpow.pop %v940
    %v942 = vmul.f32 %v928, 1.442695
    %v943 = vpow.pop %v942
    %v944 = vmul.f32 %v929, 1.442695
    %v945 = vpow.pop %v944
    %v946 = vsel %vm148, %v931, 0.0
    %947 = vadd.xlane.f32.xlu0 %v946
    %v948 = vpop.xlane.xlu0 %947
    %v949 = vsel %vm148, %v933, 0.0
    %950 = vadd.xlane.f32.xlu0 %v949
    %v951 = vpop.xlane.xlu0 %950
    %v952 = vsel %vm148, %v935, 0.0
    %953 = vadd.xlane.f32.xlu0 %v952
    %v954 = vpop.xlane.xlu0 %953
    %v955 = vsel %vm148, %v937, 0.0
    %956 = vadd.xlane.f32.xlu0 %v955
    %v957 = vpop.xlane.xlu0 %956
    %v958 = vsel %vm148, %v939, 0.0
    %959 = vadd.xlane.f32.xlu0 %v958
    %v960 = vpop.xlane.xlu0 %959
    %v961 = vsel %vm148, %v941, 0.0
    %962 = vadd.xlane.f32.xlu0 %v961
    %v963 = vpop.xlane.xlu0 %962
    %v964 = vsel %vm148, %v943, 0.0
    %965 = vadd.xlane.f32.xlu0 %v964
    %v966 = vpop.xlane.xlu0 %965
    %v967 = vsel %vm148, %v945, 0.0
    %968 = vadd.xlane.f32.xlu0 %v967
    %v969 = vpop.xlane.xlu0 %968
    %v970 = vrcp.pop %v948
    %v971 = vrcp.pop %v951
    %v972 = vrcp.pop %v954
    %v973 = vrcp.pop %v957
    %v974 = vrcp.pop %v960
    %v975 = vrcp.pop %v963
    %v976 = vrcp.pop %v966
    %v977 = vrcp.pop %v969
    %v978 = vmul.f32 %v931, %v970
    %v979 = vmul.f32 %v933, %v971
    %v980 = vmul.f32 %v935, %v972
    %v981 = vmul.f32 %v937, %v973
    %v982 = vmul.f32 %v939, %v974
    %v983 = vmul.f32 %v941, %v975
    %v984 = vmul.f32 %v943, %v976
    %v985 = vmul.f32 %v945, %v977
    %986 = vrot.lane.b32.xlu0 %v118, 56
    %v987 = vpop.permute.xlu0 %986
    %v990 = vsel %vm148, %v978, 0
    %992 = vmatpush.msra.mxu0 0.0
    %993 = vmatpush.msra.mxu0 0.0
    %994 = vmatpush.msra.mxu0 0.0
    %995 = vmatpush.msra.mxu0 0.0
    %996 = vmatpush.msra.mxu0 0.0
    %997 = vmatpush.msra.mxu0 0.0
    %998 = vmatpush.msra.mxu0 0.0
    %999 = vmatpush.msra.mxu0 0.0
    %1000 = vmatpush.msra.mxu0 0.0
    %1001 = vmatpush.msra.mxu0 0.0
    %1002 = vmatpush.msra.mxu0 0.0
    %1003 = vmatpush.msra.mxu0 0.0
    %1004 = vmatpush.msra.mxu0 0.0
    %1005 = vmatpush.msra.mxu0 0.0
    %1006 = vmatpush.msra.mxu0 0.0
    %1007 = vmatpush.msra.mxu0 %v987
    %1008 = vmatmul.f32.gmra.mxu0 %v990
    %v1009 = vpop.f32.mrf.mxu0
    %v1010 = vadd.f32 0.0, %v1009
    %1011 = vdwg.mxu0
    %1012 = vrot.lane.b32.xlu0 %v121, 56
    %v1013 = vpop.permute.xlu0 %1012
    %v1016 = vsel %vm148, %v979, 0
    %1018 = vmatpush.msra.mxu0 0.0
    %1019 = vmatpush.msra.mxu0 0.0
    %1020 = vmatpush.msra.mxu0 0.0
    %1021 = vmatpush.msra.mxu0 0.0
    %1022 = vmatpush.msra.mxu0 0.0
    %1023 = vmatpush.msra.mxu0 0.0
    %1024 = vmatpush.msra.mxu0 0.0
    %1025 = vmatpush.msra.mxu0 0.0
    %1026 = vmatpush.msra.mxu0 0.0
    %1027 = vmatpush.msra.mxu0 0.0
    %1028 = vmatpush.msra.mxu0 0.0
    %1029 = vmatpush.msra.mxu0 0.0
    %1030 = vmatpush.msra.mxu0 0.0
    %1031 = vmatpush.msra.mxu0 0.0
    %1032 = vmatpush.msra.mxu0 0.0
    %1033 = vmatpush.msra.mxu0 %v1013
    %1034 = vmatmul.f32.gmra.mxu0 %v1016
    %v1035 = vpop.f32.mrf.mxu0
    %v1036 = vadd.f32 0.0, %v1035
    %1037 = vdwg.mxu0
    %1038 = vrot.lane.b32.xlu0 %v124, 56
    %v1039 = vpop.permute.xlu0 %1038
    %v1042 = vsel %vm148, %v980, 0
    %1044 = vmatpush.msra.mxu0 0.0
    %1045 = vmatpush.msra.mxu0 0.0
    %1046 = vmatpush.msra.mxu0 0.0
    %1047 = vmatpush.msra.mxu0 0.0
    %1048 = vmatpush.msra.mxu0 0.0
    %1049 = vmatpush.msra.mxu0 0.0
    %1050 = vmatpush.msra.mxu0 0.0
    %1051 = vmatpush.msra.mxu0 0.0
    %1052 = vmatpush.msra.mxu0 0.0
    %1053 = vmatpush.msra.mxu0 0.0
    %1054 = vmatpush.msra.mxu0 0.0
    %1055 = vmatpush.msra.mxu0 0.0
    %1056 = vmatpush.msra.mxu0 0.0
    %1057 = vmatpush.msra.mxu0 0.0
    %1058 = vmatpush.msra.mxu0 0.0
    %1059 = vmatpush.msra.mxu0 %v1039
    %1060 = vmatmul.f32.gmra.mxu0 %v1042
    %v1061 = vpop.f32.mrf.mxu0
    %v1062 = vadd.f32 0.0, %v1061
    %1063 = vdwg.mxu0
    %1064 = vrot.lane.b32.xlu0 %v127, 56
    %v1065 = vpop.permute.xlu0 %1064
    %v1068 = vsel %vm148, %v981, 0
    %1070 = vmatpush.msra.mxu0 0.0
    %1071 = vmatpush.msra.mxu0 0.0
    %1072 = vmatpush.msra.mxu0 0.0
    %1073 = vmatpush.msra.mxu0 0.0
    %1074 = vmatpush.msra.mxu0 0.0
    %1075 = vmatpush.msra.mxu0 0.0
    %1076 = vmatpush.msra.mxu0 0.0
    %1077 = vmatpush.msra.mxu0 0.0
    %1078 = vmatpush.msra.mxu0 0.0
    %1079 = vmatpush.msra.mxu0 0.0
    %1080 = vmatpush.msra.mxu0 0.0
    %1081 = vmatpush.msra.mxu0 0.0
    %1082 = vmatpush.msra.mxu0 0.0
    %1083 = vmatpush.msra.mxu0 0.0
    %1084 = vmatpush.msra.mxu0 0.0
    %1085 = vmatpush.msra.mxu0 %v1065
    %1086 = vmatmul.f32.gmra.mxu0 %v1068
    %v1087 = vpop.f32.mrf.mxu0
    %v1088 = vadd.f32 0.0, %v1087
    %1089 = vdwg.mxu0
    %1090 = vrot.lane.b32.xlu0 %v130, 56
    %v1091 = vpop.permute.xlu0 %1090
    %v1094 = vsel %vm148, %v982, 0
    %1096 = vmatpush.msra.mxu0 0.0
    %1097 = vmatpush.msra.mxu0 0.0
    %1098 = vmatpush.msra.mxu0 0.0
    %1099 = vmatpush.msra.mxu0 0.0
    %1100 = vmatpush.msra.mxu0 0.0
    %1101 = vmatpush.msra.mxu0 0.0
    %1102 = vmatpush.msra.mxu0 0.0
    %1103 = vmatpush.msra.mxu0 0.0
    %1104 = vmatpush.msra.mxu0 0.0
    %1105 = vmatpush.msra.mxu0 0.0
    %1106 = vmatpush.msra.mxu0 0.0
    %1107 = vmatpush.msra.mxu0 0.0
    %1108 = vmatpush.msra.mxu0 0.0
    %1109 = vmatpush.msra.mxu0 0.0
    %1110 = vmatpush.msra.mxu0 0.0
    %1111 = vmatpush.msra.mxu0 %v1091
    %1112 = vmatmul.f32.gmra.mxu0 %v1094
    %v1113 = vpop.f32.mrf.mxu0
    %v1114 = vadd.f32 0.0, %v1113
    %1115 = vdwg.mxu0
    %1116 = vrot.lane.b32.xlu0 %v133, 56
    %v1117 = vpop.permute.xlu0 %1116
    %v1120 = vsel %vm148, %v983, 0
    %1122 = vmatpush.msra.mxu0 0.0
    %1123 = vmatpush.msra.mxu0 0.0
    %1124 = vmatpush.msra.mxu0 0.0
    %1125 = vmatpush.msra.mxu0 0.0
    %1126 = vmatpush.msra.mxu0 0.0
    %1127 = vmatpush.msra.mxu0 0.0
    %1128 = vmatpush.msra.mxu0 0.0
    %1129 = vmatpush.msra.mxu0 0.0
    %1130 = vmatpush.msra.mxu0 0.0
    %1131 = vmatpush.msra.mxu0 0.0
    %1132 = vmatpush.msra.mxu0 0.0
    %1133 = vmatpush.msra.mxu0 0.0
    %1134 = vmatpush.msra.mxu0 0.0
    %1135 = vmatpush.msra.mxu0 0.0
    %1136 = vmatpush.msra.mxu0 0.0
    %1137 = vmatpush.msra.mxu0 %v1117
    %1138 = vmatmul.f32.gmra.mxu0 %v1120
    %v1139 = vpop.f32.mrf.mxu0
    %v1140 = vadd.f32 0.0, %v1139
    %1141 = vdwg.mxu0
    %1142 = vrot.lane.b32.xlu0 %v136, 56
    %v1143 = vpop.permute.xlu0 %1142
    %v1146 = vsel %vm148, %v984, 0
    %1148 = vmatpush.msra.mxu0 0.0
    %1149 = vmatpush.msra.mxu0 0.0
    %1150 = vmatpush.msra.mxu0 0.0
    %1151 = vmatpush.msra.mxu0 0.0
    %1152 = vmatpush.msra.mxu0 0.0
    %1153 = vmatpush.msra.mxu0 0.0
    %1154 = vmatpush.msra.mxu0 0.0
    %1155 = vmatpush.msra.mxu0 0.0
    %1156 = vmatpush.msra.mxu0 0.0
    %1157 = vmatpush.msra.mxu0 0.0
    %1158 = vmatpush.msra.mxu0 0.0
    %1159 = vmatpush.msra.mxu0 0.0
    %1160 = vmatpush.msra.mxu0 0.0
    %1161 = vmatpush.msra.mxu0 0.0
    %1162 = vmatpush.msra.mxu0 0.0
    %1163 = vmatpush.msra.mxu0 %v1143
    %1164 = vmatmul.f32.gmra.mxu0 %v1146
    %v1165 = vpop.f32.mrf.mxu0
    %v1166 = vadd.f32 0.0, %v1165
    %1167 = vdwg.mxu0
    %1168 = vrot.lane.b32.xlu0 %v139, 56
    %v1169 = vpop.permute.xlu0 %1168
    %v1172 = vsel %vm148, %v985, 0
    %1174 = vmatpush.msra.mxu0 0.0
    %1175 = vmatpush.msra.mxu0 0.0
    %1176 = vmatpush.msra.mxu0 0.0
    %1177 = vmatpush.msra.mxu0 0.0
    %1178 = vmatpush.msra.mxu0 0.0
    %1179 = vmatpush.msra.mxu0 0.0
    %1180 = vmatpush.msra.mxu0 0.0
    %1181 = vmatpush.msra.mxu0 0.0
    %1182 = vmatpush.msra.mxu0 0.0
    %1183 = vmatpush.msra.mxu0 0.0
    %1184 = vmatpush.msra.mxu0 0.0
    %1185 = vmatpush.msra.mxu0 0.0
    %1186 = vmatpush.msra.mxu0 0.0
    %1187 = vmatpush.msra.mxu0 0.0
    %1188 = vmatpush.msra.mxu0 0.0
    %1189 = vmatpush.msra.mxu0 %v1169
    %1190 = vmatmul.f32.gmra.mxu0 %v1172
    %v1191 = vpop.f32.mrf.mxu0
    %v1192 = vadd.f32 0.0, %v1191
    %1193 = vdwg.mxu0
    %v1195 = vsel %vm148, %v1010, 0
    %v1198 = vsel %vm148, %v1036, 0
    %v1201 = vsel %vm148, %v1062, 0
    %v1204 = vsel %vm148, %v1088, 0
    %v1207 = vsel %vm148, %v1114, 0
    %v1210 = vsel %vm148, %v1140, 0
    %v1213 = vsel %vm148, %v1166, 0
    %v1216 = vsel %vm148, %v1192, 0
    %1218 = vmatpush.msra.mxu0 0.0
    %1219 = vmatpush.msra.mxu0 0.0
    %1220 = vmatpush.msra.mxu0 0.0
    %1221 = vmatpush.msra.mxu0 0.0
    %1222 = vmatpush.msra.mxu0 0.0
    %1223 = vmatpush.msra.mxu0 0.0
    %1224 = vmatpush.msra.mxu0 0.0
    %1225 = vmatpush.msra.mxu0 0.0
    %1226 = vmatpush.msra.mxu0 0.0
    %1227 = vmatpush.msra.mxu0 0.0
    %1228 = vmatpush.msra.mxu0 0.0
    %1229 = vmatpush.msra.mxu0 0.0
    %1230 = vmatpush.msra.mxu0 0.0
    %1231 = vmatpush.msra.mxu0 0.0
    %1232 = vmatpush.msra.mxu0 0.0
    %1233 = vmatpush.msra.mxu0 %v142
    %1234 = vmatmul.f32.gmra.mxu0 %v1195
    %v1235 = vpop.f32.mrf.mxu0
    %v1236 = vadd.f32 0.0, %v1235
    %1237 = vmatmul.f32.gmra.mxu0 %v1198
    %v1238 = vpop.f32.mrf.mxu0
    %v1239 = vadd.f32 0.0, %v1238
    %1240 = vmatmul.f32.gmra.mxu0 %v1201
    %v1241 = vpop.f32.mrf.mxu0
    %v1242 = vadd.f32 0.0, %v1241
    %1243 = vmatmul.f32.gmra.mxu0 %v1204
    %v1244 = vpop.f32.mrf.mxu0
    %v1245 = vadd.f32 0.0, %v1244
    %1246 = vmatmul.f32.gmra.mxu0 %v1207
    %v1247 = vpop.f32.mrf.mxu0
    %v1248 = vadd.f32 0.0, %v1247
    %1249 = vmatmul.f32.gmra.mxu0 %v1210
    %v1250 = vpop.f32.mrf.mxu0
    %v1251 = vadd.f32 0.0, %v1250
    %1252 = vmatmul.f32.gmra.mxu0 %v1213
    %v1253 = vpop.f32.mrf.mxu0
    %v1254 = vadd.f32 0.0, %v1253
    %1255 = vmatmul.f32.gmra.mxu0 %v1216
    %v1256 = vpop.f32.mrf.mxu0
    %v1257 = vadd.f32 0.0, %v1256
    %1258 = vdwg.mxu0
    %v1260 = vsel %vm148, %v482, 0
    %v1263 = vsel %vm148, %v508, 0
    %v1266 = vsel %vm148, %v534, 0
    %v1269 = vsel %vm148, %v560, 0
    %v1272 = vsel %vm148, %v586, 0
    %v1275 = vsel %vm148, %v612, 0
    %v1278 = vsel %vm148, %v638, 0
    %v1281 = vsel %vm148, %v664, 0
    %1283 = vmatpush.msra.mxu0 0.0
    %1284 = vmatpush.msra.mxu0 0.0
    %1285 = vmatpush.msra.mxu0 0.0
    %1286 = vmatpush.msra.mxu0 0.0
    %1287 = vmatpush.msra.mxu0 0.0
    %1288 = vmatpush.msra.mxu0 0.0
    %1289 = vmatpush.msra.mxu0 0.0
    %1290 = vmatpush.msra.mxu0 0.0
    %1291 = vmatpush.msra.mxu0 0.0
    %1292 = vmatpush.msra.mxu0 0.0
    %1293 = vmatpush.msra.mxu0 0.0
    %1294 = vmatpush.msra.mxu0 0.0
    %1295 = vmatpush.msra.mxu0 0.0
    %1296 = vmatpush.msra.mxu0 0.0
    %1297 = vmatpush.msra.mxu0 0.0
    %1298 = vmatpush.msra.mxu0 %v141
    %1299 = vmatmul.f32.gmra.mxu0 %v1260
    %v1300 = vpop.f32.mrf.mxu0
    %v1301 = vadd.f32 %v1236, %v1300
    %1302 = vmatmul.f32.gmra.mxu0 %v1263
    %v1303 = vpop.f32.mrf.mxu0
    %v1304 = vadd.f32 %v1239, %v1303
    %1305 = vmatmul.f32.gmra.mxu0 %v1266
    %v1306 = vpop.f32.mrf.mxu0
    %v1307 = vadd.f32 %v1242, %v1306
    %1308 = vmatmul.f32.gmra.mxu0 %v1269
    %v1309 = vpop.f32.mrf.mxu0
    %v1310 = vadd.f32 %v1245, %v1309
    %1311 = vmatmul.f32.gmra.mxu0 %v1272
    %v1312 = vpop.f32.mrf.mxu0
    %v1313 = vadd.f32 %v1248, %v1312
    %1314 = vmatmul.f32.gmra.mxu0 %v1275
    %v1315 = vpop.f32.mrf.mxu0
    %v1316 = vadd.f32 %v1251, %v1315
    %1317 = vmatmul.f32.gmra.mxu0 %v1278
    %v1318 = vpop.f32.mrf.mxu0
    %v1319 = vadd.f32 %v1254, %v1318
    %1320 = vmatmul.f32.gmra.mxu0 %v1281
    %v1321 = vpop.f32.mrf.mxu0
    %v1322 = vadd.f32 %v1257, %v1321
    %1323 = vdwg.mxu0
    %1324 = vrot.lane.b32.xlu0 %v118, 112
    %v1325 = vpop.permute.xlu0 %1324
    %1326 = vrot.lane.b32.xlu0 %v118, 80
    %v1327 = vpop.permute.xlu0 %1326
    %v1328 = vsel %vm148, %v1325, 0
    %v1330 = vsel %vm148, %v1327, 0
    %1332 = vmatpush.xpose.msra.mxu0 0.0
    %1333 = vmatpush.xpose.msra.mxu0 0.0
    %1334 = vmatpush.xpose.msra.mxu0 0.0
    %1335 = vmatpush.xpose.msra.mxu0 0.0
    %1336 = vmatpush.xpose.msra.mxu0 0.0
    %1337 = vmatpush.xpose.msra.mxu0 0.0
    %1338 = vmatpush.xpose.msra.mxu0 0.0
    %1339 = vmatpush.xpose.msra.mxu0 0.0
    %1340 = vmatpush.xpose.msra.mxu0 0.0
    %1341 = vmatpush.xpose.msra.mxu0 0.0
    %1342 = vmatpush.xpose.msra.mxu0 0.0
    %1343 = vmatpush.xpose.msra.mxu0 0.0
    %1344 = vmatpush.xpose.msra.mxu0 0.0
    %1345 = vmatpush.xpose.msra.mxu0 0.0
    %1346 = vmatpush.xpose.msra.mxu0 0.0
    %1347 = vmatpush.xpose.msra.mxu0 %v1330
    %1348 = vmatmul.f32.gmra.mxu0 %v1328
    %v1349 = vpop.f32.mrf.mxu0
    %v1350 = vadd.f32 0.0, %v1349
    %1351 = vdwg.mxu0
    %1352 = vrot.lane.b32.xlu0 %v121, 112
    %v1353 = vpop.permute.xlu0 %1352
    %1354 = vrot.lane.b32.xlu0 %v121, 80
    %v1355 = vpop.permute.xlu0 %1354
    %v1356 = vsel %vm148, %v1353, 0
    %v1358 = vsel %vm148, %v1355, 0
    %1360 = vmatpush.xpose.msra.mxu0 0.0
    %1361 = vmatpush.xpose.msra.mxu0 0.0
    %1362 = vmatpush.xpose.msra.mxu0 0.0
    %1363 = vmatpush.xpose.msra.mxu0 0.0
    %1364 = vmatpush.xpose.msra.mxu0 0.0
    %1365 = vmatpush.xpose.msra.mxu0 0.0
    %1366 = vmatpush.xpose.msra.mxu0 0.0
    %1367 = vmatpush.xpose.msra.mxu0 0.0
    %1368 = vmatpush.xpose.msra.mxu0 0.0
    %1369 = vmatpush.xpose.msra.mxu0 0.0
    %1370 = vmatpush.xpose.msra.mxu0 0.0
    %1371 = vmatpush.xpose.msra.mxu0 0.0
    %1372 = vmatpush.xpose.msra.mxu0 0.0
    %1373 = vmatpush.xpose.msra.mxu0 0.0
    %1374 = vmatpush.xpose.msra.mxu0 0.0
    %1375 = vmatpush.xpose.msra.mxu0 %v1358
    %1376 = vmatmul.f32.gmra.mxu0 %v1356
    %v1377 = vpop.f32.mrf.mxu0
    %v1378 = vadd.f32 0.0, %v1377
    %1379 = vdwg.mxu0
    %1380 = vrot.lane.b32.xlu0 %v124, 112
    %v1381 = vpop.permute.xlu0 %1380
    %1382 = vrot.lane.b32.xlu0 %v124, 80
    %v1383 = vpop.permute.xlu0 %1382
    %v1384 = vsel %vm148, %v1381, 0
    %v1386 = vsel %vm148, %v1383, 0
    %1388 = vmatpush.xpose.msra.mxu0 0.0
    %1389 = vmatpush.xpose.msra.mxu0 0.0
    %1390 = vmatpush.xpose.msra.mxu0 0.0
    %1391 = vmatpush.xpose.msra.mxu0 0.0
    %1392 = vmatpush.xpose.msra.mxu0 0.0
    %1393 = vmatpush.xpose.msra.mxu0 0.0
    %1394 = vmatpush.xpose.msra.mxu0 0.0
    %1395 = vmatpush.xpose.msra.mxu0 0.0
    %1396 = vmatpush.xpose.msra.mxu0 0.0
    %1397 = vmatpush.xpose.msra.mxu0 0.0
    %1398 = vmatpush.xpose.msra.mxu0 0.0
    %1399 = vmatpush.xpose.msra.mxu0 0.0
    %1400 = vmatpush.xpose.msra.mxu0 0.0
    %1401 = vmatpush.xpose.msra.mxu0 0.0
    %1402 = vmatpush.xpose.msra.mxu0 0.0
    %1403 = vmatpush.xpose.msra.mxu0 %v1386
    %1404 = vmatmul.f32.gmra.mxu0 %v1384
    %v1405 = vpop.f32.mrf.mxu0
    %v1406 = vadd.f32 0.0, %v1405
    %1407 = vdwg.mxu0
    %1408 = vrot.lane.b32.xlu0 %v127, 112
    %v1409 = vpop.permute.xlu0 %1408
    %1410 = vrot.lane.b32.xlu0 %v127, 80
    %v1411 = vpop.permute.xlu0 %1410
    %v1412 = vsel %vm148, %v1409, 0
    %v1414 = vsel %vm148, %v1411, 0
    %1416 = vmatpush.xpose.msra.mxu0 0.0
    %1417 = vmatpush.xpose.msra.mxu0 0.0
    %1418 = vmatpush.xpose.msra.mxu0 0.0
    %1419 = vmatpush.xpose.msra.mxu0 0.0
    %1420 = vmatpush.xpose.msra.mxu0 0.0
    %1421 = vmatpush.xpose.msra.mxu0 0.0
    %1422 = vmatpush.xpose.msra.mxu0 0.0
    %1423 = vmatpush.xpose.msra.mxu0 0.0
    %1424 = vmatpush.xpose.msra.mxu0 0.0
    %1425 = vmatpush.xpose.msra.mxu0 0.0
    %1426 = vmatpush.xpose.msra.mxu0 0.0
    %1427 = vmatpush.xpose.msra.mxu0 0.0
    %1428 = vmatpush.xpose.msra.mxu0 0.0
    %1429 = vmatpush.xpose.msra.mxu0 0.0
    %1430 = vmatpush.xpose.msra.mxu0 0.0
    %1431 = vmatpush.xpose.msra.mxu0 %v1414
    %1432 = vmatmul.f32.gmra.mxu0 %v1412
    %v1433 = vpop.f32.mrf.mxu0
    %v1434 = vadd.f32 0.0, %v1433
    %1435 = vdwg.mxu0
    %1436 = vrot.lane.b32.xlu0 %v130, 112
    %v1437 = vpop.permute.xlu0 %1436
    %1438 = vrot.lane.b32.xlu0 %v130, 80
    %v1439 = vpop.permute.xlu0 %1438
    %v1440 = vsel %vm148, %v1437, 0
    %v1442 = vsel %vm148, %v1439, 0
    %1444 = vmatpush.xpose.msra.mxu0 0.0
    %1445 = vmatpush.xpose.msra.mxu0 0.0
    %1446 = vmatpush.xpose.msra.mxu0 0.0
    %1447 = vmatpush.xpose.msra.mxu0 0.0
    %1448 = vmatpush.xpose.msra.mxu0 0.0
    %1449 = vmatpush.xpose.msra.mxu0 0.0
    %1450 = vmatpush.xpose.msra.mxu0 0.0
    %1451 = vmatpush.xpose.msra.mxu0 0.0
    %1452 = vmatpush.xpose.msra.mxu0 0.0
    %1453 = vmatpush.xpose.msra.mxu0 0.0
    %1454 = vmatpush.xpose.msra.mxu0 0.0
    %1455 = vmatpush.xpose.msra.mxu0 0.0
    %1456 = vmatpush.xpose.msra.mxu0 0.0
    %1457 = vmatpush.xpose.msra.mxu0 0.0
    %1458 = vmatpush.xpose.msra.mxu0 0.0
    %1459 = vmatpush.xpose.msra.mxu0 %v1442
    %1460 = vmatmul.f32.gmra.mxu0 %v1440
    %v1461 = vpop.f32.mrf.mxu0
    %v1462 = vadd.f32 0.0, %v1461
    %1463 = vdwg.mxu0
    %1464 = vrot.lane.b32.xlu0 %v133, 112
    %v1465 = vpop.permute.xlu0 %1464
    %1466 = vrot.lane.b32.xlu0 %v133, 80
    %v1467 = vpop.permute.xlu0 %1466
    %v1468 = vsel %vm148, %v1465, 0
    %v1470 = vsel %vm148, %v1467, 0
    %1472 = vmatpush.xpose.msra.mxu0 0.0
    %1473 = vmatpush.xpose.msra.mxu0 0.0
    %1474 = vmatpush.xpose.msra.mxu0 0.0
    %1475 = vmatpush.xpose.msra.mxu0 0.0
    %1476 = vmatpush.xpose.msra.mxu0 0.0
    %1477 = vmatpush.xpose.msra.mxu0 0.0
    %1478 = vmatpush.xpose.msra.mxu0 0.0
    %1479 = vmatpush.xpose.msra.mxu0 0.0
    %1480 = vmatpush.xpose.msra.mxu0 0.0
    %1481 = vmatpush.xpose.msra.mxu0 0.0
    %1482 = vmatpush.xpose.msra.mxu0 0.0
    %1483 = vmatpush.xpose.msra.mxu0 0.0
    %1484 = vmatpush.xpose.msra.mxu0 0.0
    %1485 = vmatpush.xpose.msra.mxu0 0.0
    %1486 = vmatpush.xpose.msra.mxu0 0.0
    %1487 = vmatpush.xpose.msra.mxu0 %v1470
    %1488 = vmatmul.f32.gmra.mxu0 %v1468
    %v1489 = vpop.f32.mrf.mxu0
    %v1490 = vadd.f32 0.0, %v1489
    %1491 = vdwg.mxu0
    %1492 = vrot.lane.b32.xlu0 %v136, 112
    %v1493 = vpop.permute.xlu0 %1492
    %1494 = vrot.lane.b32.xlu0 %v136, 80
    %v1495 = vpop.permute.xlu0 %1494
    %v1496 = vsel %vm148, %v1493, 0
    %v1498 = vsel %vm148, %v1495, 0
    %1500 = vmatpush.xpose.msra.mxu0 0.0
    %1501 = vmatpush.xpose.msra.mxu0 0.0
    %1502 = vmatpush.xpose.msra.mxu0 0.0
    %1503 = vmatpush.xpose.msra.mxu0 0.0
    %1504 = vmatpush.xpose.msra.mxu0 0.0
    %1505 = vmatpush.xpose.msra.mxu0 0.0
    %1506 = vmatpush.xpose.msra.mxu0 0.0
    %1507 = vmatpush.xpose.msra.mxu0 0.0
    %1508 = vmatpush.xpose.msra.mxu0 0.0
    %1509 = vmatpush.xpose.msra.mxu0 0.0
    %1510 = vmatpush.xpose.msra.mxu0 0.0
    %1511 = vmatpush.xpose.msra.mxu0 0.0
    %1512 = vmatpush.xpose.msra.mxu0 0.0
    %1513 = vmatpush.xpose.msra.mxu0 0.0
    %1514 = vmatpush.xpose.msra.mxu0 0.0
    %1515 = vmatpush.xpose.msra.mxu0 %v1498
    %1516 = vmatmul.f32.gmra.mxu0 %v1496
    %v1517 = vpop.f32.mrf.mxu0
    %v1518 = vadd.f32 0.0, %v1517
    %1519 = vdwg.mxu0
    %1520 = vrot.lane.b32.xlu0 %v139, 112
    %v1521 = vpop.permute.xlu0 %1520
    %1522 = vrot.lane.b32.xlu0 %v139, 80
    %v1523 = vpop.permute.xlu0 %1522
    %v1524 = vsel %vm148, %v1521, 0
    %v1526 = vsel %vm148, %v1523, 0
    %1528 = vmatpush.xpose.msra.mxu0 0.0
    %1529 = vmatpush.xpose.msra.mxu0 0.0
    %1530 = vmatpush.xpose.msra.mxu0 0.0
    %1531 = vmatpush.xpose.msra.mxu0 0.0
    %1532 = vmatpush.xpose.msra.mxu0 0.0
    %1533 = vmatpush.xpose.msra.mxu0 0.0
    %1534 = vmatpush.xpose.msra.mxu0 0.0
    %1535 = vmatpush.xpose.msra.mxu0 0.0
    %1536 = vmatpush.xpose.msra.mxu0 0.0
    %1537 = vmatpush.xpose.msra.mxu0 0.0
    %1538 = vmatpush.xpose.msra.mxu0 0.0
    %1539 = vmatpush.xpose.msra.mxu0 0.0
    %1540 = vmatpush.xpose.msra.mxu0 0.0
    %1541 = vmatpush.xpose.msra.mxu0 0.0
    %1542 = vmatpush.xpose.msra.mxu0 0.0
    %1543 = vmatpush.xpose.msra.mxu0 %v1526
    %1544 = vmatmul.f32.gmra.mxu0 %v1524
    %v1545 = vpop.f32.mrf.mxu0
    %v1546 = vadd.f32 0.0, %v1545
    %1547 = vdwg.mxu0
    %v1548 = vmul.f32 %v1350, 0.35355338
    %v1549 = vmul.f32 %v1378, 0.35355338
    %v1550 = vmul.f32 %v1406, 0.35355338
    %v1551 = vmul.f32 %v1434, 0.35355338
    %v1552 = vmul.f32 %v1462, 0.35355338
    %v1553 = vmul.f32 %v1490, 0.35355338
    %v1554 = vmul.f32 %v1518, 0.35355338
    %v1555 = vmul.f32 %v1546, 0.35355338
    %v1556 = vsel %vm148, %v1548, -inf
    %1557 = vmax.xlane.f32.xlu0 %v1556
    %v1558 = vpop.xlane.xlu0 %1557
    %v1559 = vsel %vm148, %v1549, -inf
    %1560 = vmax.xlane.f32.xlu0 %v1559
    %v1561 = vpop.xlane.xlu0 %1560
    %v1562 = vsel %vm148, %v1550, -inf
    %1563 = vmax.xlane.f32.xlu0 %v1562
    %v1564 = vpop.xlane.xlu0 %1563
    %v1565 = vsel %vm148, %v1551, -inf
    %1566 = vmax.xlane.f32.xlu0 %v1565
    %v1567 = vpop.xlane.xlu0 %1566
    %v1568 = vsel %vm148, %v1552, -inf
    %1569 = vmax.xlane.f32.xlu0 %v1568
    %v1570 = vpop.xlane.xlu0 %1569
    %v1571 = vsel %vm148, %v1553, -inf
    %1572 = vmax.xlane.f32.xlu0 %v1571
    %v1573 = vpop.xlane.xlu0 %1572
    %v1574 = vsel %vm148, %v1554, -inf
    %1575 = vmax.xlane.f32.xlu0 %v1574
    %v1576 = vpop.xlane.xlu0 %1575
    %v1577 = vsel %vm148, %v1555, -inf
    %1578 = vmax.xlane.f32.xlu0 %v1577
    %v1579 = vpop.xlane.xlu0 %1578
    %v1580 = vsub.f32 %v1548, %v1558
    %v1581 = vsub.f32 %v1549, %v1561
    %v1582 = vsub.f32 %v1550, %v1564
    %v1583 = vsub.f32 %v1551, %v1567
    %v1584 = vsub.f32 %v1552, %v1570
    %v1585 = vsub.f32 %v1553, %v1573
    %v1586 = vsub.f32 %v1554, %v1576
    %v1587 = vsub.f32 %v1555, %v1579
    %v1588 = vmul.f32 %v1580, 1.442695
    %v1589 = vpow.pop %v1588
    %v1590 = vmul.f32 %v1581, 1.442695
    %v1591 = vpow.pop %v1590
    %v1592 = vmul.f32 %v1582, 1.442695
    %v1593 = vpow.pop %v1592
    %v1594 = vmul.f32 %v1583, 1.442695
    %v1595 = vpow.pop %v1594
    %v1596 = vmul.f32 %v1584, 1.442695
    %v1597 = vpow.pop %v1596
    %v1598 = vmul.f32 %v1585, 1.442695
    %v1599 = vpow.pop %v1598
    %v1600 = vmul.f32 %v1586, 1.442695
    %v1601 = vpow.pop %v1600
    %v1602 = vmul.f32 %v1587, 1.442695
    %v1603 = vpow.pop %v1602
    %v1604 = vsel %vm148, %v1589, 0.0
    %1605 = vadd.xlane.f32.xlu0 %v1604
    %v1606 = vpop.xlane.xlu0 %1605
    %v1607 = vsel %vm148, %v1591, 0.0
    %1608 = vadd.xlane.f32.xlu0 %v1607
    %v1609 = vpop.xlane.xlu0 %1608
    %v1610 = vsel %vm148, %v1593, 0.0
    %1611 = vadd.xlane.f32.xlu0 %v1610
    %v1612 = vpop.xlane.xlu0 %1611
    %v1613 = vsel %vm148, %v1595, 0.0
    %1614 = vadd.xlane.f32.xlu0 %v1613
    %v1615 = vpop.xlane.xlu0 %1614
    %v1616 = vsel %vm148, %v1597, 0.0
    %1617 = vadd.xlane.f32.xlu0 %v1616
    %v1618 = vpop.xlane.xlu0 %1617
    %v1619 = vsel %vm148, %v1599, 0.0
    %1620 = vadd.xlane.f32.xlu0 %v1619
    %v1621 = vpop.xlane.xlu0 %1620
    %v1622 = vsel %vm148, %v1601, 0.0
    %1623 = vadd.xlane.f32.xlu0 %v1622
    %v1624 = vpop.xlane.xlu0 %1623
    %v1625 = vsel %vm148, %v1603, 0.0
    %1626 = vadd.xlane.f32.xlu0 %v1625
    %v1627 = vpop.xlane.xlu0 %1626
    %v1628 = vrcp.pop %v1606
    %v1629 = vrcp.pop %v1609
    %v1630 = vrcp.pop %v1612
    %v1631 = vrcp.pop %v1615
    %v1632 = vrcp.pop %v1618
    %v1633 = vrcp.pop %v1621
    %v1634 = vrcp.pop %v1624
    %v1635 = vrcp.pop %v1627
    %v1636 = vmul.f32 %v1589, %v1628
    %v1637 = vmul.f32 %v1591, %v1629
    %v1638 = vmul.f32 %v1593, %v1630
    %v1639 = vmul.f32 %v1595, %v1631
    %v1640 = vmul.f32 %v1597, %v1632
    %v1641 = vmul.f32 %v1599, %v1633
    %v1642 = vmul.f32 %v1601, %v1634
    %v1643 = vmul.f32 %v1603, %v1635
    %1644 = vrot.lane.b32.xlu0 %v118, 48
    %v1645 = vpop.permute.xlu0 %1644
    %v1648 = vsel %vm148, %v1636, 0
    %1650 = vmatpush.msra.mxu0 0.0
    %1651 = vmatpush.msra.mxu0 0.0
    %1652 = vmatpush.msra.mxu0 0.0
    %1653 = vmatpush.msra.mxu0 0.0
    %1654 = vmatpush.msra.mxu0 0.0
    %1655 = vmatpush.msra.mxu0 0.0
    %1656 = vmatpush.msra.mxu0 0.0
    %1657 = vmatpush.msra.mxu0 0.0
    %1658 = vmatpush.msra.mxu0 0.0
    %1659 = vmatpush.msra.mxu0 0.0
    %1660 = vmatpush.msra.mxu0 0.0
    %1661 = vmatpush.msra.mxu0 0.0
    %1662 = vmatpush.msra.mxu0 0.0
    %1663 = vmatpush.msra.mxu0 0.0
    %1664 = vmatpush.msra.mxu0 0.0
    %1665 = vmatpush.msra.mxu0 %v1645
    %1666 = vmatmul.f32.gmra.mxu0 %v1648
    %v1667 = vpop.f32.mrf.mxu0
    %v1668 = vadd.f32 0.0, %v1667
    %1669 = vdwg.mxu0
    %1670 = vrot.lane.b32.xlu0 %v121, 48
    %v1671 = vpop.permute.xlu0 %1670
    %v1674 = vsel %vm148, %v1637, 0
    %1676 = vmatpush.msra.mxu0 0.0
    %1677 = vmatpush.msra.mxu0 0.0
    %1678 = vmatpush.msra.mxu0 0.0
    %1679 = vmatpush.msra.mxu0 0.0
    %1680 = vmatpush.msra.mxu0 0.0
    %1681 = vmatpush.msra.mxu0 0.0
    %1682 = vmatpush.msra.mxu0 0.0
    %1683 = vmatpush.msra.mxu0 0.0
    %1684 = vmatpush.msra.mxu0 0.0
    %1685 = vmatpush.msra.mxu0 0.0
    %1686 = vmatpush.msra.mxu0 0.0
    %1687 = vmatpush.msra.mxu0 0.0
    %1688 = vmatpush.msra.mxu0 0.0
    %1689 = vmatpush.msra.mxu0 0.0
    %1690 = vmatpush.msra.mxu0 0.0
    %1691 = vmatpush.msra.mxu0 %v1671
    %1692 = vmatmul.f32.gmra.mxu0 %v1674
    %v1693 = vpop.f32.mrf.mxu0
    %v1694 = vadd.f32 0.0, %v1693
    %1695 = vdwg.mxu0
    %1696 = vrot.lane.b32.xlu0 %v124, 48
    %v1697 = vpop.permute.xlu0 %1696
    %v1700 = vsel %vm148, %v1638, 0
    %1702 = vmatpush.msra.mxu0 0.0
    %1703 = vmatpush.msra.mxu0 0.0
    %1704 = vmatpush.msra.mxu0 0.0
    %1705 = vmatpush.msra.mxu0 0.0
    %1706 = vmatpush.msra.mxu0 0.0
    %1707 = vmatpush.msra.mxu0 0.0
    %1708 = vmatpush.msra.mxu0 0.0
    %1709 = vmatpush.msra.mxu0 0.0
    %1710 = vmatpush.msra.mxu0 0.0
    %1711 = vmatpush.msra.mxu0 0.0
    %1712 = vmatpush.msra.mxu0 0.0
    %1713 = vmatpush.msra.mxu0 0.0
    %1714 = vmatpush.msra.mxu0 0.0
    %1715 = vmatpush.msra.mxu0 0.0
    %1716 = vmatpush.msra.mxu0 0.0
    %1717 = vmatpush.msra.mxu0 %v1697
    %1718 = vmatmul.f32.gmra.mxu0 %v1700
    %v1719 = vpop.f32.mrf.mxu0
    %v1720 = vadd.f32 0.0, %v1719
    %1721 = vdwg.mxu0
    %1722 = vrot.lane.b32.xlu0 %v127, 48
    %v1723 = vpop.permute.xlu0 %1722
    %v1726 = vsel %vm148, %v1639, 0
    %1728 = vmatpush.msra.mxu0 0.0
    %1729 = vmatpush.msra.mxu0 0.0
    %1730 = vmatpush.msra.mxu0 0.0
    %1731 = vmatpush.msra.mxu0 0.0
    %1732 = vmatpush.msra.mxu0 0.0
    %1733 = vmatpush.msra.mxu0 0.0
    %1734 = vmatpush.msra.mxu0 0.0
    %1735 = vmatpush.msra.mxu0 0.0
    %1736 = vmatpush.msra.mxu0 0.0
    %1737 = vmatpush.msra.mxu0 0.0
    %1738 = vmatpush.msra.mxu0 0.0
    %1739 = vmatpush.msra.mxu0 0.0
    %1740 = vmatpush.msra.mxu0 0.0
    %1741 = vmatpush.msra.mxu0 0.0
    %1742 = vmatpush.msra.mxu0 0.0
    %1743 = vmatpush.msra.mxu0 %v1723
    %1744 = vmatmul.f32.gmra.mxu0 %v1726
    %v1745 = vpop.f32.mrf.mxu0
    %v1746 = vadd.f32 0.0, %v1745
    %1747 = vdwg.mxu0
    %1748 = vrot.lane.b32.xlu0 %v130, 48
    %v1749 = vpop.permute.xlu0 %1748
    %v1752 = vsel %vm148, %v1640, 0
    %1754 = vmatpush.msra.mxu0 0.0
    %1755 = vmatpush.msra.mxu0 0.0
    %1756 = vmatpush.msra.mxu0 0.0
    %1757 = vmatpush.msra.mxu0 0.0
    %1758 = vmatpush.msra.mxu0 0.0
    %1759 = vmatpush.msra.mxu0 0.0
    %1760 = vmatpush.msra.mxu0 0.0
    %1761 = vmatpush.msra.mxu0 0.0
    %1762 = vmatpush.msra.mxu0 0.0
    %1763 = vmatpush.msra.mxu0 0.0
    %1764 = vmatpush.msra.mxu0 0.0
    %1765 = vmatpush.msra.mxu0 0.0
    %1766 = vmatpush.msra.mxu0 0.0
    %1767 = vmatpush.msra.mxu0 0.0
    %1768 = vmatpush.msra.mxu0 0.0
    %1769 = vmatpush.msra.mxu0 %v1749
    %1770 = vmatmul.f32.gmra.mxu0 %v1752
    %v1771 = vpop.f32.mrf.mxu0
    %v1772 = vadd.f32 0.0, %v1771
    %1773 = vdwg.mxu0
    %1774 = vrot.lane.b32.xlu0 %v133, 48
    %v1775 = vpop.permute.xlu0 %1774
    %v1778 = vsel %vm148, %v1641, 0
    %1780 = vmatpush.msra.mxu0 0.0
    %1781 = vmatpush.msra.mxu0 0.0
    %1782 = vmatpush.msra.mxu0 0.0
    %1783 = vmatpush.msra.mxu0 0.0
    %1784 = vmatpush.msra.mxu0 0.0
    %1785 = vmatpush.msra.mxu0 0.0
    %1786 = vmatpush.msra.mxu0 0.0
    %1787 = vmatpush.msra.mxu0 0.0
    %1788 = vmatpush.msra.mxu0 0.0
    %1789 = vmatpush.msra.mxu0 0.0
    %1790 = vmatpush.msra.mxu0 0.0
    %1791 = vmatpush.msra.mxu0 0.0
    %1792 = vmatpush.msra.mxu0 0.0
    %1793 = vmatpush.msra.mxu0 0.0
    %1794 = vmatpush.msra.mxu0 0.0
    %1795 = vmatpush.msra.mxu0 %v1775
    %1796 = vmatmul.f32.gmra.mxu0 %v1778
    %v1797 = vpop.f32.mrf.mxu0
    %v1798 = vadd.f32 0.0, %v1797
    %1799 = vdwg.mxu0
    %1800 = vrot.lane.b32.xlu0 %v136, 48
    %v1801 = vpop.permute.xlu0 %1800
    %v1804 = vsel %vm148, %v1642, 0
    %1806 = vmatpush.msra.mxu0 0.0
    %1807 = vmatpush.msra.mxu0 0.0
    %1808 = vmatpush.msra.mxu0 0.0
    %1809 = vmatpush.msra.mxu0 0.0
    %1810 = vmatpush.msra.mxu0 0.0
    %1811 = vmatpush.msra.mxu0 0.0
    %1812 = vmatpush.msra.mxu0 0.0
    %1813 = vmatpush.msra.mxu0 0.0
    %1814 = vmatpush.msra.mxu0 0.0
    %1815 = vmatpush.msra.mxu0 0.0
    %1816 = vmatpush.msra.mxu0 0.0
    %1817 = vmatpush.msra.mxu0 0.0
    %1818 = vmatpush.msra.mxu0 0.0
    %1819 = vmatpush.msra.mxu0 0.0
    %1820 = vmatpush.msra.mxu0 0.0
    %1821 = vmatpush.msra.mxu0 %v1801
    %1822 = vmatmul.f32.gmra.mxu0 %v1804
    %v1823 = vpop.f32.mrf.mxu0
    %v1824 = vadd.f32 0.0, %v1823
    %1825 = vdwg.mxu0
    %1826 = vrot.lane.b32.xlu0 %v139, 48
    %v1827 = vpop.permute.xlu0 %1826
    %v1830 = vsel %vm148, %v1643, 0
    %1832 = vmatpush.msra.mxu0 0.0
    %1833 = vmatpush.msra.mxu0 0.0
    %1834 = vmatpush.msra.mxu0 0.0
    %1835 = vmatpush.msra.mxu0 0.0
    %1836 = vmatpush.msra.mxu0 0.0
    %1837 = vmatpush.msra.mxu0 0.0
    %1838 = vmatpush.msra.mxu0 0.0
    %1839 = vmatpush.msra.mxu0 0.0
    %1840 = vmatpush.msra.mxu0 0.0
    %1841 = vmatpush.msra.mxu0 0.0
    %1842 = vmatpush.msra.mxu0 0.0
    %1843 = vmatpush.msra.mxu0 0.0
    %1844 = vmatpush.msra.mxu0 0.0
    %1845 = vmatpush.msra.mxu0 0.0
    %1846 = vmatpush.msra.mxu0 0.0
    %1847 = vmatpush.msra.mxu0 %v1827
    %1848 = vmatmul.f32.gmra.mxu0 %v1830
    %v1849 = vpop.f32.mrf.mxu0
    %v1850 = vadd.f32 0.0, %v1849
    %1851 = vdwg.mxu0
    %v1853 = vsel %vm148, %v1668, 0
    %v1856 = vsel %vm148, %v1694, 0
    %v1859 = vsel %vm148, %v1720, 0
    %v1862 = vsel %vm148, %v1746, 0
    %v1865 = vsel %vm148, %v1772, 0
    %v1868 = vsel %vm148, %v1798, 0
    %v1871 = vsel %vm148, %v1824, 0
    %v1874 = vsel %vm148, %v1850, 0
    %1876 = vmatpush.msra.mxu0 0.0
    %1877 = vmatpush.msra.mxu0 0.0
    %1878 = vmatpush.msra.mxu0 0.0
    %1879 = vmatpush.msra.mxu0 0.0
    %1880 = vmatpush.msra.mxu0 0.0
    %1881 = vmatpush.msra.mxu0 0.0
    %1882 = vmatpush.msra.mxu0 0.0
    %1883 = vmatpush.msra.mxu0 0.0
    %1884 = vmatpush.msra.mxu0 0.0
    %1885 = vmatpush.msra.mxu0 0.0
    %1886 = vmatpush.msra.mxu0 0.0
    %1887 = vmatpush.msra.mxu0 0.0
    %1888 = vmatpush.msra.mxu0 0.0
    %1889 = vmatpush.msra.mxu0 0.0
    %1890 = vmatpush.msra.mxu0 0.0
    %1891 = vmatpush.msra.mxu0 %v143
    %1892 = vmatmul.f32.gmra.mxu0 %v1853
    %v1893 = vpop.f32.mrf.mxu0
    %v1894 = vadd.f32 0.0, %v1893
    %1895 = vmatmul.f32.gmra.mxu0 %v1856
    %v1896 = vpop.f32.mrf.mxu0
    %v1897 = vadd.f32 0.0, %v1896
    %1898 = vmatmul.f32.gmra.mxu0 %v1859
    %v1899 = vpop.f32.mrf.mxu0
    %v1900 = vadd.f32 0.0, %v1899
    %1901 = vmatmul.f32.gmra.mxu0 %v1862
    %v1902 = vpop.f32.mrf.mxu0
    %v1903 = vadd.f32 0.0, %v1902
    %1904 = vmatmul.f32.gmra.mxu0 %v1865
    %v1905 = vpop.f32.mrf.mxu0
    %v1906 = vadd.f32 0.0, %v1905
    %1907 = vmatmul.f32.gmra.mxu0 %v1868
    %v1908 = vpop.f32.mrf.mxu0
    %v1909 = vadd.f32 0.0, %v1908
    %1910 = vmatmul.f32.gmra.mxu0 %v1871
    %v1911 = vpop.f32.mrf.mxu0
    %v1912 = vadd.f32 0.0, %v1911
    %1913 = vmatmul.f32.gmra.mxu0 %v1874
    %v1914 = vpop.f32.mrf.mxu0
    %v1915 = vadd.f32 0.0, %v1914
    %1916 = vdwg.mxu0
    %v1917 = vadd.f32 %v1301, %v1894
    %v1918 = vadd.f32 %v1304, %v1897
    %v1919 = vadd.f32 %v1307, %v1900
    %v1920 = vadd.f32 %v1310, %v1903
    %v1921 = vadd.f32 %v1313, %v1906
    %v1922 = vadd.f32 %v1316, %v1909
    %v1923 = vadd.f32 %v1319, %v1912
    %v1924 = vadd.f32 %v1322, %v1915
    %1925 = vrot.lane.b32.xlu0 %v118, 104
    %v1926 = vpop.permute.xlu0 %1925
    %1927 = vrot.lane.b32.xlu0 %v118, 72
    %v1928 = vpop.permute.xlu0 %1927
    %v1929 = vsel %vm148, %v1926, 0
    %v1931 = vsel %vm148, %v1928, 0
    %1933 = vmatpush.xpose.msra.mxu0 0.0
    %1934 = vmatpush.xpose.msra.mxu0 0.0
    %1935 = vmatpush.xpose.msra.mxu0 0.0
    %1936 = vmatpush.xpose.msra.mxu0 0.0
    %1937 = vmatpush.xpose.msra.mxu0 0.0
    %1938 = vmatpush.xpose.msra.mxu0 0.0
    %1939 = vmatpush.xpose.msra.mxu0 0.0
    %1940 = vmatpush.xpose.msra.mxu0 0.0
    %1941 = vmatpush.xpose.msra.mxu0 0.0
    %1942 = vmatpush.xpose.msra.mxu0 0.0
    %1943 = vmatpush.xpose.msra.mxu0 0.0
    %1944 = vmatpush.xpose.msra.mxu0 0.0
    %1945 = vmatpush.xpose.msra.mxu0 0.0
    %1946 = vmatpush.xpose.msra.mxu0 0.0
    %1947 = vmatpush.xpose.msra.mxu0 0.0
    %1948 = vmatpush.xpose.msra.mxu0 %v1931
    %1949 = vmatmul.f32.gmra.mxu0 %v1929
    %v1950 = vpop.f32.mrf.mxu0
    %v1951 = vadd.f32 0.0, %v1950
    %1952 = vdwg.mxu0
    %1953 = vrot.lane.b32.xlu0 %v121, 104
    %v1954 = vpop.permute.xlu0 %1953
    %1955 = vrot.lane.b32.xlu0 %v121, 72
    %v1956 = vpop.permute.xlu0 %1955
    %v1957 = vsel %vm148, %v1954, 0
    %v1959 = vsel %vm148, %v1956, 0
    %1961 = vmatpush.xpose.msra.mxu0 0.0
    %1962 = vmatpush.xpose.msra.mxu0 0.0
    %1963 = vmatpush.xpose.msra.mxu0 0.0
    %1964 = vmatpush.xpose.msra.mxu0 0.0
    %1965 = vmatpush.xpose.msra.mxu0 0.0
    %1966 = vmatpush.xpose.msra.mxu0 0.0
    %1967 = vmatpush.xpose.msra.mxu0 0.0
    %1968 = vmatpush.xpose.msra.mxu0 0.0
    %1969 = vmatpush.xpose.msra.mxu0 0.0
    %1970 = vmatpush.xpose.msra.mxu0 0.0
    %1971 = vmatpush.xpose.msra.mxu0 0.0
    %1972 = vmatpush.xpose.msra.mxu0 0.0
    %1973 = vmatpush.xpose.msra.mxu0 0.0
    %1974 = vmatpush.xpose.msra.mxu0 0.0
    %1975 = vmatpush.xpose.msra.mxu0 0.0
    %1976 = vmatpush.xpose.msra.mxu0 %v1959
    %1977 = vmatmul.f32.gmra.mxu0 %v1957
    %v1978 = vpop.f32.mrf.mxu0
    %v1979 = vadd.f32 0.0, %v1978
    %1980 = vdwg.mxu0
    %1981 = vrot.lane.b32.xlu0 %v124, 104
    %v1982 = vpop.permute.xlu0 %1981
    %1983 = vrot.lane.b32.xlu0 %v124, 72
    %v1984 = vpop.permute.xlu0 %1983
    %v1985 = vsel %vm148, %v1982, 0
    %v1987 = vsel %vm148, %v1984, 0
    %1989 = vmatpush.xpose.msra.mxu0 0.0
    %1990 = vmatpush.xpose.msra.mxu0 0.0
    %1991 = vmatpush.xpose.msra.mxu0 0.0
    %1992 = vmatpush.xpose.msra.mxu0 0.0
    %1993 = vmatpush.xpose.msra.mxu0 0.0
    %1994 = vmatpush.xpose.msra.mxu0 0.0
    %1995 = vmatpush.xpose.msra.mxu0 0.0
    %1996 = vmatpush.xpose.msra.mxu0 0.0
    %1997 = vmatpush.xpose.msra.mxu0 0.0
    %1998 = vmatpush.xpose.msra.mxu0 0.0
    %1999 = vmatpush.xpose.msra.mxu0 0.0
    %2000 = vmatpush.xpose.msra.mxu0 0.0
    %2001 = vmatpush.xpose.msra.mxu0 0.0
    %2002 = vmatpush.xpose.msra.mxu0 0.0
    %2003 = vmatpush.xpose.msra.mxu0 0.0
    %2004 = vmatpush.xpose.msra.mxu0 %v1987
    %2005 = vmatmul.f32.gmra.mxu0 %v1985
    %v2006 = vpop.f32.mrf.mxu0
    %v2007 = vadd.f32 0.0, %v2006
    %2008 = vdwg.mxu0
    %2009 = vrot.lane.b32.xlu0 %v127, 104
    %v2010 = vpop.permute.xlu0 %2009
    %2011 = vrot.lane.b32.xlu0 %v127, 72
    %v2012 = vpop.permute.xlu0 %2011
    %v2013 = vsel %vm148, %v2010, 0
    %v2015 = vsel %vm148, %v2012, 0
    %2017 = vmatpush.xpose.msra.mxu0 0.0
    %2018 = vmatpush.xpose.msra.mxu0 0.0
    %2019 = vmatpush.xpose.msra.mxu0 0.0
    %2020 = vmatpush.xpose.msra.mxu0 0.0
    %2021 = vmatpush.xpose.msra.mxu0 0.0
    %2022 = vmatpush.xpose.msra.mxu0 0.0
    %2023 = vmatpush.xpose.msra.mxu0 0.0
    %2024 = vmatpush.xpose.msra.mxu0 0.0
    %2025 = vmatpush.xpose.msra.mxu0 0.0
    %2026 = vmatpush.xpose.msra.mxu0 0.0
    %2027 = vmatpush.xpose.msra.mxu0 0.0
    %2028 = vmatpush.xpose.msra.mxu0 0.0
    %2029 = vmatpush.xpose.msra.mxu0 0.0
    %2030 = vmatpush.xpose.msra.mxu0 0.0
    %2031 = vmatpush.xpose.msra.mxu0 0.0
    %2032 = vmatpush.xpose.msra.mxu0 %v2015
    %2033 = vmatmul.f32.gmra.mxu0 %v2013
    %v2034 = vpop.f32.mrf.mxu0
    %v2035 = vadd.f32 0.0, %v2034
    %2036 = vdwg.mxu0
    %2037 = vrot.lane.b32.xlu0 %v130, 104
    %v2038 = vpop.permute.xlu0 %2037
    %2039 = vrot.lane.b32.xlu0 %v130, 72
    %v2040 = vpop.permute.xlu0 %2039
    %v2041 = vsel %vm148, %v2038, 0
    %v2043 = vsel %vm148, %v2040, 0
    %2045 = vmatpush.xpose.msra.mxu0 0.0
    %2046 = vmatpush.xpose.msra.mxu0 0.0
    %2047 = vmatpush.xpose.msra.mxu0 0.0
    %2048 = vmatpush.xpose.msra.mxu0 0.0
    %2049 = vmatpush.xpose.msra.mxu0 0.0
    %2050 = vmatpush.xpose.msra.mxu0 0.0
    %2051 = vmatpush.xpose.msra.mxu0 0.0
    %2052 = vmatpush.xpose.msra.mxu0 0.0
    %2053 = vmatpush.xpose.msra.mxu0 0.0
    %2054 = vmatpush.xpose.msra.mxu0 0.0
    %2055 = vmatpush.xpose.msra.mxu0 0.0
    %2056 = vmatpush.xpose.msra.mxu0 0.0
    %2057 = vmatpush.xpose.msra.mxu0 0.0
    %2058 = vmatpush.xpose.msra.mxu0 0.0
    %2059 = vmatpush.xpose.msra.mxu0 0.0
    %2060 = vmatpush.xpose.msra.mxu0 %v2043
    %2061 = vmatmul.f32.gmra.mxu0 %v2041
    %v2062 = vpop.f32.mrf.mxu0
    %v2063 = vadd.f32 0.0, %v2062
    %2064 = vdwg.mxu0
    %2065 = vrot.lane.b32.xlu0 %v133, 104
    %v2066 = vpop.permute.xlu0 %2065
    %2067 = vrot.lane.b32.xlu0 %v133, 72
    %v2068 = vpop.permute.xlu0 %2067
    %v2069 = vsel %vm148, %v2066, 0
    %v2071 = vsel %vm148, %v2068, 0
    %2073 = vmatpush.xpose.msra.mxu0 0.0
    %2074 = vmatpush.xpose.msra.mxu0 0.0
    %2075 = vmatpush.xpose.msra.mxu0 0.0
    %2076 = vmatpush.xpose.msra.mxu0 0.0
    %2077 = vmatpush.xpose.msra.mxu0 0.0
    %2078 = vmatpush.xpose.msra.mxu0 0.0
    %2079 = vmatpush.xpose.msra.mxu0 0.0
    %2080 = vmatpush.xpose.msra.mxu0 0.0
    %2081 = vmatpush.xpose.msra.mxu0 0.0
    %2082 = vmatpush.xpose.msra.mxu0 0.0
    %2083 = vmatpush.xpose.msra.mxu0 0.0
    %2084 = vmatpush.xpose.msra.mxu0 0.0
    %2085 = vmatpush.xpose.msra.mxu0 0.0
    %2086 = vmatpush.xpose.msra.mxu0 0.0
    %2087 = vmatpush.xpose.msra.mxu0 0.0
    %2088 = vmatpush.xpose.msra.mxu0 %v2071
    %2089 = vmatmul.f32.gmra.mxu0 %v2069
    %v2090 = vpop.f32.mrf.mxu0
    %v2091 = vadd.f32 0.0, %v2090
    %2092 = vdwg.mxu0
    %2093 = vrot.lane.b32.xlu0 %v136, 104
    %v2094 = vpop.permute.xlu0 %2093
    %2095 = vrot.lane.b32.xlu0 %v136, 72
    %v2096 = vpop.permute.xlu0 %2095
    %v2097 = vsel %vm148, %v2094, 0
    %v2099 = vsel %vm148, %v2096, 0
    %2101 = vmatpush.xpose.msra.mxu0 0.0
    %2102 = vmatpush.xpose.msra.mxu0 0.0
    %2103 = vmatpush.xpose.msra.mxu0 0.0
    %2104 = vmatpush.xpose.msra.mxu0 0.0
    %2105 = vmatpush.xpose.msra.mxu0 0.0
    %2106 = vmatpush.xpose.msra.mxu0 0.0
    %2107 = vmatpush.xpose.msra.mxu0 0.0
    %2108 = vmatpush.xpose.msra.mxu0 0.0
    %2109 = vmatpush.xpose.msra.mxu0 0.0
    %2110 = vmatpush.xpose.msra.mxu0 0.0
    %2111 = vmatpush.xpose.msra.mxu0 0.0
    %2112 = vmatpush.xpose.msra.mxu0 0.0
    %2113 = vmatpush.xpose.msra.mxu0 0.0
    %2114 = vmatpush.xpose.msra.mxu0 0.0
    %2115 = vmatpush.xpose.msra.mxu0 0.0
    %2116 = vmatpush.xpose.msra.mxu0 %v2099
    %2117 = vmatmul.f32.gmra.mxu0 %v2097
    %v2118 = vpop.f32.mrf.mxu0
    %v2119 = vadd.f32 0.0, %v2118
    %2120 = vdwg.mxu0
    %2121 = vrot.lane.b32.xlu0 %v139, 104
    %v2122 = vpop.permute.xlu0 %2121
    %2123 = vrot.lane.b32.xlu0 %v139, 72
    %v2124 = vpop.permute.xlu0 %2123
    %v2125 = vsel %vm148, %v2122, 0
    %v2127 = vsel %vm148, %v2124, 0
    %2129 = vmatpush.xpose.msra.mxu0 0.0
    %2130 = vmatpush.xpose.msra.mxu0 0.0
    %2131 = vmatpush.xpose.msra.mxu0 0.0
    %2132 = vmatpush.xpose.msra.mxu0 0.0
    %2133 = vmatpush.xpose.msra.mxu0 0.0
    %2134 = vmatpush.xpose.msra.mxu0 0.0
    %2135 = vmatpush.xpose.msra.mxu0 0.0
    %2136 = vmatpush.xpose.msra.mxu0 0.0
    %2137 = vmatpush.xpose.msra.mxu0 0.0
    %2138 = vmatpush.xpose.msra.mxu0 0.0
    %2139 = vmatpush.xpose.msra.mxu0 0.0
    %2140 = vmatpush.xpose.msra.mxu0 0.0
    %2141 = vmatpush.xpose.msra.mxu0 0.0
    %2142 = vmatpush.xpose.msra.mxu0 0.0
    %2143 = vmatpush.xpose.msra.mxu0 0.0
    %2144 = vmatpush.xpose.msra.mxu0 %v2127
    %2145 = vmatmul.f32.gmra.mxu0 %v2125
    %v2146 = vpop.f32.mrf.mxu0
    %v2147 = vadd.f32 0.0, %v2146
    %2148 = vdwg.mxu0
    %v2149 = vmul.f32 %v1951, 0.35355338
    %v2150 = vmul.f32 %v1979, 0.35355338
    %v2151 = vmul.f32 %v2007, 0.35355338
    %v2152 = vmul.f32 %v2035, 0.35355338
    %v2153 = vmul.f32 %v2063, 0.35355338
    %v2154 = vmul.f32 %v2091, 0.35355338
    %v2155 = vmul.f32 %v2119, 0.35355338
    %v2156 = vmul.f32 %v2147, 0.35355338
    %v2157 = vsel %vm148, %v2149, -inf
    %2158 = vmax.xlane.f32.xlu0 %v2157
    %v2159 = vpop.xlane.xlu0 %2158
    %v2160 = vsel %vm148, %v2150, -inf
    %2161 = vmax.xlane.f32.xlu0 %v2160
    %v2162 = vpop.xlane.xlu0 %2161
    %v2163 = vsel %vm148, %v2151, -inf
    %2164 = vmax.xlane.f32.xlu0 %v2163
    %v2165 = vpop.xlane.xlu0 %2164
    %v2166 = vsel %vm148, %v2152, -inf
    %2167 = vmax.xlane.f32.xlu0 %v2166
    %v2168 = vpop.xlane.xlu0 %2167
    %v2169 = vsel %vm148, %v2153, -inf
    %2170 = vmax.xlane.f32.xlu0 %v2169
    %v2171 = vpop.xlane.xlu0 %2170
    %v2172 = vsel %vm148, %v2154, -inf
    %2173 = vmax.xlane.f32.xlu0 %v2172
    %v2174 = vpop.xlane.xlu0 %2173
    %v2175 = vsel %vm148, %v2155, -inf
    %2176 = vmax.xlane.f32.xlu0 %v2175
    %v2177 = vpop.xlane.xlu0 %2176
    %v2178 = vsel %vm148, %v2156, -inf
    %2179 = vmax.xlane.f32.xlu0 %v2178
    %v2180 = vpop.xlane.xlu0 %2179
    %v2181 = vsub.f32 %v2149, %v2159
    %v2182 = vsub.f32 %v2150, %v2162
    %v2183 = vsub.f32 %v2151, %v2165
    %v2184 = vsub.f32 %v2152, %v2168
    %v2185 = vsub.f32 %v2153, %v2171
    %v2186 = vsub.f32 %v2154, %v2174
    %v2187 = vsub.f32 %v2155, %v2177
    %v2188 = vsub.f32 %v2156, %v2180
    %v2189 = vmul.f32 %v2181, 1.442695
    %v2190 = vpow.pop %v2189
    %v2191 = vmul.f32 %v2182, 1.442695
    %v2192 = vpow.pop %v2191
    %v2193 = vmul.f32 %v2183, 1.442695
    %v2194 = vpow.pop %v2193
    %v2195 = vmul.f32 %v2184, 1.442695
    %v2196 = vpow.pop %v2195
    %v2197 = vmul.f32 %v2185, 1.442695
    %v2198 = vpow.pop %v2197
    %v2199 = vmul.f32 %v2186, 1.442695
    %v2200 = vpow.pop %v2199
    %v2201 = vmul.f32 %v2187, 1.442695
    %v2202 = vpow.pop %v2201
    %v2203 = vmul.f32 %v2188, 1.442695
    %v2204 = vpow.pop %v2203
    %v2205 = vsel %vm148, %v2190, 0.0
    %2206 = vadd.xlane.f32.xlu0 %v2205
    %v2207 = vpop.xlane.xlu0 %2206
    %v2208 = vsel %vm148, %v2192, 0.0
    %2209 = vadd.xlane.f32.xlu0 %v2208
    %v2210 = vpop.xlane.xlu0 %2209
    %v2211 = vsel %vm148, %v2194, 0.0
    %2212 = vadd.xlane.f32.xlu0 %v2211
    %v2213 = vpop.xlane.xlu0 %2212
    %v2214 = vsel %vm148, %v2196, 0.0
    %2215 = vadd.xlane.f32.xlu0 %v2214
    %v2216 = vpop.xlane.xlu0 %2215
    %v2217 = vsel %vm148, %v2198, 0.0
    %2218 = vadd.xlane.f32.xlu0 %v2217
    %v2219 = vpop.xlane.xlu0 %2218
    %v2220 = vsel %vm148, %v2200, 0.0
    %2221 = vadd.xlane.f32.xlu0 %v2220
    %v2222 = vpop.xlane.xlu0 %2221
    %v2223 = vsel %vm148, %v2202, 0.0
    %2224 = vadd.xlane.f32.xlu0 %v2223
    %v2225 = vpop.xlane.xlu0 %2224
    %v2226 = vsel %vm148, %v2204, 0.0
    %2227 = vadd.xlane.f32.xlu0 %v2226
    %v2228 = vpop.xlane.xlu0 %2227
    %v2229 = vrcp.pop %v2207
    %v2230 = vrcp.pop %v2210
    %v2231 = vrcp.pop %v2213
    %v2232 = vrcp.pop %v2216
    %v2233 = vrcp.pop %v2219
    %v2234 = vrcp.pop %v2222
    %v2235 = vrcp.pop %v2225
    %v2236 = vrcp.pop %v2228
    %v2237 = vmul.f32 %v2190, %v2229
    %v2238 = vmul.f32 %v2192, %v2230
    %v2239 = vmul.f32 %v2194, %v2231
    %v2240 = vmul.f32 %v2196, %v2232
    %v2241 = vmul.f32 %v2198, %v2233
    %v2242 = vmul.f32 %v2200, %v2234
    %v2243 = vmul.f32 %v2202, %v2235
    %v2244 = vmul.f32 %v2204, %v2236
    %2245 = vrot.lane.b32.xlu0 %v118, 40
    %v2246 = vpop.permute.xlu0 %2245
    %v2249 = vsel %vm148, %v2237, 0
    %2251 = vmatpush.msra.mxu0 0.0
    %2252 = vmatpush.msra.mxu0 0.0
    %2253 = vmatpush.msra.mxu0 0.0
    %2254 = vmatpush.msra.mxu0 0.0
    %2255 = vmatpush.msra.mxu0 0.0
    %2256 = vmatpush.msra.mxu0 0.0
    %2257 = vmatpush.msra.mxu0 0.0
    %2258 = vmatpush.msra.mxu0 0.0
    %2259 = vmatpush.msra.mxu0 0.0
    %2260 = vmatpush.msra.mxu0 0.0
    %2261 = vmatpush.msra.mxu0 0.0
    %2262 = vmatpush.msra.mxu0 0.0
    %2263 = vmatpush.msra.mxu0 0.0
    %2264 = vmatpush.msra.mxu0 0.0
    %2265 = vmatpush.msra.mxu0 0.0
    %2266 = vmatpush.msra.mxu0 %v2246
    %2267 = vmatmul.f32.gmra.mxu0 %v2249
    %v2268 = vpop.f32.mrf.mxu0
    %v2269 = vadd.f32 0.0, %v2268
    %2270 = vdwg.mxu0
    %2271 = vrot.lane.b32.xlu0 %v121, 40
    %v2272 = vpop.permute.xlu0 %2271
    %v2275 = vsel %vm148, %v2238, 0
    %2277 = vmatpush.msra.mxu0 0.0
    %2278 = vmatpush.msra.mxu0 0.0
    %2279 = vmatpush.msra.mxu0 0.0
    %2280 = vmatpush.msra.mxu0 0.0
    %2281 = vmatpush.msra.mxu0 0.0
    %2282 = vmatpush.msra.mxu0 0.0
    %2283 = vmatpush.msra.mxu0 0.0
    %2284 = vmatpush.msra.mxu0 0.0
    %2285 = vmatpush.msra.mxu0 0.0
    %2286 = vmatpush.msra.mxu0 0.0
    %2287 = vmatpush.msra.mxu0 0.0
    %2288 = vmatpush.msra.mxu0 0.0
    %2289 = vmatpush.msra.mxu0 0.0
    %2290 = vmatpush.msra.mxu0 0.0
    %2291 = vmatpush.msra.mxu0 0.0
    %2292 = vmatpush.msra.mxu0 %v2272
    %2293 = vmatmul.f32.gmra.mxu0 %v2275
    %v2294 = vpop.f32.mrf.mxu0
    %v2295 = vadd.f32 0.0, %v2294
    %2296 = vdwg.mxu0
    %2297 = vrot.lane.b32.xlu0 %v124, 40
    %v2298 = vpop.permute.xlu0 %2297
    %v2301 = vsel %vm148, %v2239, 0
    %2303 = vmatpush.msra.mxu0 0.0
    %2304 = vmatpush.msra.mxu0 0.0
    %2305 = vmatpush.msra.mxu0 0.0
    %2306 = vmatpush.msra.mxu0 0.0
    %2307 = vmatpush.msra.mxu0 0.0
    %2308 = vmatpush.msra.mxu0 0.0
    %2309 = vmatpush.msra.mxu0 0.0
    %2310 = vmatpush.msra.mxu0 0.0
    %2311 = vmatpush.msra.mxu0 0.0
    %2312 = vmatpush.msra.mxu0 0.0
    %2313 = vmatpush.msra.mxu0 0.0
    %2314 = vmatpush.msra.mxu0 0.0
    %2315 = vmatpush.msra.mxu0 0.0
    %2316 = vmatpush.msra.mxu0 0.0
    %2317 = vmatpush.msra.mxu0 0.0
    %2318 = vmatpush.msra.mxu0 %v2298
    %2319 = vmatmul.f32.gmra.mxu0 %v2301
    %v2320 = vpop.f32.mrf.mxu0
    %v2321 = vadd.f32 0.0, %v2320
    %2322 = vdwg.mxu0
    %2323 = vrot.lane.b32.xlu0 %v127, 40
    %v2324 = vpop.permute.xlu0 %2323
    %v2327 = vsel %vm148, %v2240, 0
    %2329 = vmatpush.msra.mxu0 0.0
    %2330 = vmatpush.msra.mxu0 0.0
    %2331 = vmatpush.msra.mxu0 0.0
    %2332 = vmatpush.msra.mxu0 0.0
    %2333 = vmatpush.msra.mxu0 0.0
    %2334 = vmatpush.msra.mxu0 0.0
    %2335 = vmatpush.msra.mxu0 0.0
    %2336 = vmatpush.msra.mxu0 0.0
    %2337 = vmatpush.msra.mxu0 0.0
    %2338 = vmatpush.msra.mxu0 0.0
    %2339 = vmatpush.msra.mxu0 0.0
    %2340 = vmatpush.msra.mxu0 0.0
    %2341 = vmatpush.msra.mxu0 0.0
    %2342 = vmatpush.msra.mxu0 0.0
    %2343 = vmatpush.msra.mxu0 0.0
    %2344 = vmatpush.msra.mxu0 %v2324
    %2345 = vmatmul.f32.gmra.mxu0 %v2327
    %v2346 = vpop.f32.mrf.mxu0
    %v2347 = vadd.f32 0.0, %v2346
    %2348 = vdwg.mxu0
    %2349 = vrot.lane.b32.xlu0 %v130, 40
    %v2350 = vpop.permute.xlu0 %2349
    %v2353 = vsel %vm148, %v2241, 0
    %2355 = vmatpush.msra.mxu0 0.0
    %2356 = vmatpush.msra.mxu0 0.0
    %2357 = vmatpush.msra.mxu0 0.0
    %2358 = vmatpush.msra.mxu0 0.0
    %2359 = vmatpush.msra.mxu0 0.0
    %2360 = vmatpush.msra.mxu0 0.0
    %2361 = vmatpush.msra.mxu0 0.0
    %2362 = vmatpush.msra.mxu0 0.0
    %2363 = vmatpush.msra.mxu0 0.0
    %2364 = vmatpush.msra.mxu0 0.0
    %2365 = vmatpush.msra.mxu0 0.0
    %2366 = vmatpush.msra.mxu0 0.0
    %2367 = vmatpush.msra.mxu0 0.0
    %2368 = vmatpush.msra.mxu0 0.0
    %2369 = vmatpush.msra.mxu0 0.0
    %2370 = vmatpush.msra.mxu0 %v2350
    %2371 = vmatmul.f32.gmra.mxu0 %v2353
    %v2372 = vpop.f32.mrf.mxu0
    %v2373 = vadd.f32 0.0, %v2372
    %2374 = vdwg.mxu0
    %2375 = vrot.lane.b32.xlu0 %v133, 40
    %v2376 = vpop.permute.xlu0 %2375
    %v2379 = vsel %vm148, %v2242, 0
    %2381 = vmatpush.msra.mxu0 0.0
    %2382 = vmatpush.msra.mxu0 0.0
    %2383 = vmatpush.msra.mxu0 0.0
    %2384 = vmatpush.msra.mxu0 0.0
    %2385 = vmatpush.msra.mxu0 0.0
    %2386 = vmatpush.msra.mxu0 0.0
    %2387 = vmatpush.msra.mxu0 0.0
    %2388 = vmatpush.msra.mxu0 0.0
    %2389 = vmatpush.msra.mxu0 0.0
    %2390 = vmatpush.msra.mxu0 0.0
    %2391 = vmatpush.msra.mxu0 0.0
    %2392 = vmatpush.msra.mxu0 0.0
    %2393 = vmatpush.msra.mxu0 0.0
    %2394 = vmatpush.msra.mxu0 0.0
    %2395 = vmatpush.msra.mxu0 0.0
    %2396 = vmatpush.msra.mxu0 %v2376
    %2397 = vmatmul.f32.gmra.mxu0 %v2379
    %v2398 = vpop.f32.mrf.mxu0
    %v2399 = vadd.f32 0.0, %v2398
    %2400 = vdwg.mxu0
    %2401 = vrot.lane.b32.xlu0 %v136, 40
    %v2402 = vpop.permute.xlu0 %2401
    %v2405 = vsel %vm148, %v2243, 0
    %2407 = vmatpush.msra.mxu0 0.0
    %2408 = vmatpush.msra.mxu0 0.0
    %2409 = vmatpush.msra.mxu0 0.0
    %2410 = vmatpush.msra.mxu0 0.0
    %2411 = vmatpush.msra.mxu0 0.0
    %2412 = vmatpush.msra.mxu0 0.0
    %2413 = vmatpush.msra.mxu0 0.0
    %2414 = vmatpush.msra.mxu0 0.0
    %2415 = vmatpush.msra.mxu0 0.0
    %2416 = vmatpush.msra.mxu0 0.0
    %2417 = vmatpush.msra.mxu0 0.0
    %2418 = vmatpush.msra.mxu0 0.0
    %2419 = vmatpush.msra.mxu0 0.0
    %2420 = vmatpush.msra.mxu0 0.0
    %2421 = vmatpush.msra.mxu0 0.0
    %2422 = vmatpush.msra.mxu0 %v2402
    %2423 = vmatmul.f32.gmra.mxu0 %v2405
    %v2424 = vpop.f32.mrf.mxu0
    %v2425 = vadd.f32 0.0, %v2424
    %2426 = vdwg.mxu0
    %2427 = vrot.lane.b32.xlu0 %v139, 40
    %v2428 = vpop.permute.xlu0 %2427
    %v2431 = vsel %vm148, %v2244, 0
    %2433 = vmatpush.msra.mxu0 0.0
    %2434 = vmatpush.msra.mxu0 0.0
    %2435 = vmatpush.msra.mxu0 0.0
    %2436 = vmatpush.msra.mxu0 0.0
    %2437 = vmatpush.msra.mxu0 0.0
    %2438 = vmatpush.msra.mxu0 0.0
    %2439 = vmatpush.msra.mxu0 0.0
    %2440 = vmatpush.msra.mxu0 0.0
    %2441 = vmatpush.msra.mxu0 0.0
    %2442 = vmatpush.msra.mxu0 0.0
    %2443 = vmatpush.msra.mxu0 0.0
    %2444 = vmatpush.msra.mxu0 0.0
    %2445 = vmatpush.msra.mxu0 0.0
    %2446 = vmatpush.msra.mxu0 0.0
    %2447 = vmatpush.msra.mxu0 0.0
    %2448 = vmatpush.msra.mxu0 %v2428
    %2449 = vmatmul.f32.gmra.mxu0 %v2431
    %v2450 = vpop.f32.mrf.mxu0
    %v2451 = vadd.f32 0.0, %v2450
    %2452 = vdwg.mxu0
    %v2454 = vsel %vm148, %v2269, 0
    %v2457 = vsel %vm148, %v2295, 0
    %v2460 = vsel %vm148, %v2321, 0
    %v2463 = vsel %vm148, %v2347, 0
    %v2466 = vsel %vm148, %v2373, 0
    %v2469 = vsel %vm148, %v2399, 0
    %v2472 = vsel %vm148, %v2425, 0
    %v2475 = vsel %vm148, %v2451, 0
    %2477 = vmatpush.msra.mxu0 0.0
    %2478 = vmatpush.msra.mxu0 0.0
    %2479 = vmatpush.msra.mxu0 0.0
    %2480 = vmatpush.msra.mxu0 0.0
    %2481 = vmatpush.msra.mxu0 0.0
    %2482 = vmatpush.msra.mxu0 0.0
    %2483 = vmatpush.msra.mxu0 0.0
    %2484 = vmatpush.msra.mxu0 0.0
    %2485 = vmatpush.msra.mxu0 0.0
    %2486 = vmatpush.msra.mxu0 0.0
    %2487 = vmatpush.msra.mxu0 0.0
    %2488 = vmatpush.msra.mxu0 0.0
    %2489 = vmatpush.msra.mxu0 0.0
    %2490 = vmatpush.msra.mxu0 0.0
    %2491 = vmatpush.msra.mxu0 0.0
    %2492 = vmatpush.msra.mxu0 %v144
    %2493 = vmatmul.f32.gmra.mxu0 %v2454
    %v2494 = vpop.f32.mrf.mxu0
    %v2495 = vadd.f32 0.0, %v2494
    %2496 = vmatmul.f32.gmra.mxu0 %v2457
    %v2497 = vpop.f32.mrf.mxu0
    %v2498 = vadd.f32 0.0, %v2497
    %2499 = vmatmul.f32.gmra.mxu0 %v2460
    %v2500 = vpop.f32.mrf.mxu0
    %v2501 = vadd.f32 0.0, %v2500
    %2502 = vmatmul.f32.gmra.mxu0 %v2463
    %v2503 = vpop.f32.mrf.mxu0
    %v2504 = vadd.f32 0.0, %v2503
    %2505 = vmatmul.f32.gmra.mxu0 %v2466
    %v2506 = vpop.f32.mrf.mxu0
    %v2507 = vadd.f32 0.0, %v2506
    %2508 = vmatmul.f32.gmra.mxu0 %v2469
    %v2509 = vpop.f32.mrf.mxu0
    %v2510 = vadd.f32 0.0, %v2509
    %2511 = vmatmul.f32.gmra.mxu0 %v2472
    %v2512 = vpop.f32.mrf.mxu0
    %v2513 = vadd.f32 0.0, %v2512
    %2514 = vmatmul.f32.gmra.mxu0 %v2475
    %v2515 = vpop.f32.mrf.mxu0
    %v2516 = vadd.f32 0.0, %v2515
    %2517 = vdwg.mxu0
    %v2518 = vadd.f32 %v1917, %v2495
    %v2519 = vadd.f32 %v1918, %v2498
    %v2520 = vadd.f32 %v1919, %v2501
    %v2521 = vadd.f32 %v1920, %v2504
    %v2522 = vadd.f32 %v1921, %v2507
    %v2523 = vadd.f32 %v1922, %v2510
    %v2524 = vadd.f32 %v1923, %v2513
    %v2525 = vadd.f32 %v1924, %v2516
    %v2526 = vadd.f32 %v59, %v2518
    %v2527 = vadd.f32 %v60, %v2519
    %v2528 = vadd.f32 %v61, %v2520
    %v2529 = vadd.f32 %v62, %v2521
    %v2530 = vadd.f32 %v63, %v2522
    %v2531 = vadd.f32 %v64, %v2523
    %v2532 = vadd.f32 %v65, %v2524
    %v2533 = vadd.f32 %v66, %v2525
    %v2534 = vld [vmem:[%s4] sm:$0x1]
    %v2536 = vperm.slane %v2534, 0
    %v2538 = vadd.f32 %v2526, %v2536
    %v2539 = vadd.f32 %v2527, %v2536
    %v2540 = vadd.f32 %v2528, %v2536
    %v2541 = vadd.f32 %v2529, %v2536
    %v2542 = vadd.f32 %v2530, %v2536
    %v2543 = vadd.f32 %v2531, %v2536
    %v2544 = vadd.f32 %v2532, %v2536
    %v2545 = vadd.f32 %v2533, %v2536
    %v2546 = vld [vmem:[%s5] sm:$0x1]
    %v2547 = vld [vmem:[%s6] sm:$0x1]
    %v2548 = vsel %vm75, %v2538, 0.0
    %v2549 = vsel %vm75, %v2539, 0.0
    %v2550 = vadd.f32 %v2548, %v2549
    %v2551 = vsel %vm75, %v2540, 0.0
    %v2552 = vadd.f32 %v2550, %v2551
    %v2553 = vsel %vm75, %v2541, 0.0
    %v2554 = vadd.f32 %v2552, %v2553
    %v2555 = vsel %vm75, %v2542, 0.0
    %v2556 = vadd.f32 %v2554, %v2555
    %v2557 = vsel %vm75, %v2543, 0.0
    %v2558 = vadd.f32 %v2556, %v2557
    %v2559 = vsel %vm75, %v2544, 0.0
    %v2560 = vadd.f32 %v2558, %v2559
    %v2561 = vsel %vm75, %v2545, 0.0
    %v2562 = vadd.f32 %v2560, %v2561
    %v2563 = vrot.slane %v2562, 4
    %v2564 = vadd.f32 %v2562, %v2563
    %v2565 = vrot.slane %v2564, 2
    %v2566 = vadd.f32 %v2564, %v2565
    %v2567 = vrot.slane %v2566, 1
    %v2568 = vadd.f32 %v2566, %v2567
    %v2569 = vmul.f32 %v2538, %v2538
    %v2570 = vmul.f32 %v2539, %v2539
    %v2571 = vmul.f32 %v2540, %v2540
    %v2572 = vmul.f32 %v2541, %v2541
    %v2573 = vmul.f32 %v2542, %v2542
    %v2574 = vmul.f32 %v2543, %v2543
    %v2575 = vmul.f32 %v2544, %v2544
    %v2576 = vmul.f32 %v2545, %v2545
    %v2577 = vsel %vm75, %v2569, 0.0
    %v2578 = vsel %vm75, %v2570, 0.0
    %v2579 = vadd.f32 %v2577, %v2578
    %v2580 = vsel %vm75, %v2571, 0.0
    %v2581 = vadd.f32 %v2579, %v2580
    %v2582 = vsel %vm75, %v2572, 0.0
    %v2583 = vadd.f32 %v2581, %v2582
    %v2584 = vsel %vm75, %v2573, 0.0
    %v2585 = vadd.f32 %v2583, %v2584
    %v2586 = vsel %vm75, %v2574, 0.0
    %v2587 = vadd.f32 %v2585, %v2586
    %v2588 = vsel %vm75, %v2575, 0.0
    %v2589 = vadd.f32 %v2587, %v2588
    %v2590 = vsel %vm75, %v2576, 0.0
    %v2591 = vadd.f32 %v2589, %v2590
    %v2592 = vrot.slane %v2591, 4
    %v2593 = vadd.f32 %v2591, %v2592
    %v2594 = vrot.slane %v2593, 2
    %v2595 = vadd.f32 %v2593, %v2594
    %v2596 = vrot.slane %v2595, 1
    %v2597 = vadd.f32 %v2595, %v2596
    %v2598 = vmul.f32 %v2568, 0.015625
    %v2599 = vmul.f32 %v2597, 0.015625
    %v2600 = vmul.f32 %v2598, %v2598
    %v2601 = vsub.f32 %v2599, %v2600
    %v2602 = vsub.f32 %v2538, %v2598
    %v2603 = vsub.f32 %v2539, %v2598
    %v2604 = vsub.f32 %v2540, %v2598
    %v2605 = vsub.f32 %v2541, %v2598
    %v2606 = vsub.f32 %v2542, %v2598
    %v2607 = vsub.f32 %v2543, %v2598
    %v2608 = vsub.f32 %v2544, %v2598
    %v2609 = vsub.f32 %v2545, %v2598
    %v2610 = vadd.f32 %v2601, 1e-05
    %v2611 = vrsqrt.pop %v2610
    %v2612 = vmul.f32 %v2611, %v2610
    %v2613 = vmul.f32 %v2612, %v2611
    %v2614 = vmul.f32 0.5, %v2613
    %v2615 = vsub.f32 1.5, %v2614
    %v2616 = vmul.f32 %v2611, %v2615
    %vm2617 = vweird.f32 %v2610
    %vm2618 = vweird.f32 %v2611
    %vm2619 = vmor %vm2617, %vm2618
    %v2620 = vsel %vm2619, %v2611, %v2616
    %v2621 = vmul.f32 %v2602, %v2620
    %v2622 = vmul.f32 %v2603, %v2620
    %v2623 = vmul.f32 %v2604, %v2620
    %v2624 = vmul.f32 %v2605, %v2620
    %v2625 = vmul.f32 %v2606, %v2620
    %v2626 = vmul.f32 %v2607, %v2620
    %v2627 = vmul.f32 %v2608, %v2620
    %v2628 = vmul.f32 %v2609, %v2620
    %v2630 = vperm.slane %v2546, 0
    %v2632 = vmul.f32 %v2621, %v2630
    %v2633 = vmul.f32 %v2622, %v2630
    %v2634 = vmul.f32 %v2623, %v2630
    %v2635 = vmul.f32 %v2624, %v2630
    %v2636 = vmul.f32 %v2625, %v2630
    %v2637 = vmul.f32 %v2626, %v2630
    %v2638 = vmul.f32 %v2627, %v2630
    %v2639 = vmul.f32 %v2628, %v2630
    %v2641 = vperm.slane %v2547, 0
    %v2643 = vadd.f32 %v2632, %v2641
    %v2644 = vadd.f32 %v2633, %v2641
    %v2645 = vadd.f32 %v2634, %v2641
    %v2646 = vadd.f32 %v2635, %v2641
    %v2647 = vadd.f32 %v2636, %v2641
    %v2648 = vadd.f32 %v2637, %v2641
    %v2649 = vadd.f32 %v2638, %v2641
    %v2650 = vadd.f32 %v2639, %v2641
    %v2651 = vld [vmem:[%s7] sm:$0xff]
    %v2652 = vld [vmem:[%s7 + $0x8] sm:$0xff]
    %v2653 = vld [vmem:[%s7 + $0x10] sm:$0xff]
    %v2654 = vld [vmem:[%s7 + $0x18] sm:$0xff]
    %v2655 = vld [vmem:[%s8] sm:$0x1]
    %v2657 = vperm.slane %v2655, 0
    %v2660 = vsel %vm75, %v2643, 0
    %v2663 = vsel %vm75, %v2644, 0
    %v2666 = vsel %vm75, %v2645, 0
    %v2669 = vsel %vm75, %v2646, 0
    %v2672 = vsel %vm75, %v2647, 0
    %v2675 = vsel %vm75, %v2648, 0
    %v2678 = vsel %vm75, %v2649, 0
    %v2681 = vsel %vm75, %v2650, 0
    %2683 = vmatpush.msra.mxu0 0.0
    %2684 = vmatpush.msra.mxu0 0.0
    %2685 = vmatpush.msra.mxu0 0.0
    %2686 = vmatpush.msra.mxu0 0.0
    %2687 = vmatpush.msra.mxu0 0.0
    %2688 = vmatpush.msra.mxu0 0.0
    %2689 = vmatpush.msra.mxu0 0.0
    %2690 = vmatpush.msra.mxu0 0.0
    %2691 = vmatpush.msra.mxu0 0.0
    %2692 = vmatpush.msra.mxu0 0.0
    %2693 = vmatpush.msra.mxu0 0.0
    %2694 = vmatpush.msra.mxu0 0.0
    %2695 = vmatpush.msra.mxu0 %v2654
    %2696 = vmatpush.msra.mxu0 %v2653
    %2697 = vmatpush.msra.mxu0 %v2652
    %2698 = vmatpush.msra.mxu0 %v2651
    %2699 = vmatmul.f32.gmra.mxu0 %v2660
    %v2700 = vpop.f32.mrf.mxu0
    %v2701 = vadd.f32 %v2657, %v2700
    %2702 = vmatmul.f32.gmra.mxu0 %v2663
    %v2703 = vpop.f32.mrf.mxu0
    %v2704 = vadd.f32 %v2657, %v2703
    %2705 = vmatmul.f32.gmra.mxu0 %v2666
    %v2706 = vpop.f32.mrf.mxu0
    %v2707 = vadd.f32 %v2657, %v2706
    %2708 = vmatmul.f32.gmra.mxu0 %v2669
    %v2709 = vpop.f32.mrf.mxu0
    %v2710 = vadd.f32 %v2657, %v2709
    %2711 = vmatmul.f32.gmra.mxu0 %v2672
    %v2712 = vpop.f32.mrf.mxu0
    %v2713 = vadd.f32 %v2657, %v2712
    %2714 = vmatmul.f32.gmra.mxu0 %v2675
    %v2715 = vpop.f32.mrf.mxu0
    %v2716 = vadd.f32 %v2657, %v2715
    %2717 = vmatmul.f32.gmra.mxu0 %v2678
    %v2718 = vpop.f32.mrf.mxu0
    %v2719 = vadd.f32 %v2657, %v2718
    %2720 = vmatmul.f32.gmra.mxu0 %v2681
    %v2721 = vpop.f32.mrf.mxu0
    %v2722 = vadd.f32 %v2657, %v2721
    %2723 = vdwg.mxu0
    %v2724 = vmul.f32 %v2701, 0.5
    %v2725 = vmul.f32 %v2704, 0.5
    %v2726 = vmul.f32 %v2707, 0.5
    %v2727 = vmul.f32 %v2710, 0.5
    %v2728 = vmul.f32 %v2713, 0.5
    %v2729 = vmul.f32 %v2716, 0.5
    %v2730 = vmul.f32 %v2719, 0.5
    %v2731 = vmul.f32 %v2722, 0.5
    %v2732 = vmul.f32 %v2701, 0.70710677
    %v2733 = vmul.f32 %v2704, 0.70710677
    %v2734 = vmul.f32 %v2707, 0.70710677
    %v2735 = vmul.f32 %v2710, 0.70710677
    %v2736 = vmul.f32 %v2713, 0.70710677
    %v2737 = vmul.f32 %v2716, 0.70710677
    %v2738 = vmul.f32 %v2719, 0.70710677
    %v2739 = vmul.f32 %v2722, 0.70710677
    %v2740 = vmul.f32 %v2732, %v2732
    %v2741 = vmin.f32 16.0, %v2740
    %v2742 = vmul.f32 %v2741, 2.1237322e-06
    %v2743 = vadd.f32 %v2742, 0.00028619796
    %v2744 = vmul.f32 %v2741, %v2743
    %v2745 = vadd.f32 %v2744, 0.0036580483
    %v2746 = vmul.f32 %v2741, %v2745
    %v2747 = vadd.f32 %v2746, 0.05243302
    %v2748 = vmul.f32 %v2741, %v2747
    %v2749 = vadd.f32 %v2748, 0.18741608
    %v2750 = vmul.f32 %v2741, %v2749
    %v2751 = vadd.f32 %v2750, 1.1283791
    %v2752 = vmul.f32 %v2732, %v2751
    %v2753 = vmul.f32 %v2741, 3.8918573e-05
    %v2754 = vadd.f32 %v2753, 0.001143296
    %v2755 = vmul.f32 %v2741, %v2754
    %v2756 = vadd.f32 %v2755, 0.014752088
    %v2757 = vmul.f32 %v2741, %v2756
    %v2758 = vadd.f32 %v2757, 0.112945676
    %v2759 = vmul.f32 %v2741, %v2758
    %v2760 = vadd.f32 %v2759, 0.4994258
    %v2761 = vmul.f32 %v2741, %v2760
    %v2762 = vadd.f32 %v2761, 1.0
    %v2763 = vrcp.pop %v2762
    %v2764 = vmul.f32 %v2762, %v2763
    %v2765 = vsub.f32 1.0, %v2764
    %v2766 = vmul.f32 %v2763, %v2765
    %v2767 = vadd.f32 %v2763, %v2766
    %vm2768 = vweird.f32 %v2762
    %vm2769 = vweird.f32 %v2763
    %vm2770 = vmor %vm2768, %vm2769
    %v2771 = vsel %vm2770, %v2763, %v2767
    %v2772 = vand.u32 2147483647, %v2762
    %vm2773 = vcmp.eq.f32.partialorder %v2772, 8.507059e+37
    %v2774 = vand.u32 %v2762, 2147483648
    %v2775 = vor.u32 1.1754944e-38, %v2774
    %v2776 = vsel %vm2773, %v2775, %v2771
    %v2777 = vmul.f32 %v2752, %v2776
    %v2778 = vmin.f32 %v2777, 1.0
    %v2779 = vmax.f32 %v2778, -1.0
    %v2780 = vmul.f32 %v2733, %v2733
    %v2781 = vmin.f32 16.0, %v2780
    %v2782 = vmul.f32 %v2781, 2.1237322e-06
    %v2783 = vadd.f32 %v2782, 0.00028619796
    %v2784 = vmul.f32 %v2781, %v2783
    %v2785 = vadd.f32 %v2784, 0.0036580483
    %v2786 = vmul.f32 %v2781, %v2785
    %v2787 = vadd.f32 %v2786, 0.05243302
    %v2788 = vmul.f32 %v2781, %v2787
    %v2789 = vadd.f32 %v2788, 0.18741608
    %v2790 = vmul.f32 %v2781, %v2789
    %v2791 = vadd.f32 %v2790, 1.1283791
    %v2792 = vmul.f32 %v2733, %v2791
    %v2793 = vmul.f32 %v2781, 3.8918573e-05
    %v2794 = vadd.f32 %v2793, 0.001143296
    %v2795 = vmul.f32 %v2781, %v2794
    %v2796 = vadd.f32 %v2795, 0.014752088
    %v2797 = vmul.f32 %v2781, %v2796
    %v2798 = vadd.f32 %v2797, 0.112945676
    %v2799 = vmul.f32 %v2781, %v2798
    %v2800 = vadd.f32 %v2799, 0.4994258
    %v2801 = vmul.f32 %v2781, %v2800
    %v2802 = vadd.f32 %v2801, 1.0
    %v2803 = vrcp.pop %v2802
    %v2804 = vmul.f32 %v2802, %v2803
    %v2805 = vsub.f32 1.0, %v2804
    %v2806 = vmul.f32 %v2803, %v2805
    %v2807 = vadd.f32 %v2803, %v2806
    %vm2808 = vweird.f32 %v2802
    %vm2809 = vweird.f32 %v2803
    %vm2810 = vmor %vm2808, %vm2809
    %v2811 = vsel %vm2810, %v2803, %v2807
    %v2812 = vand.u32 2147483647, %v2802
    %vm2813 = vcmp.eq.f32.partialorder %v2812, 8.507059e+37
    %v2814 = vand.u32 %v2802, 2147483648
    %v2815 = vor.u32 1.1754944e-38, %v2814
    %v2816 = vsel %vm2813, %v2815, %v2811
    %v2817 = vmul.f32 %v2792, %v2816
    %v2818 = vmin.f32 %v2817, 1.0
    %v2819 = vmax.f32 %v2818, -1.0
    %v2820 = vmul.f32 %v2734, %v2734
    %v2821 = vmin.f32 16.0, %v2820
    %v2822 = vmul.f32 %v2821, 2.1237322e-06
    %v2823 = vadd.f32 %v2822, 0.00028619796
    %v2824 = vmul.f32 %v2821, %v2823
    %v2825 = vadd.f32 %v2824, 0.0036580483
    %v2826 = vmul.f32 %v2821, %v2825
    %v2827 = vadd.f32 %v2826, 0.05243302
    %v2828 = vmul.f32 %v2821, %v2827
    %v2829 = vadd.f32 %v2828, 0.18741608
    %v2830 = vmul.f32 %v2821, %v2829
    %v2831 = vadd.f32 %v2830, 1.1283791
    %v2832 = vmul.f32 %v2734, %v2831
    %v2833 = vmul.f32 %v2821, 3.8918573e-05
    %v2834 = vadd.f32 %v2833, 0.001143296
    %v2835 = vmul.f32 %v2821, %v2834
    %v2836 = vadd.f32 %v2835, 0.014752088
    %v2837 = vmul.f32 %v2821, %v2836
    %v2838 = vadd.f32 %v2837, 0.112945676
    %v2839 = vmul.f32 %v2821, %v2838
    %v2840 = vadd.f32 %v2839, 0.4994258
    %v2841 = vmul.f32 %v2821, %v2840
    %v2842 = vadd.f32 %v2841, 1.0
    %v2843 = vrcp.pop %v2842
    %v2844 = vmul.f32 %v2842, %v2843
    %v2845 = vsub.f32 1.0, %v2844
    %v2846 = vmul.f32 %v2843, %v2845
    %v2847 = vadd.f32 %v2843, %v2846
    %vm2848 = vweird.f32 %v2842
    %vm2849 = vweird.f32 %v2843
    %vm2850 = vmor %vm2848, %vm2849
    %v2851 = vsel %vm2850, %v2843, %v2847
    %v2852 = vand.u32 2147483647, %v2842
    %vm2853 = vcmp.eq.f32.partialorder %v2852, 8.507059e+37
    %v2854 = vand.u32 %v2842, 2147483648
    %v2855 = vor.u32 1.1754944e-38, %v2854
    %v2856 = vsel %vm2853, %v2855, %v2851
    %v2857 = vmul.f32 %v2832, %v2856
    %v2858 = vmin.f32 %v2857, 1.0
    %v2859 = vmax.f32 %v2858, -1.0
    %v2860 = vmul.f32 %v2735, %v2735
    %v2861 = vmin.f32 16.0, %v2860
    %v2862 = vmul.f32 %v2861, 2.1237322e-06
    %v2863 = vadd.f32 %v2862, 0.00028619796
    %v2864 = vmul.f32 %v2861, %v2863
    %v2865 = vadd.f32 %v2864, 0.0036580483
    %v2866 = vmul.f32 %v2861, %v2865
    %v2867 = vadd.f32 %v2866, 0.05243302
    %v2868 = vmul.f32 %v2861, %v2867
    %v2869 = vadd.f32 %v2868, 0.18741608
    %v2870 = vmul.f32 %v2861, %v2869
    %v2871 = vadd.f32 %v2870, 1.1283791
    %v2872 = vmul.f32 %v2735, %v2871
    %v2873 = vmul.f32 %v2861, 3.8918573e-05
    %v2874 = vadd.f32 %v2873, 0.001143296
    %v2875 = vmul.f32 %v2861, %v2874
    %v2876 = vadd.f32 %v2875, 0.014752088
    %v2877 = vmul.f32 %v2861, %v2876
    %v2878 = vadd.f32 %v2877, 0.112945676
    %v2879 = vmul.f32 %v2861, %v2878
    %v2880 = vadd.f32 %v2879, 0.4994258
    %v2881 = vmul.f32 %v2861, %v2880
    %v2882 = vadd.f32 %v2881, 1.0
    %v2883 = vrcp.pop %v2882
    %v2884 = vmul.f32 %v2882, %v2883
    %v2885 = vsub.f32 1.0, %v2884
    %v2886 = vmul.f32 %v2883, %v2885
    %v2887 = vadd.f32 %v2883, %v2886
    %vm2888 = vweird.f32 %v2882
    %vm2889 = vweird.f32 %v2883
    %vm2890 = vmor %vm2888, %vm2889
    %v2891 = vsel %vm2890, %v2883, %v2887
    %v2892 = vand.u32 2147483647, %v2882
    %vm2893 = vcmp.eq.f32.partialorder %v2892, 8.507059e+37
    %v2894 = vand.u32 %v2882, 2147483648
    %v2895 = vor.u32 1.1754944e-38, %v2894
    %v2896 = vsel %vm2893, %v2895, %v2891
    %v2897 = vmul.f32 %v2872, %v2896
    %v2898 = vmin.f32 %v2897, 1.0
    %v2899 = vmax.f32 %v2898, -1.0
    %v2900 = vmul.f32 %v2736, %v2736
    %v2901 = vmin.f32 16.0, %v2900
    %v2902 = vmul.f32 %v2901, 2.1237322e-06
    %v2903 = vadd.f32 %v2902, 0.00028619796
    %v2904 = vmul.f32 %v2901, %v2903
    %v2905 = vadd.f32 %v2904, 0.0036580483
    %v2906 = vmul.f32 %v2901, %v2905
    %v2907 = vadd.f32 %v2906, 0.05243302
    %v2908 = vmul.f32 %v2901, %v2907
    %v2909 = vadd.f32 %v2908, 0.18741608
    %v2910 = vmul.f32 %v2901, %v2909
    %v2911 = vadd.f32 %v2910, 1.1283791
    %v2912 = vmul.f32 %v2736, %v2911
    %v2913 = vmul.f32 %v2901, 3.8918573e-05
    %v2914 = vadd.f32 %v2913, 0.001143296
    %v2915 = vmul.f32 %v2901, %v2914
    %v2916 = vadd.f32 %v2915, 0.014752088
    %v2917 = vmul.f32 %v2901, %v2916
    %v2918 = vadd.f32 %v2917, 0.112945676
    %v2919 = vmul.f32 %v2901, %v2918
    %v2920 = vadd.f32 %v2919, 0.4994258
    %v2921 = vmul.f32 %v2901, %v2920
    %v2922 = vadd.f32 %v2921, 1.0
    %v2923 = vrcp.pop %v2922
    %v2924 = vmul.f32 %v2922, %v2923
    %v2925 = vsub.f32 1.0, %v2924
    %v2926 = vmul.f32 %v2923, %v2925
    %v2927 = vadd.f32 %v2923, %v2926
    %vm2928 = vweird.f32 %v2922
    %vm2929 = vweird.f32 %v2923
    %vm2930 = vmor %vm2928, %vm2929
    %v2931 = vsel %vm2930, %v2923, %v2927
    %v2932 = vand.u32 2147483647, %v2922
    %vm2933 = vcmp.eq.f32.partialorder %v2932, 8.507059e+37
    %v2934 = vand.u32 %v2922, 2147483648
    %v2935 = vor.u32 1.1754944e-38, %v2934
    %v2936 = vsel %vm2933, %v2935, %v2931
    %v2937 = vmul.f32 %v2912, %v2936
    %v2938 = vmin.f32 %v2937, 1.0
    %v2939 = vmax.f32 %v2938, -1.0
    %v2940 = vmul.f32 %v2737, %v2737
    %v2941 = vmin.f32 16.0, %v2940
    %v2942 = vmul.f32 %v2941, 2.1237322e-06
    %v2943 = vadd.f32 %v2942, 0.00028619796
    %v2944 = vmul.f32 %v2941, %v2943
    %v2945 = vadd.f32 %v2944, 0.0036580483
    %v2946 = vmul.f32 %v2941, %v2945
    %v2947 = vadd.f32 %v2946, 0.05243302
    %v2948 = vmul.f32 %v2941, %v2947
    %v2949 = vadd.f32 %v2948, 0.18741608
    %v2950 = vmul.f32 %v2941, %v2949
    %v2951 = vadd.f32 %v2950, 1.1283791
    %v2952 = vmul.f32 %v2737, %v2951
    %v2953 = vmul.f32 %v2941, 3.8918573e-05
    %v2954 = vadd.f32 %v2953, 0.001143296
    %v2955 = vmul.f32 %v2941, %v2954
    %v2956 = vadd.f32 %v2955, 0.014752088
    %v2957 = vmul.f32 %v2941, %v2956
    %v2958 = vadd.f32 %v2957, 0.112945676
    %v2959 = vmul.f32 %v2941, %v2958
    %v2960 = vadd.f32 %v2959, 0.4994258
    %v2961 = vmul.f32 %v2941, %v2960
    %v2962 = vadd.f32 %v2961, 1.0
    %v2963 = vrcp.pop %v2962
    %v2964 = vmul.f32 %v2962, %v2963
    %v2965 = vsub.f32 1.0, %v2964
    %v2966 = vmul.f32 %v2963, %v2965
    %v2967 = vadd.f32 %v2963, %v2966
    %vm2968 = vweird.f32 %v2962
    %vm2969 = vweird.f32 %v2963
    %vm2970 = vmor %vm2968, %vm2969
    %v2971 = vsel %vm2970, %v2963, %v2967
    %v2972 = vand.u32 2147483647, %v2962
    %vm2973 = vcmp.eq.f32.partialorder %v2972, 8.507059e+37
    %v2974 = vand.u32 %v2962, 2147483648
    %v2975 = vor.u32 1.1754944e-38, %v2974
    %v2976 = vsel %vm2973, %v2975, %v2971
    %v2977 = vmul.f32 %v2952, %v2976
    %v2978 = vmin.f32 %v2977, 1.0
    %v2979 = vmax.f32 %v2978, -1.0
    %v2980 = vmul.f32 %v2738, %v2738
    %v2981 = vmin.f32 16.0, %v2980
    %v2982 = vmul.f32 %v2981, 2.1237322e-06
    %v2983 = vadd.f32 %v2982, 0.00028619796
    %v2984 = vmul.f32 %v2981, %v2983
    %v2985 = vadd.f32 %v2984, 0.0036580483
    %v2986 = vmul.f32 %v2981, %v2985
    %v2987 = vadd.f32 %v2986, 0.05243302
    %v2988 = vmul.f32 %v2981, %v2987
    %v2989 = vadd.f32 %v2988, 0.18741608
    %v2990 = vmul.f32 %v2981, %v2989
    %v2991 = vadd.f32 %v2990, 1.1283791
    %v2992 = vmul.f32 %v2738, %v2991
    %v2993 = vmul.f32 %v2981, 3.8918573e-05
    %v2994 = vadd.f32 %v2993, 0.001143296
    %v2995 = vmul.f32 %v2981, %v2994
    %v2996 = vadd.f32 %v2995, 0.014752088
    %v2997 = vmul.f32 %v2981, %v2996
    %v2998 = vadd.f32 %v2997, 0.112945676
    %v2999 = vmul.f32 %v2981, %v2998
    %v3000 = vadd.f32 %v2999, 0.4994258
    %v3001 = vmul.f32 %v2981, %v3000
    %v3002 = vadd.f32 %v3001, 1.0
    %v3003 = vrcp.pop %v3002
    %v3004 = vmul.f32 %v3002, %v3003
    %v3005 = vsub.f32 1.0, %v3004
    %v3006 = vmul.f32 %v3003, %v3005
    %v3007 = vadd.f32 %v3003, %v3006
    %vm3008 = vweird.f32 %v3002
    %vm3009 = vweird.f32 %v3003
    %vm3010 = vmor %vm3008, %vm3009
    %v3011 = vsel %vm3010, %v3003, %v3007
    %v3012 = vand.u32 2147483647, %v3002
    %vm3013 = vcmp.eq.f32.partialorder %v3012, 8.507059e+37
    %v3014 = vand.u32 %v3002, 2147483648
    %v3015 = vor.u32 1.1754944e-38, %v3014
    %v3016 = vsel %vm3013, %v3015, %v3011
    %v3017 = vmul.f32 %v2992, %v3016
    %v3018 = vmin.f32 %v3017, 1.0
    %v3019 = vmax.f32 %v3018, -1.0
    %v3020 = vmul.f32 %v2739, %v2739
    %v3021 = vmin.f32 16.0, %v3020
    %v3022 = vmul.f32 %v3021, 2.1237322e-06
    %v3023 = vadd.f32 %v3022, 0.00028619796
    %v3024 = vmul.f32 %v3021, %v3023
    %v3025 = vadd.f32 %v3024, 0.0036580483
    %v3026 = vmul.f32 %v3021, %v3025
    %v3027 = vadd.f32 %v3026, 0.05243302
    %v3028 = vmul.f32 %v3021, %v3027
    %v3029 = vadd.f32 %v3028, 0.18741608
    %v3030 = vmul.f32 %v3021, %v3029
    %v3031 = vadd.f32 %v3030, 1.1283791
    %v3032 = vmul.f32 %v2739, %v3031
    %v3033 = vmul.f32 %v3021, 3.8918573e-05
    %v3034 = vadd.f32 %v3033, 0.001143296
    %v3035 = vmul.f32 %v3021, %v3034
    %v3036 = vadd.f32 %v3035, 0.014752088
    %v3037 = vmul.f32 %v3021, %v3036
    %v3038 = vadd.f32 %v3037, 0.112945676
    %v3039 = vmul.f32 %v3021, %v3038
    %v3040 = vadd.f32 %v3039, 0.4994258
    %v3041 = vmul.f32 %v3021, %v3040
    %v3042 = vadd.f32 %v3041, 1.0
    %v3043 = vrcp.pop %v3042
    %v3044 = vmul.f32 %v3042, %v3043
    %v3045 = vsub.f32 1.0, %v3044
    %v3046 = vmul.f32 %v3043, %v3045
    %v3047 = vadd.f32 %v3043, %v3046
    %vm3048 = vweird.f32 %v3042
    %vm3049 = vweird.f32 %v3043
    %vm3050 = vmor %vm3048, %vm3049
    %v3051 = vsel %vm3050, %v3043, %v3047
    %v3052 = vand.u32 2147483647, %v3042
    %vm3053 = vcmp.eq.f32.partialorder %v3052, 8.507059e+37
    %v3054 = vand.u32 %v3042, 2147483648
    %v3055 = vor.u32 1.1754944e-38, %v3054
    %v3056 = vsel %vm3053, %v3055, %v3051
    %v3057 = vmul.f32 %v3032, %v3056
    %v3058 = vmin.f32 %v3057, 1.0
    %v3059 = vmax.f32 %v3058, -1.0
    %v3060 = vadd.f32 %v2779, 1.0
    %v3061 = vadd.f32 %v2819, 1.0
    %v3062 = vadd.f32 %v2859, 1.0
    %v3063 = vadd.f32 %v2899, 1.0
    %v3064 = vadd.f32 %v2939, 1.0
    %v3065 = vadd.f32 %v2979, 1.0
    %v3066 = vadd.f32 %v3019, 1.0
    %v3067 = vadd.f32 %v3059, 1.0
    %v3068 = vmul.f32 %v2724, %v3060
    %v3069 = vmul.f32 %v2725, %v3061
    %v3070 = vmul.f32 %v2726, %v3062
    %v3071 = vmul.f32 %v2727, %v3063
    %v3072 = vmul.f32 %v2728, %v3064
    %v3073 = vmul.f32 %v2729, %v3065
    %v3074 = vmul.f32 %v2730, %v3066
    %v3075 = vmul.f32 %v2731, %v3067
    %v3076 = vld [vmem:[%s9] sm:$0xff]
    %v3077 = vld [vmem:[%s9 + $0x8] sm:$0xff]
    %v3078 = vld [vmem:[%s9 + $0x10] sm:$0xff]
    %v3079 = vld [vmem:[%s9 + $0x18] sm:$0xff]
    %v3080 = vld [vmem:[%s9 + $0x20] sm:$0xff]
    %v3081 = vld [vmem:[%s9 + $0x28] sm:$0xff]
    %v3082 = vld [vmem:[%s9 + $0x30] sm:$0xff]
    %v3083 = vld [vmem:[%s9 + $0x38] sm:$0xff]
    %v3084 = vld [vmem:[%s10] sm:$0x1]
    %v3086 = vperm.slane %v3084, 0
    %vm3088 = vcmask 523264
    %v3090 = vsel %vm3088, %v3068, 0
    %v3093 = vsel %vm3088, %v3069, 0
    %v3096 = vsel %vm3088, %v3070, 0
    %v3099 = vsel %vm3088, %v3071, 0
    %v3102 = vsel %vm3088, %v3072, 0
    %v3105 = vsel %vm3088, %v3073, 0
    %v3108 = vsel %vm3088, %v3074, 0
    %v3111 = vsel %vm3088, %v3075, 0
    %3113 = vmatpush.msra.mxu0 0.0
    %3114 = vmatpush.msra.mxu0 0.0
    %3115 = vmatpush.msra.mxu0 0.0
    %3116 = vmatpush.msra.mxu0 0.0
    %3117 = vmatpush.msra.mxu0 0.0
    %3118 = vmatpush.msra.mxu0 0.0
    %3119 = vmatpush.msra.mxu0 0.0
    %3120 = vmatpush.msra.mxu0 0.0
    %3121 = vmatpush.msra.mxu0 %v3083
    %3122 = vmatpush.msra.mxu0 %v3082
    %3123 = vmatpush.msra.mxu0 %v3081
    %3124 = vmatpush.msra.mxu0 %v3080
    %3125 = vmatpush.msra.mxu0 %v3079
    %3126 = vmatpush.msra.mxu0 %v3078
    %3127 = vmatpush.msra.mxu0 %v3077
    %3128 = vmatpush.msra.mxu0 %v3076
    %3129 = vmatmul.f32.gmra.mxu0 %v3090
    %v3130 = vpop.f32.mrf.mxu0
    %v3131 = vadd.f32 %v3086, %v3130
    %3132 = vmatmul.f32.gmra.mxu0 %v3093
    %v3133 = vpop.f32.mrf.mxu0
    %v3134 = vadd.f32 %v3086, %v3133
    %3135 = vmatmul.f32.gmra.mxu0 %v3096
    %v3136 = vpop.f32.mrf.mxu0
    %v3137 = vadd.f32 %v3086, %v3136
    %3138 = vmatmul.f32.gmra.mxu0 %v3099
    %v3139 = vpop.f32.mrf.mxu0
    %v3140 = vadd.f32 %v3086, %v3139
    %3141 = vmatmul.f32.gmra.mxu0 %v3102
    %v3142 = vpop.f32.mrf.mxu0
    %v3143 = vadd.f32 %v3086, %v3142
    %3144 = vmatmul.f32.gmra.mxu0 %v3105
    %v3145 = vpop.f32.mrf.mxu0
    %v3146 = vadd.f32 %v3086, %v3145
    %3147 = vmatmul.f32.gmra.mxu0 %v3108
    %v3148 = vpop.f32.mrf.mxu0
    %v3149 = vadd.f32 %v3086, %v3148
    %3150 = vmatmul.f32.gmra.mxu0 %v3111
    %v3151 = vpop.f32.mrf.mxu0
    %v3152 = vadd.f32 %v3086, %v3151
    %3153 = vdwg.mxu0
    %v3154 = vadd.f32 %v2643, %v3131
    %v3155 = vadd.f32 %v2644, %v3134
    %v3156 = vadd.f32 %v2645, %v3137
    %v3157 = vadd.f32 %v2646, %v3140
    %v3158 = vadd.f32 %v2647, %v3143
    %v3159 = vadd.f32 %v2648, %v3146
    %v3160 = vadd.f32 %v2649, %v3149
    %v3161 = vadd.f32 %v2650, %v3152
    %v3162 = vld [vmem:[#allocation2] sm:$0x1]
    %v3163 = vld [vmem:[%s12] sm:$0x1]
    %v3164 = vsel %vm75, %v3154, 0.0
    %v3165 = vsel %vm75, %v3155, 0.0
    %v3166 = vadd.f32 %v3164, %v3165
    %v3167 = vsel %vm75, %v3156, 0.0
    %v3168 = vadd.f32 %v3166, %v3167
    %v3169 = vsel %vm75, %v3157, 0.0
    %v3170 = vadd.f32 %v3168, %v3169
    %v3171 = vsel %vm75, %v3158, 0.0
    %v3172 = vadd.f32 %v3170, %v3171
    %v3173 = vsel %vm75, %v3159, 0.0
    %v3174 = vadd.f32 %v3172, %v3173
    %v3175 = vsel %vm75, %v3160, 0.0
    %v3176 = vadd.f32 %v3174, %v3175
    %v3177 = vsel %vm75, %v3161, 0.0
    %v3178 = vadd.f32 %v3176, %v3177
    %v3179 = vrot.slane %v3178, 4
    %v3180 = vadd.f32 %v3178, %v3179
    %v3181 = vrot.slane %v3180, 2
    %v3182 = vadd.f32 %v3180, %v3181
    %v3183 = vrot.slane %v3182, 1
    %v3184 = vadd.f32 %v3182, %v3183
    %v3185 = vmul.f32 %v3154, %v3154
    %v3186 = vmul.f32 %v3155, %v3155
    %v3187 = vmul.f32 %v3156, %v3156
    %v3188 = vmul.f32 %v3157, %v3157
    %v3189 = vmul.f32 %v3158, %v3158
    %v3190 = vmul.f32 %v3159, %v3159
    %v3191 = vmul.f32 %v3160, %v3160
    %v3192 = vmul.f32 %v3161, %v3161
    %v3193 = vsel %vm75, %v3185, 0.0
    %v3194 = vsel %vm75, %v3186, 0.0
    %v3195 = vadd.f32 %v3193, %v3194
    %v3196 = vsel %vm75, %v3187, 0.0
    %v3197 = vadd.f32 %v3195, %v3196
    %v3198 = vsel %vm75, %v3188, 0.0
    %v3199 = vadd.f32 %v3197, %v3198
    %v3200 = vsel %vm75, %v3189, 0.0
    %v3201 = vadd.f32 %v3199, %v3200
    %v3202 = vsel %vm75, %v3190, 0.0
    %v3203 = vadd.f32 %v3201, %v3202
    %v3204 = vsel %vm75, %v3191, 0.0
    %v3205 = vadd.f32 %v3203, %v3204
    %v3206 = vsel %vm75, %v3192, 0.0
    %v3207 = vadd.f32 %v3205, %v3206
    %v3208 = vrot.slane %v3207, 4
    %v3209 = vadd.f32 %v3207, %v3208
    %v3210 = vrot.slane %v3209, 2
    %v3211 = vadd.f32 %v3209, %v3210
    %v3212 = vrot.slane %v3211, 1
    %v3213 = vadd.f32 %v3211, %v3212
    %v3214 = vmul.f32 %v3184, 0.015625
    %v3215 = vmul.f32 %v3213, 0.015625
    %v3216 = vmul.f32 %v3214, %v3214
    %v3217 = vsub.f32 %v3215, %v3216
    %v3218 = vsub.f32 %v3154, %v3214
    %v3219 = vsub.f32 %v3155, %v3214
    %v3220 = vsub.f32 %v3156, %v3214
    %v3221 = vsub.f32 %v3157, %v3214
    %v3222 = vsub.f32 %v3158, %v3214
    %v3223 = vsub.f32 %v3159, %v3214
    %v3224 = vsub.f32 %v3160, %v3214
    %v3225 = vsub.f32 %v3161, %v3214
    %v3226 = vadd.f32 %v3217, 1e-05
    %v3227 = vrsqrt.pop %v3226
    %v3228 = vmul.f32 %v3227, %v3226
    %v3229 = vmul.f32 %v3228, %v3227
    %v3230 = vmul.f32 0.5, %v3229
    %v3231 = vsub.f32 1.5, %v3230
    %v3232 = vmul.f32 %v3227, %v3231
    %vm3233 = vweird.f32 %v3226
    %vm3234 = vweird.f32 %v3227
    %vm3235 = vmor %vm3233, %vm3234
    %v3236 = vsel %vm3235, %v3227, %v3232
    %v3237 = vmul.f32 %v3218, %v3236
    %v3238 = vmul.f32 %v3219, %v3236
    %v3239 = vmul.f32 %v3220, %v3236
    %v3240 = vmul.f32 %v3221, %v3236
    %v3241 = vmul.f32 %v3222, %v3236
    %v3242 = vmul.f32 %v3223, %v3236
    %v3243 = vmul.f32 %v3224, %v3236
    %v3244 = vmul.f32 %v3225, %v3236
    %v3246 = vperm.slane %v3162, 0
    %v3248 = vmul.f32 %v3237, %v3246
    %v3249 = vmul.f32 %v3238, %v3246
    %v3250 = vmul.f32 %v3239, %v3246
    %v3251 = vmul.f32 %v3240, %v3246
    %v3252 = vmul.f32 %v3241, %v3246
    %v3253 = vmul.f32 %v3242, %v3246
    %v3254 = vmul.f32 %v3243, %v3246
    %v3255 = vmul.f32 %v3244, %v3246
    %v3257 = vperm.slane %v3163, 0
    %v3259 = vadd.f32 %v3248, %v3257
    %v3260 = vadd.f32 %v3249, %v3257
    %v3261 = vadd.f32 %v3250, %v3257
    %v3262 = vadd.f32 %v3251, %v3257
    %v3263 = vadd.f32 %v3252, %v3257
    %v3264 = vadd.f32 %v3253, %v3257
    %v3265 = vadd.f32 %v3254, %v3257
    %v3266 = vadd.f32 %v3255, %v3257
    %3267 = vst.msk [vmem:[#allocation5] sm:$0xff] %vm75, %v3259
    %3268 = vst.msk [vmem:[#allocation5 + $0x8] sm:$0xff] %vm75, %v3260
    %3269 = vst.msk [vmem:[#allocation5 + $0x10] sm:$0xff] %vm75, %v3261
    %3270 = vst.msk [vmem:[#allocation5 + $0x18] sm:$0xff] %vm75, %v3262
    %3271 = vst.msk [vmem:[#allocation5 + $0x20] sm:$0xff] %vm75, %v3263
    %3272 = vst.msk [vmem:[#allocation5 + $0x28] sm:$0xff] %vm75, %v3264
    %3273 = vst.msk [vmem:[#allocation5 + $0x30] sm:$0xff] %vm75, %v3265
    %3274 = vst.msk [vmem:[#allocation5 + $0x38] sm:$0xff] %vm75, %v3266
    // Predicated region
    $region58: #{time_var_attention_layer.1} parent=1 // pred_check
      _
    $region59: #{time_var_attention_layer.1} parent=1 // pred_check_branch
      %3276 = sbr.rel (0) target = $region61
    $region60: #{time_var_attention_layer.1} parent=1 // pred_region
      %3278 = vsyncadd [#allocation4], 0
      %s3279 = sshll.u32 [#allocation5], 4
      %s3280 = int_to_ptr.vmem [resolvable:$true] %s3279
      %s3281 = sshll.u32 %s13, 4
      %s3282 = int_to_ptr.hbm [resolvable:$true] %s3281
      %3287 = dma.vmem_to_hbm [thread:$0]  %s3280, 1024, %s3282, [#allocation4], 128, 128, 8
    $region61: #{time_var_attention_layer.1} parent=1 // pred_fallthru
      _
    // Predicated region
    $region62: #{time_var_attention_layer.1} parent=1 // pred_check
      _
    $region63: #{time_var_attention_layer.1} parent=1 // pred_check_branch
      %3289 = sbr.rel (0) target = $region65
    $region64: #{time_var_attention_layer.1} parent=1 // pred_region
      %3291 = dma.done [#allocation4], 1024
    $region65: #{time_var_attention_layer.1} parent=1 // pred_fallthru
      _
    %3292 = vsyncpa [#allocation3], 1
    %3293 = vsyncpa [#allocation4], 1

</llo_original>
